<compile_context>
chip_gen: v7x
topology: tpu7x:2x2x1
jax: 0.10.0
libtpu: 0.0.40
codegen_flags: <defaults>
</compile_context>

<pallas_src>
import math

import jax
import jax.numpy as jnp
from jax.experimental import pallas as pl
from jax.experimental.pallas import tpu as pltpu


_VMEM_LIMIT = 48 * 1024 * 1024   # headroom under v7x's 64 MiB physical VMEM


# ----------------------------- Pallas kernels ------------------------------

def _make_input_proj_kernel(n_src):
    """gi = sum_s x_s @ W[s] + b  — one large GEMM for all T and both dirs.

    x_s : (T*B, Din)          n_src inputs (1 for layer 0, 2 for deeper layers)
    W   : (n_src, Din, 6H)    columns = [fwd (r,z,n) | bwd (r,z,n)]
    b   : (1, 6H)
    gi  : (T*B, 6H)
    """
    def kernel(*refs):
        x_refs = refs[:n_src]
        w_ref, b_ref, gi_ref = refs[n_src], refs[n_src + 1], refs[n_src + 2]
        acc = jnp.dot(x_refs[0][...], w_ref[0],
                      preferred_element_type=jnp.float32)
        for s in range(1, n_src):
            acc = acc + jnp.dot(x_refs[s][...], w_ref[s],
                                preferred_element_type=jnp.float32)
        gi_ref[...] = acc + b_ref[...]

    return kernel


def input_projection(xs, w_cat, b_cat):
    """One big (T*B, Din) x (Din, 6H) GEMM covering all timesteps & both dirs."""
    rows = xs[0].shape[0]
    g2 = w_cat.shape[-1]
    return pl.pallas_call(
        _make_input_proj_kernel(len(xs)),
        out_shape=jax.ShapeDtypeStruct((rows, g2), jnp.float32),
        compiler_params=pltpu.CompilerParams(vmem_limit_bytes=_VMEM_LIMIT),
    )(*xs, w_cat, b_cat)


def _gru_gates(gi, gh, h, H):
    r = jax.nn.sigmoid(gi[:, :H] + gh[:, :H])
    z = jax.nn.sigmoid(gi[:, H:2 * H] + gh[:, H:2 * H])
    n = jnp.tanh(gi[:, 2 * H:] + r * gh[:, 2 * H:])
    return (1.0 - z) * n + z * h


def _bigru_recurrence_kernel(gi_ref, whh_ref, bhh_ref,
                             outf_ref, outb_ref, hf_ref, hb_ref):
    """Fused bidirectional GRU recurrence for one layer (time loop in-kernel).

    gi_ref  : (T, B, 6H)  precomputed input gates [fwd r,z,n | bwd r,z,n]
    whh_ref : (2, H, 3H)  recurrent weights (fwd, bwd)
    bhh_ref : (2, 1, 3H)  recurrent biases  (fwd, bwd)
    outf_ref, outb_ref : (T, B, H)  per-direction outputs
    hf_ref,  hb_ref    : (B, H)     final hidden states (written once)
    """
    T, B, _ = gi_ref.shape
    H = whh_ref.shape[1]
    G = 3 * H

    # Loop-invariant operands: load once, stay resident across the time loop.
    w_f = whh_ref[0]
    w_b = whh_ref[1]
    b_f = bhh_ref[0]
    b_b = bhh_ref[1]

    def step(t, carry):
        h_f, h_b = carry
        rt = T - 1 - t
        gi_f = gi_ref[t][:, :G]      # fwd gates at source time t
        gi_b = gi_ref[rt][:, G:]     # bwd gates at source time T-1-t
        gh_f = jnp.dot(h_f, w_f, preferred_element_type=jnp.float32) + b_f
        gh_b = jnp.dot(h_b, w_b, preferred_element_type=jnp.float32) + b_b
        h_f = _gru_gates(gi_f, gh_f, h_f, H)
        h_b = _gru_gates(gi_b, gh_b, h_b, H)
        outf_ref[t] = h_f
        outb_ref[rt] = h_b
        return h_f, h_b

    h0 = jnp.zeros((B, H), jnp.float32)
    h_f, h_b = jax.lax.fori_loop(0, T, step, (h0, h0), unroll=True)
    hf_ref[...] = h_f        # written once, after the loop
    hb_ref[...] = h_b


def bigru_layer(gi, w_hh, b_hh):
    T, B, _ = gi.shape
    H = w_hh.shape[1]
    return pl.pallas_call(
        _bigru_recurrence_kernel,
        out_shape=(jax.ShapeDtypeStruct((T, B, H), jnp.float32),
                   jax.ShapeDtypeStruct((T, B, H), jnp.float32),
                   jax.ShapeDtypeStruct((B, H), jnp.float32),
                   jax.ShapeDtypeStruct((B, H), jnp.float32)),
        compiler_params=pltpu.CompilerParams(vmem_limit_bytes=_VMEM_LIMIT),
    )(gi, w_hh, b_hh)


# ----------------------------- Encoder forward -----------------------------

def encoder_forward(params, source):
    """
    source: (T, B) int32 token ids.
    Returns:
      encoder_final:  (T, B, H)      forward + backward outputs of last layer
      encoder_hidden: (2 * L, B, H)  final hidden states, PyTorch ordering
                                     [l0_fwd, l0_bwd, l1_fwd, l1_bwd, ...]
    """
    # Embedding lookup is a gather -> plain JAX glue (padding_idx row is zero).
    x = jnp.take(params["embedding"], source, axis=0)      # (T, B, E)
    T, B, E = x.shape
    H = params["layers"][0]["fwd"]["w_hh"].shape[0]

    # Per-layer input sources as flat (T*B, Din) slabs — no (T,B,2H) concat.
    xs = [x.reshape(T * B, E)]
    hiddens = []
    out_f = out_b = None
    for layer in params["layers"]:
        fwd, bwd = layer["fwd"], layer["bwd"]
        n_src = len(xs)
        din = xs[0].shape[-1]
        # Concatenate the two directions' input weights along the output axis
        # (-> one (Din, 6H) GEMM); for layers > 0 split W_ih by input source
        # so the previous layer's fwd/bwd slabs are consumed separately.
        w_cat = jnp.stack(
            [jnp.concatenate([fwd["w_ih"][s * din:(s + 1) * din],
                              bwd["w_ih"][s * din:(s + 1) * din]], axis=1)
             for s in range(n_src)], axis=0)                        # (n_src, Din, 6H)
        b_cat = jnp.concatenate([fwd["b_ih"], bwd["b_ih"]], axis=1)  # (1, 6H)
        w_hh = jnp.stack([fwd["w_hh"], bwd["w_hh"]], axis=0)         # (2, H, 3H)
        b_hh = jnp.stack([fwd["b_hh"], bwd["b_hh"]], axis=0)         # (2, 1, 3H)

        gi = input_projection(xs, w_cat, b_cat)                      # (T*B, 6H)
        out_f, out_b, hf, hb = bigru_layer(gi.reshape(T, B, 6 * H), w_hh, b_hh)
        hiddens += [hf, hb]
        # nn.GRU inter-layer dropout is a no-op in eval mode (inference).
        xs = [out_f.reshape(T * B, H), out_b.reshape(T * B, H)]

    encoder_final = out_f + out_b            # trivial add -> leave to XLA fusion
    encoder_hidden = jnp.stack(hiddens, axis=0)                      # (2*L, B, H)
    return encoder_final, encoder_hidden


# ------------------------- deterministic parameters ------------------------

def init_params(key, vocab, E, H, L):
    keys = jax.random.split(key, 1 + 8 * L)
    k_iter = iter(keys)
    emb = jax.random.normal(next(k_iter), (vocab, E), jnp.float32) * 0.1
    emb = emb.at[0].set(0.0)            # padding_idx = 0 row is zeros
    bound = 1.0 / math.sqrt(H)

    def u(k, shape):
        return jax.random.uniform(k, shape, jnp.float32, -bound, bound)

    layers = []
    for l in range(L):
        din = E if l == 0 else 2 * H
        layer = {}
        for d in ("fwd", "bwd"):
            layer[d] = dict(
                w_ih=u(next(k_iter), (din, 3 * H)),
                w_hh=u(next(k_iter), (H, 3 * H)),
                b_ih=u(next(k_iter), (1, 3 * H)),
                b_hh=u(next(k_iter), (1, 3 * H)),
            )
        layers.append(layer)
    return {"embedding": emb, "layers": layers}


# ----------------------------- pure-JAX reference ---------------------------

def _gru_dir_ref(x, w_ih, w_hh, b_ih, b_hh, h0, reverse):
    T = x.shape[0]
    H = h0.shape[-1]
    h = h0
    outs = []
    ts = range(T - 1, -1, -1) if reverse else range(T)
    for t in ts:
        gi = x[t] @ w_ih + b_ih
        gh = h @ w_hh + b_hh
        r = jax.nn.sigmoid(gi[:, :H] + gh[:, :H])
        z = jax.nn.sigmoid(gi[:, H:2 * H] + gh[:, H:2 * H])
        n = jnp.tanh(gi[:, 2 * H:] + r * gh[:, 2 * H:])
        h = (1.0 - z) * n + z * h
        outs.append(h)
    if reverse:
        outs = outs[::-1]
    return jnp.stack(outs, 0), h


def encoder_forward_ref(params, source):
    x = jnp.take(params["embedding"], source, axis=0)
    B = x.shape[1]
    H = params["layers"][0]["fwd"]["w_hh"].shape[0]
    h0 = jnp.zeros((B, H), jnp.float32)
    hiddens = []
    of = ob = None
    for layer in params["layers"]:
        of, hf = _gru_dir_ref(x, layer["fwd"]["w_ih"], layer["fwd"]["w_hh"],
                              layer["fwd"]["b_ih"], layer["fwd"]["b_hh"], h0, False)
        ob, hb = _gru_dir_ref(x, layer["bwd"]["w_ih"], layer["bwd"]["w_hh"],
                              layer["bwd"]["b_ih"], layer["bwd"]["b_hh"], h0, True)
        hiddens += [hf, hb]
        x = jnp.concatenate([of, ob], -1)
    return of + ob, jnp.stack(hiddens, 0)


# ---------------------------------- main ------------------------------------

if __name__ == "__main__":
    VOCAB, E, H, L = 50, 32, 32, 2   # small synthetic sizes (hp uses 256/256/2)
    T, B = 8, 2

    key = jax.random.PRNGKey(0)
    pkey, skey = jax.random.split(key)
    params = init_params(pkey, VOCAB, E, H, L)
    source = jax.random.randint(skey, (T, B), 0, VOCAB, dtype=jnp.int32)

    enc_final, enc_hidden = jax.jit(encoder_forward)(params, source)
    enc_final = jax.block_until_ready(enc_final)
    enc_hidden = jax.block_until_ready(enc_hidden)

    ref_final, ref_hidden = encoder_forward_ref(params, source)

    assert enc_final.shape == (T, B, H)
    assert enc_hidden.shape == (2 * L, B, H)
    assert jnp.allclose(enc_final, ref_final, atol=1e-4, rtol=1e-4)
    assert jnp.allclose(enc_hidden, ref_hidden, atol=1e-4, rtol=1e-4)

    print("KERNEL_OK")
</pallas_src>

<mosaic_0001>
module attributes {stable_mosaic.version = 11 : i64} {
  func.func @kernel(%arg0: memref<16x32xf32, #tpu.memory_space<vmem>>, %arg1: memref<1x32x192xf32, #tpu.memory_space<vmem>>, %arg2: memref<1x192xf32, #tpu.memory_space<vmem>>, %arg3: memref<16x192xf32, #tpu.memory_space<vmem>>) attributes {dimension_semantics = [], scalar_prefetch = 0 : i64, scratch_operands = 0 : i64, tpu.core_type = #tpu.core_type<tc>} {
    %c0 = arith.constant 0 : index
    %c0_0 = arith.constant 0 : index
    %0 = vector.load %arg0[%c0, %c0_0] : memref<16x32xf32, #tpu.memory_space<vmem>>, vector<16x32xf32>
    %c0_1 = arith.constant 0 : index
    %c0_2 = arith.constant 0 : index
    %c0_3 = arith.constant 0 : index
    %1 = vector.load %arg1[%c0_1, %c0_2, %c0_3] : memref<1x32x192xf32, #tpu.memory_space<vmem>>, vector<1x32x192xf32>
    %2 = vector.shape_cast %1 : vector<1x32x192xf32> to vector<32x192xf32>
    %cst = arith.constant dense<0.000000e+00> : vector<16x192xf32>
    %3 = tpu.matmul %0, %2, %cst {dimension_numbers = #tpu.dot_dimension_numbers<[1], [0], [0], [1], [0, 0, 1, 1], [], []>} : vector<16x32xf32>, vector<32x192xf32>, vector<16x192xf32> -> vector<16x192xf32>
    %c0_4 = arith.constant 0 : index
    %c0_5 = arith.constant 0 : index
    %4 = vector.load %arg2[%c0_4, %c0_5] : memref<1x192xf32, #tpu.memory_space<vmem>>, vector<1x192xf32>
    %5 = vector.broadcast %4 : vector<1x192xf32> to vector<16x192xf32>
    %6 = arith.addf %3, %5 : vector<16x192xf32>
    %c0_6 = arith.constant 0 : index
    %c0_7 = arith.constant 0 : index
    %7 = vector.load %arg3[%c0_6, %c0_7] : memref<16x192xf32, #tpu.memory_space<vmem>>, vector<16x192xf32>
    tpu.vector_store %arg3[%c0_6, %c0_7], %6 {strides = array<i32>} : memref<16x192xf32, #tpu.memory_space<vmem>>, vector<16x192xf32>,
    return
  }
}

module attributes {stable_mosaic.version = 11 : i64} {
  func.func @kernel(%arg0: memref<16x32xf32, #tpu.memory_space<vmem>>, %arg1: memref<16x32xf32, #tpu.memory_space<vmem>>, %arg2: memref<2x32x192xf32, #tpu.memory_space<vmem>>, %arg3: memref<1x192xf32, #tpu.memory_space<vmem>>, %arg4: memref<16x192xf32, #tpu.memory_space<vmem>>) attributes {dimension_semantics = [], scalar_prefetch = 0 : i64, scratch_operands = 0 : i64, tpu.core_type = #tpu.core_type<tc>} {
    %c0 = arith.constant 0 : index
    %c0_0 = arith.constant 0 : index
    %0 = vector.load %arg0[%c0, %c0_0] : memref<16x32xf32, #tpu.memory_space<vmem>>, vector<16x32xf32>
    %c0_1 = arith.constant 0 : index
    %c0_2 = arith.constant 0 : index
    %c0_3 = arith.constant 0 : index
    %1 = vector.load %arg2[%c0_1, %c0_2, %c0_3] : memref<2x32x192xf32, #tpu.memory_space<vmem>>, vector<1x32x192xf32>
    %2 = vector.shape_cast %1 : vector<1x32x192xf32> to vector<32x192xf32>
    %cst = arith.constant dense<0.000000e+00> : vector<16x192xf32>
    %3 = tpu.matmul %0, %2, %cst {dimension_numbers = #tpu.dot_dimension_numbers<[1], [0], [0], [1], [0, 0, 1, 1], [], []>} : vector<16x32xf32>, vector<32x192xf32>, vector<16x192xf32> -> vector<16x192xf32>
    %c0_4 = arith.constant 0 : index
    %c0_5 = arith.constant 0 : index
    %4 = vector.load %arg1[%c0_4, %c0_5] : memref<16x32xf32, #tpu.memory_space<vmem>>, vector<16x32xf32>
    %c1 = arith.constant 1 : index
    %c0_6 = arith.constant 0 : index
    %c0_7 = arith.constant 0 : index
    %5 = vector.load %arg2[%c1, %c0_6, %c0_7] : memref<2x32x192xf32, #tpu.memory_space<vmem>>, vector<1x32x192xf32>
    %6 = vector.shape_cast %5 : vector<1x32x192xf32> to vector<32x192xf32>
    %cst_8 = arith.constant dense<0.000000e+00> : vector<16x192xf32>
    %7 = tpu.matmul %4, %6, %cst_8 {dimension_numbers = #tpu.dot_dimension_numbers<[1], [0], [0], [1], [0, 0, 1, 1], [], []>} : vector<16x32xf32>, vector<32x192xf32>, vector<16x192xf32> -> vector<16x192xf32>
    %8 = arith.addf %3, %7 : vector<16x192xf32>
    %c0_9 = arith.constant 0 : index
    %c0_10 = arith.constant 0 : index
    %9 = vector.load %arg3[%c0_9, %c0_10] : memref<1x192xf32, #tpu.memory_space<vmem>>, vector<1x192xf32>
    %10 = vector.broadcast %9 : vector<1x192xf32> to vector<16x192xf32>
    %11 = arith.addf %8, %10 : vector<16x192xf32>
    %c0_11 = arith.constant 0 : index
    %c0_12 = arith.constant 0 : index
    %12 = vector.load %arg4[%c0_11, %c0_12] : memref<16x192xf32, #tpu.memory_space<vmem>>, vector<16x192xf32>
    tpu.vector_store %arg4[%c0_11, %c0_12], %11 {strides = array<i32>} : memref<16x192xf32, #tpu.memory_space<vmem>>, vector<16x192xf32>,
    return
  }
}

module attributes {stable_mosaic.version = 11 : i64} {
  func.func @_bigru_recurrence_kernel(%arg0: memref<8x2x192xf32, #tpu.memory_space<vmem>>, %arg1: memref<2x32x96xf32, #tpu.memory_space<vmem>>, %arg2: memref<2x1x96xf32, #tpu.memory_space<vmem>>, %arg3: memref<8x2x32xf32, #tpu.memory_space<vmem>>, %arg4: memref<8x2x32xf32, #tpu.memory_space<vmem>>, %arg5: memref<2x32xf32, #tpu.memory_space<vmem>>, %arg6: memref<2x32xf32, #tpu.memory_space<vmem>>) attributes {dimension_semantics = [], scalar_prefetch = 0 : i64, scratch_operands = 0 : i64, tpu.core_type = #tpu.core_type<tc>} {
    %c0 = arith.constant 0 : index
    %c0_0 = arith.constant 0 : index
    %c0_1 = arith.constant 0 : index
    %0 = vector.load %arg1[%c0, %c0_0, %c0_1] : memref<2x32x96xf32, #tpu.memory_space<vmem>>, vector<1x32x96xf32>
    %1 = vector.shape_cast %0 : vector<1x32x96xf32> to vector<32x96xf32>
    %c1 = arith.constant 1 : index
    %c0_2 = arith.constant 0 : index
    %c0_3 = arith.constant 0 : index
    %2 = vector.load %arg1[%c1, %c0_2, %c0_3] : memref<2x32x96xf32, #tpu.memory_space<vmem>>, vector<1x32x96xf32>
    %3 = vector.shape_cast %2 : vector<1x32x96xf32> to vector<32x96xf32>
    %c0_4 = arith.constant 0 : index
    %c0_5 = arith.constant 0 : index
    %c0_6 = arith.constant 0 : index
    %4 = vector.load %arg2[%c0_4, %c0_5, %c0_6] : memref<2x1x96xf32, #tpu.memory_space<vmem>>, vector<1x1x96xf32>
    %5 = vector.shape_cast %4 : vector<1x1x96xf32> to vector<1x96xf32>
    %c1_7 = arith.constant 1 : index
    %c0_8 = arith.constant 0 : index
    %c0_9 = arith.constant 0 : index
    %6 = vector.load %arg2[%c1_7, %c0_8, %c0_9] : memref<2x1x96xf32, #tpu.memory_space<vmem>>, vector<1x1x96xf32>
    %7 = vector.shape_cast %6 : vector<1x1x96xf32> to vector<1x96xf32>
    %cst = arith.constant 0.000000e+00 : f32
    %8 = vector.broadcast %cst : f32 to vector<2x32xf32>
    %c0_i32 = arith.constant 0 : i32
    %c7_i32 = arith.constant 7 : i32
    %9 = arith.subi %c7_i32, %c0_i32 : i32
    %10 = arith.index_cast %c0_i32 : i32 to index
    %c0_10 = arith.constant 0 : index
    %c0_11 = arith.constant 0 : index
    %11 = vector.load %arg0[%10, %c0_10, %c0_11] : memref<8x2x192xf32, #tpu.memory_space<vmem>>, vector<1x2x192xf32>
    %12 = vector.shape_cast %11 : vector<1x2x192xf32> to vector<2x192xf32>
    %13 = vector.extract_strided_slice %12 {offsets = [0, 0], sizes = [2, 96], strides = [1, 1]} : vector<2x192xf32> to vector<2x96xf32>
    %14 = arith.index_cast %9 : i32 to index
    %c0_12 = arith.constant 0 : index
    %c0_13 = arith.constant 0 : index
    %15 = vector.load %arg0[%14, %c0_12, %c0_13] : memref<8x2x192xf32, #tpu.memory_space<vmem>>, vector<1x2x192xf32>
    %16 = vector.shape_cast %15 : vector<1x2x192xf32> to vector<2x192xf32>
    %17 = vector.extract_strided_slice %16 {offsets = [0, 96], sizes = [2, 96], strides = [1, 1]} : vector<2x192xf32> to vector<2x96xf32>
    %cst_14 = arith.constant dense<0.000000e+00> : vector<2x96xf32>
    %18 = tpu.matmul %8, %1, %cst_14 {dimension_numbers = #tpu.dot_dimension_numbers<[1], [0], [0], [1], [0, 0, 1, 1], [], []>} : vector<2x32xf32>, vector<32x96xf32>, vector<2x96xf32> -> vector<2x96xf32>
    %19 = vector.broadcast %5 : vector<1x96xf32> to vector<2x96xf32>
    %20 = arith.addf %18, %19 : vector<2x96xf32>
    %cst_15 = arith.constant dense<0.000000e+00> : vector<2x96xf32>
    %21 = tpu.matmul %8, %3, %cst_15 {dimension_numbers = #tpu.dot_dimension_numbers<[1], [0], [0], [1], [0, 0, 1, 1], [], []>} : vector<2x32xf32>, vector<32x96xf32>, vector<2x96xf32> -> vector<2x96xf32>
    %22 = vector.broadcast %7 : vector<1x96xf32> to vector<2x96xf32>
    %23 = arith.addf %21, %22 : vector<2x96xf32>
    %24 = vector.extract_strided_slice %13 {offsets = [0, 0], sizes = [2, 32], strides = [1, 1]} : vector<2x96xf32> to vector<2x32xf32>
    %25 = vector.extract_strided_slice %20 {offsets = [0, 0], sizes = [2, 32], strides = [1, 1]} : vector<2x96xf32> to vector<2x32xf32>
    %26 = arith.addf %24, %25 : vector<2x32xf32>
    %27 = arith.negf %26 : vector<2x32xf32>
    %28 = math.exp %27 : vector<2x32xf32>
    %cst_16 = arith.constant 1.000000e+00 : f32
    %29 = vector.broadcast %cst_16 : f32 to vector<2x32xf32>
    %30 = arith.addf %29, %28 : vector<2x32xf32>
    %31 = arith.divf %29, %30 : vector<2x32xf32>
    %32 = vector.extract_strided_slice %13 {offsets = [0, 32], sizes = [2, 32], strides = [1, 1]} : vector<2x96xf32> to vector<2x32xf32>
    %33 = vector.extract_strided_slice %20 {offsets = [0, 32], sizes = [2, 32], strides = [1, 1]} : vector<2x96xf32> to vector<2x32xf32>
    %34 = arith.addf %32, %33 : vector<2x32xf32>
    %35 = arith.negf %34 : vector<2x32xf32>
    %36 = math.exp %35 : vector<2x32xf32>
    %cst_17 = arith.constant 1.000000e+00 : f32
    %37 = vector.broadcast %cst_17 : f32 to vector<2x32xf32>
    %38 = arith.addf %37, %36 : vector<2x32xf32>
    %39 = arith.divf %37, %38 : vector<2x32xf32>
    %40 = vector.extract_strided_slice %13 {offsets = [0, 64], sizes = [2, 32], strides = [1, 1]} : vector<2x96xf32> to vector<2x32xf32>
    %41 = vector.extract_strided_slice %20 {offsets = [0, 64], sizes = [2, 32], strides = [1, 1]} : vector<2x96xf32> to vector<2x32xf32>
    %42 = arith.mulf %31, %41 : vector<2x32xf32>
    %43 = arith.addf %40, %42 : vector<2x32xf32>
    %44 = math.tanh %43 : vector<2x32xf32>
    %cst_18 = arith.constant 1.000000e+00 : f32
    %45 = vector.broadcast %cst_18 : f32 to vector<2x32xf32>
    %46 = arith.subf %45, %39 : vector<2x32xf32>
    %47 = arith.mulf %46, %44 : vector<2x32xf32>
    %48 = arith.mulf %39, %8 : vector<2x32xf32>
    %49 = arith.addf %47, %48 : vector<2x32xf32>
    %50 = vector.extract_strided_slice %17 {offsets = [0, 0], sizes = [2, 32], strides = [1, 1]} : vector<2x96xf32> to vector<2x32xf32>
    %51 = vector.extract_strided_slice %23 {offsets = [0, 0], sizes = [2, 32], strides = [1, 1]} : vector<2x96xf32> to vector<2x32xf32>
    %52 = arith.addf %50, %51 : vector<2x32xf32>
    %53 = arith.negf %52 : vector<2x32xf32>
    %54 = math.exp %53 : vector<2x32xf32>
    %cst_19 = arith.constant 1.000000e+00 : f32
    %55 = vector.broadcast %cst_19 : f32 to vector<2x32xf32>
    %56 = arith.addf %55, %54 : vector<2x32xf32>
    %57 = arith.divf %55, %56 : vector<2x32xf32>
    %58 = vector.extract_strided_slice %17 {offsets = [0, 32], sizes = [2, 32], strides = [1, 1]} : vector<2x96xf32> to vector<2x32xf32>
    %59 = vector.extract_strided_slice %23 {offsets = [0, 32], sizes = [2, 32], strides = [1, 1]} : vector<2x96xf32> to vector<2x32xf32>
    %60 = arith.addf %58, %59 : vector<2x32xf32>
    %61 = arith.negf %60 : vector<2x32xf32>
    %62 = math.exp %61 : vector<2x32xf32>
    %cst_20 = arith.constant 1.000000e+00 : f32
    %63 = vector.broadcast %cst_20 : f32 to vector<2x32xf32>
    %64 = arith.addf %63, %62 : vector<2x32xf32>
    %65 = arith.divf %63, %64 : vector<2x32xf32>
    %66 = vector.extract_strided_slice %17 {offsets = [0, 64], sizes = [2, 32], strides = [1, 1]} : vector<2x96xf32> to vector<2x32xf32>
    %67 = vector.extract_strided_slice %23 {offsets = [0, 64], sizes = [2, 32], strides = [1, 1]} : vector<2x96xf32> to vector<2x32xf32>
    %68 = arith.mulf %57, %67 : vector<2x32xf32>
    %69 = arith.addf %66, %68 : vector<2x32xf32>
    %70 = math.tanh %69 : vector<2x32xf32>
    %cst_21 = arith.constant 1.000000e+00 : f32
    %71 = vector.broadcast %cst_21 : f32 to vector<2x32xf32>
    %72 = arith.subf %71, %65 : vector<2x32xf32>
    %73 = arith.mulf %72, %70 : vector<2x32xf32>
    %74 = arith.mulf %65, %8 : vector<2x32xf32>
    %75 = arith.addf %73, %74 : vector<2x32xf32>
    %76 = arith.index_cast %c0_i32 : i32 to index
    %c0_22 = arith.constant 0 : index
    %c0_23 = arith.constant 0 : index
    %77 = vector.load %arg3[%76, %c0_22, %c0_23] : memref<8x2x32xf32, #tpu.memory_space<vmem>>, vector<1x2x32xf32>
    %78 = vector.shape_cast %77 : vector<1x2x32xf32> to vector<2x32xf32>
    %79 = vector.shape_cast %49 : vector<2x32xf32> to vector<1x2x32xf32>
    tpu.vector_store %arg3[%76, %c0_22, %c0_23], %79 {strides = array<i32>} : memref<8x2x32xf32, #tpu.memory_space<vmem>>, vector<1x2x32xf32>,
    %80 = arith.index_cast %9 : i32 to index
    %c0_24 = arith.constant 0 : index
    %c0_25 = arith.constant 0 : index
    %81 = vector.load %arg4[%80, %c0_24, %c0_25] : memref<8x2x32xf32, #tpu.memory_space<vmem>>, vector<1x2x32xf32>
    %82 = vector.shape_cast %81 : vector<1x2x32xf32> to vector<2x32xf32>
    %83 = vector.shape_cast %75 : vector<2x32xf32> to vector<1x2x32xf32>
    tpu.vector_store %arg4[%80, %c0_24, %c0_25], %83 {strides = array<i32>} : memref<8x2x32xf32, #tpu.memory_space<vmem>>, vector<1x2x32xf32>,
    %c1_i32 = arith.constant 1 : i32
    %c7_i32_26 = arith.constant 7 : i32
    %84 = arith.subi %c7_i32_26, %c1_i32 : i32
    %85 = arith.index_cast %c1_i32 : i32 to index
    %c0_27 = arith.constant 0 : index
    %c0_28 = arith.constant 0 : index
    %86 = vector.load %arg0[%85, %c0_27, %c0_28] : memref<8x2x192xf32, #tpu.memory_space<vmem>>, vector<1x2x192xf32>
    %87 = vector.shape_cast %86 : vector<1x2x192xf32> to vector<2x192xf32>
    %88 = vector.extract_strided_slice %87 {offsets = [0, 0], sizes = [2, 96], strides = [1, 1]} : vector<2x192xf32> to vector<2x96xf32>
    %89 = arith.index_cast %84 : i32 to index
    %c0_29 = arith.constant 0 : index
    %c0_30 = arith.constant 0 : index
    %90 = vector.load %arg0[%89, %c0_29, %c0_30] : memref<8x2x192xf32, #tpu.memory_space<vmem>>, vector<1x2x192xf32>
    %91 = vector.shape_cast %90 : vector<1x2x192xf32> to vector<2x192xf32>
    %92 = vector.extract_strided_slice %91 {offsets = [0, 96], sizes = [2, 96], strides = [1, 1]} : vector<2x192xf32> to vector<2x96xf32>
    %cst_31 = arith.constant dense<0.000000e+00> : vector<2x96xf32>
    %93 = tpu.matmul %49, %1, %cst_31 {dimension_numbers = #tpu.dot_dimension_numbers<[1], [0], [0], [1], [0, 0, 1, 1], [], []>} : vector<2x32xf32>, vector<32x96xf32>, vector<2x96xf32> -> vector<2x96xf32>
    %94 = vector.broadcast %5 : vector<1x96xf32> to vector<2x96xf32>
    %95 = arith.addf %93, %94 : vector<2x96xf32>
    %cst_32 = arith.constant dense<0.000000e+00> : vector<2x96xf32>
    %96 = tpu.matmul %75, %3, %cst_32 {dimension_numbers = #tpu.dot_dimension_numbers<[1], [0], [0], [1], [0, 0, 1, 1], [], []>} : vector<2x32xf32>, vector<32x96xf32>, vector<2x96xf32> -> vector<2x96xf32>
    %97 = vector.broadcast %7 : vector<1x96xf32> to vector<2x96xf32>
    %98 = arith.addf %96, %97 : vector<2x96xf32>
    %99 = vector.extract_strided_slice %88 {offsets = [0, 0], sizes = [2, 32], strides = [1, 1]} : vector<2x96xf32> to vector<2x32xf32>
    %100 = vector.extract_strided_slice %95 {offsets = [0, 0], sizes = [2, 32], strides = [1, 1]} : vector<2x96xf32> to vector<2x32xf32>
    %101 = arith.addf %99, %100 : vector<2x32xf32>
    %102 = arith.negf %101 : vector<2x32xf32>
    %103 = math.exp %102 : vector<2x32xf32>
    %cst_33 = arith.constant 1.000000e+00 : f32
    %104 = vector.broadcast %cst_33 : f32 to vector<2x32xf32>
    %105 = arith.addf %104, %103 : vector<2x32xf32>
    %106 = arith.divf %104, %105 : vector<2x32xf32>
    %107 = vector.extract_strided_slice %88 {offsets = [0, 32], sizes = [2, 32], strides = [1, 1]} : vector<2x96xf32> to vector<2x32xf32>
    %108 = vector.extract_strided_slice %95 {offsets = [0, 32], sizes = [2, 32], strides = [1, 1]} : vector<2x96xf32> to vector<2x32xf32>
    %109 = arith.addf %107, %108 : vector<2x32xf32>
    %110 = arith.negf %109 : vector<2x32xf32>
    %111 = math.exp %110 : vector<2x32xf32>
    %cst_34 = arith.constant 1.000000e+00 : f32
    %112 = vector.broadcast %cst_34 : f32 to vector<2x32xf32>
    %113 = arith.addf %112, %111 : vector<2x32xf32>
    %114 = arith.divf %112, %113 : vector<2x32xf32>
    %115 = vector.extract_strided_slice %88 {offsets = [0, 64], sizes = [2, 32], strides = [1, 1]} : vector<2x96xf32> to vector<2x32xf32>
    %116 = vector.extract_strided_slice %95 {offsets = [0, 64], sizes = [2, 32], strides = [1, 1]} : vector<2x96xf32> to vector<2x32xf32>
    %117 = arith.mulf %106, %116 : vector<2x32xf32>
    %118 = arith.addf %115, %117 : vector<2x32xf32>
    %119 = math.tanh %118 : vector<2x32xf32>
    %cst_35 = arith.constant 1.000000e+00 : f32
    %120 = vector.broadcast %cst_35 : f32 to vector<2x32xf32>
    %121 = arith.subf %120, %114 : vector<2x32xf32>
    %122 = arith.mulf %121, %119 : vector<2x32xf32>
    %123 = arith.mulf %114, %49 : vector<2x32xf32>
    %124 = arith.addf %122, %123 : vector<2x32xf32>
    %125 = vector.extract_strided_slice %92 {offsets = [0, 0], sizes = [2, 32], strides = [1, 1]} : vector<2x96xf32> to vector<2x32xf32>
    %126 = vector.extract_strided_slice %98 {offsets = [0, 0], sizes = [2, 32], strides = [1, 1]} : vector<2x96xf32> to vector<2x32xf32>
    %127 = arith.addf %125, %126 : vector<2x32xf32>
    %128 = arith.negf %127 : vector<2x32xf32>
    %129 = math.exp %128 : vector<2x32xf32>
    %cst_36 = arith.constant 1.000000e+00 : f32
    %130 = vector.broadcast %cst_36 : f32 to vector<2x32xf32>
    %131 = arith.addf %130, %129 : vector<2x32xf32>
    %132 = arith.divf %130, %131 : vector<2x32xf32>
    %133 = vector.extract_strided_slice %92 {offsets = [0, 32], sizes = [2, 32], strides = [1, 1]} : vector<2x96xf32> to vector<2x32xf32>
    %134 = vector.extract_strided_slice %98 {offsets = [0, 32], sizes = [2, 32], strides = [1, 1]} : vector<2x96xf32> to vector<2x32xf32>
    %135 = arith.addf %133, %134 : vector<2x32xf32>
    %136 = arith.negf %135 : vector<2x32xf32>
    %137 = math.exp %136 : vector<2x32xf32>
    %cst_37 = arith.constant 1.000000e+00 : f32
    %138 = vector.broadcast %cst_37 : f32 to vector<2x32xf32>
    %139 = arith.addf %138, %137 : vector<2x32xf32>
    %140 = arith.divf %138, %139 : vector<2x32xf32>
    %141 = vector.extract_strided_slice %92 {offsets = [0, 64], sizes = [2, 32], strides = [1, 1]} : vector<2x96xf32> to vector<2x32xf32>
    %142 = vector.extract_strided_slice %98 {offsets = [0, 64], sizes = [2, 32], strides = [1, 1]} : vector<2x96xf32> to vector<2x32xf32>
    %143 = arith.mulf %132, %142 : vector<2x32xf32>
    %144 = arith.addf %141, %143 : vector<2x32xf32>
    %145 = math.tanh %144 : vector<2x32xf32>
    %cst_38 = arith.constant 1.000000e+00 : f32
    %146 = vector.broadcast %cst_38 : f32 to vector<2x32xf32>
    %147 = arith.subf %146, %140 : vector<2x32xf32>
    %148 = arith.mulf %147, %145 : vector<2x32xf32>
    %149 = arith.mulf %140, %75 : vector<2x32xf32>
    %150 = arith.addf %148, %149 : vector<2x32xf32>
    %151 = arith.index_cast %c1_i32 : i32 to index
    %c0_39 = arith.constant 0 : index
    %c0_40 = arith.constant 0 : index
    %152 = vector.load %arg3[%151, %c0_39, %c0_40] : memref<8x2x32xf32, #tpu.memory_space<vmem>>, vector<1x2x32xf32>
    %153 = vector.shape_cast %152 : vector<1x2x32xf32> to vector<2x32xf32>
    %154 = vector.shape_cast %124 : vector<2x32xf32> to vector<1x2x32xf32>
    tpu.vector_store %arg3[%151, %c0_39, %c0_40], %154 {strides = array<i32>} : memref<8x2x32xf32, #tpu.memory_space<vmem>>, vector<1x2x32xf32>,
    %155 = arith.index_cast %84 : i32 to index
    %c0_41 = arith.constant 0 : index
    %c0_42 = arith.constant 0 : index
    %156 = vector.load %arg4[%155, %c0_41, %c0_42] : memref<8x2x32xf32, #tpu.memory_space<vmem>>, vector<1x2x32xf32>
    %157 = vector.shape_cast %156 : vector<1x2x32xf32> to vector<2x32xf32>
    %158 = vector.shape_cast %150 : vector<2x32xf32> to vector<1x2x32xf32>
    tpu.vector_store %arg4[%155, %c0_41, %c0_42], %158 {strides = array<i32>} : memref<8x2x32xf32, #tpu.memory_space<vmem>>, vector<1x2x32xf32>,
    %c2_i32 = arith.constant 2 : i32
    %c7_i32_43 = arith.constant 7 : i32
    %159 = arith.subi %c7_i32_43, %c2_i32 : i32
    %160 = arith.index_cast %c2_i32 : i32 to index
    %c0_44 = arith.constant 0 : index
    %c0_45 = arith.constant 0 : index
    %161 = vector.load %arg0[%160, %c0_44, %c0_45] : memref<8x2x192xf32, #tpu.memory_space<vmem>>, vector<1x2x192xf32>
    %162 = vector.shape_cast %161 : vector<1x2x192xf32> to vector<2x192xf32>
    %163 = vector.extract_strided_slice %162 {offsets = [0, 0], sizes = [2, 96], strides = [1, 1]} : vector<2x192xf32> to vector<2x96xf32>
    %164 = arith.index_cast %159 : i32 to index
    %c0_46 = arith.constant 0 : index
    %c0_47 = arith.constant 0 : index
    %165 = vector.load %arg0[%164, %c0_46, %c0_47] : memref<8x2x192xf32, #tpu.memory_space<vmem>>, vector<1x2x192xf32>
    %166 = vector.shape_cast %165 : vector<1x2x192xf32> to vector<2x192xf32>
    %167 = vector.extract_strided_slice %166 {offsets = [0, 96], sizes = [2, 96], strides = [1, 1]} : vector<2x192xf32> to vector<2x96xf32>
    %cst_48 = arith.constant dense<0.000000e+00> : vector<2x96xf32>
    %168 = tpu.matmul %124, %1, %cst_48 {dimension_numbers = #tpu.dot_dimension_numbers<[1], [0], [0], [1], [0, 0, 1, 1], [], []>} : vector<2x32xf32>, vector<32x96xf32>, vector<2x96xf32> -> vector<2x96xf32>
    %169 = vector.broadcast %5 : vector<1x96xf32> to vector<2x96xf32>
    %170 = arith.addf %168, %169 : vector<2x96xf32>
    %cst_49 = arith.constant dense<0.000000e+00> : vector<2x96xf32>
    %171 = tpu.matmul %150, %3, %cst_49 {dimension_numbers = #tpu.dot_dimension_numbers<[1], [0], [0], [1], [0, 0, 1, 1], [], []>} : vector<2x32xf32>, vector<32x96xf32>, vector<2x96xf32> -> vector<2x96xf32>
    %172 = vector.broadcast %7 : vector<1x96xf32> to vector<2x96xf32>
    %173 = arith.addf %171, %172 : vector<2x96xf32>
    %174 = vector.extract_strided_slice %163 {offsets = [0, 0], sizes = [2, 32], strides = [1, 1]} : vector<2x96xf32> to vector<2x32xf32>
    %175 = vector.extract_strided_slice %170 {offsets = [0, 0], sizes = [2, 32], strides = [1, 1]} : vector<2x96xf32> to vector<2x32xf32>
    %176 = arith.addf %174, %175 : vector<2x32xf32>
    %177 = arith.negf %176 : vector<2x32xf32>
    %178 = math.exp %177 : vector<2x32xf32>
    %cst_50 = arith.constant 1.000000e+00 : f32
    %179 = vector.broadcast %cst_50 : f32 to vector<2x32xf32>
    %180 = arith.addf %179, %178 : vector<2x32xf32>
    %181 = arith.divf %179, %180 : vector<2x32xf32>
    %182 = vector.extract_strided_slice %163 {offsets = [0, 32], sizes = [2, 32], strides = [1, 1]} : vector<2x96xf32> to vector<2x32xf32>
    %183 = vector.extract_strided_slice %170 {offsets = [0, 32], sizes = [2, 32], strides = [1, 1]} : vector<2x96xf32> to vector<2x32xf32>
    %184 = arith.addf %182, %183 : vector<2x32xf32>
    %185 = arith.negf %184 : vector<2x32xf32>
    %186 = math.exp %185 : vector<2x32xf32>
    %cst_51 = arith.constant 1.000000e+00 : f32
    %187 = vector.broadcast %cst_51 : f32 to vector<2x32xf32>
    %188 = arith.addf %187, %186 : vector<2x32xf32>
    %189 = arith.divf %187, %188 : vector<2x32xf32>
    %190 = vector.extract_strided_slice %163 {offsets = [0, 64], sizes = [2, 32], strides = [1, 1]} : vector<2x96xf32> to vector<2x32xf32>
    %191 = vector.extract_strided_slice %170 {offsets = [0, 64], sizes = [2, 32], strides = [1, 1]} : vector<2x96xf32> to vector<2x32xf32>
    %192 = arith.mulf %181, %191 : vector<2x32xf32>
    %193 = arith.addf %190, %192 : vector<2x32xf32>
    %194 = math.tanh %193 : vector<2x32xf32>
    %cst_52 = arith.constant 1.000000e+00 : f32
    %195 = vector.broadcast %cst_52 : f32 to vector<2x32xf32>
    %196 = arith.subf %195, %189 : vector<2x32xf32>
    %197 = arith.mulf %196, %194 : vector<2x32xf32>
    %198 = arith.mulf %189, %124 : vector<2x32xf32>
    %199 = arith.addf %197, %198 : vector<2x32xf32>
    %200 = vector.extract_strided_slice %167 {offsets = [0, 0], sizes = [2, 32], strides = [1, 1]} : vector<2x96xf32> to vector<2x32xf32>
    %201 = vector.extract_strided_slice %173 {offsets = [0, 0], sizes = [2, 32], strides = [1, 1]} : vector<2x96xf32> to vector<2x32xf32>
    %202 = arith.addf %200, %201 : vector<2x32xf32>
    %203 = arith.negf %202 : vector<2x32xf32>
    %204 = math.exp %203 : vector<2x32xf32>
    %cst_53 = arith.constant 1.000000e+00 : f32
    %205 = vector.broadcast %cst_53 : f32 to vector<2x32xf32>
    %206 = arith.addf %205, %204 : vector<2x32xf32>
    %207 = arith.divf %205, %206 : vector<2x32xf32>
    %208 = vector.extract_strided_slice %167 {offsets = [0, 32], sizes = [2, 32], strides = [1, 1]} : vector<2x96xf32> to vector<2x32xf32>
    %209 = vector.extract_strided_slice %173 {offsets = [0, 32], sizes = [2, 32], strides = [1, 1]} : vector<2x96xf32> to vector<2x32xf32>
    %210 = arith.addf %208, %209 : vector<2x32xf32>
    %211 = arith.negf %210 : vector<2x32xf32>
    %212 = math.exp %211 : vector<2x32xf32>
    %cst_54 = arith.constant 1.000000e+00 : f32
    %213 = vector.broadcast %cst_54 : f32 to vector<2x32xf32>
    %214 = arith.addf %213, %212 : vector<2x32xf32>
    %215 = arith.divf %213, %214 : vector<2x32xf32>
    %216 = vector.extract_strided_slice %167 {offsets = [0, 64], sizes = [2, 32], strides = [1, 1]} : vector<2x96xf32> to vector<2x32xf32>
    %217 = vector.extract_strided_slice %173 {offsets = [0, 64], sizes = [2, 32], strides = [1, 1]} : vector<2x96xf32> to vector<2x32xf32>
    %218 = arith.mulf %207, %217 : vector<2x32xf32>
    %219 = arith.addf %216, %218 : vector<2x32xf32>
    %220 = math.tanh %219 : vector<2x32xf32>
    %cst_55 = arith.constant 1.000000e+00 : f32
    %221 = vector.broadcast %cst_55 : f32 to vector<2x32xf32>
    %222 = arith.subf %221, %215 : vector<2x32xf32>
    %223 = arith.mulf %222, %220 : vector<2x32xf32>
    %224 = arith.mulf %215, %150 : vector<2x32xf32>
    %225 = arith.addf %223, %224 : vector<2x32xf32>
    %226 = arith.index_cast %c2_i32 : i32 to index
    %c0_56 = arith.constant 0 : index
    %c0_57 = arith.constant 0 : index
    %227 = vector.load %arg3[%226, %c0_56, %c0_57] : memref<8x2x32xf32, #tpu.memory_space<vmem>>, vector<1x2x32xf32>
    %228 = vector.shape_cast %227 : vector<1x2x32xf32> to vector<2x32xf32>
    %229 = vector.shape_cast %199 : vector<2x32xf32> to vector<1x2x32xf32>
    tpu.vector_store %arg3[%226, %c0_56, %c0_57], %229 {strides = array<i32>} : memref<8x2x32xf32, #tpu.memory_space<vmem>>, vector<1x2x32xf32>,
    %230 = arith.index_cast %159 : i32 to index
    %c0_58 = arith.constant 0 : index
    %c0_59 = arith.constant 0 : index
    %231 = vector.load %arg4[%230, %c0_58, %c0_59] : memref<8x2x32xf32, #tpu.memory_space<vmem>>, vector<1x2x32xf32>
    %232 = vector.shape_cast %231 : vector<1x2x32xf32> to vector<2x32xf32>
    %233 = vector.shape_cast %225 : vector<2x32xf32> to vector<1x2x32xf32>
    tpu.vector_store %arg4[%230, %c0_58, %c0_59], %233 {strides = array<i32>} : memref<8x2x32xf32, #tpu.memory_space<vmem>>, vector<1x2x32xf32>,
    %c3_i32 = arith.constant 3 : i32
    %c7_i32_60 = arith.constant 7 : i32
    %234 = arith.subi %c7_i32_60, %c3_i32 : i32
    %235 = arith.index_cast %c3_i32 : i32 to index
    %c0_61 = arith.constant 0 : index
    %c0_62 = arith.constant 0 : index
    %236 = vector.load %arg0[%235, %c0_61, %c0_62] : memref<8x2x192xf32, #tpu.memory_space<vmem>>, vector<1x2x192xf32>
    %237 = vector.shape_cast %236 : vector<1x2x192xf32> to vector<2x192xf32>
    %238 = vector.extract_strided_slice %237 {offsets = [0, 0], sizes = [2, 96], strides = [1, 1]} : vector<2x192xf32> to vector<2x96xf32>
    %239 = arith.index_cast %234 : i32 to index
    %c0_63 = arith.constant 0 : index
    %c0_64 = arith.constant 0 : index
    %240 = vector.load %arg0[%239, %c0_63, %c0_64] : memref<8x2x192xf32, #tpu.memory_space<vmem>>, vector<1x2x192xf32>
    %241 = vector.shape_cast %240 : vector<1x2x192xf32> to vector<2x192xf32>
    %242 = vector.extract_strided_slice %241 {offsets = [0, 96], sizes = [2, 96], strides = [1, 1]} : vector<2x192xf32> to vector<2x96xf32>
    %cst_65 = arith.constant dense<0.000000e+00> : vector<2x96xf32>
    %243 = tpu.matmul %199, %1, %cst_65 {dimension_numbers = #tpu.dot_dimension_numbers<[1], [0], [0], [1], [0, 0, 1, 1], [], []>} : vector<2x32xf32>, vector<32x96xf32>, vector<2x96xf32> -> vector<2x96xf32>
    %244 = vector.broadcast %5 : vector<1x96xf32> to vector<2x96xf32>
    %245 = arith.addf %243, %244 : vector<2x96xf32>
    %cst_66 = arith.constant dense<0.000000e+00> : vector<2x96xf32>
    %246 = tpu.matmul %225, %3, %cst_66 {dimension_numbers = #tpu.dot_dimension_numbers<[1], [0], [0], [1], [0, 0, 1, 1], [], []>} : vector<2x32xf32>, vector<32x96xf32>, vector<2x96xf32> -> vector<2x96xf32>
    %247 = vector.broadcast %7 : vector<1x96xf32> to vector<2x96xf32>
    %248 = arith.addf %246, %247 : vector<2x96xf32>
    %249 = vector.extract_strided_slice %238 {offsets = [0, 0], sizes = [2, 32], strides = [1, 1]} : vector<2x96xf32> to vector<2x32xf32>
    %250 = vector.extract_strided_slice %245 {offsets = [0, 0], sizes = [2, 32], strides = [1, 1]} : vector<2x96xf32> to vector<2x32xf32>
    %251 = arith.addf %249, %250 : vector<2x32xf32>
    %252 = arith.negf %251 : vector<2x32xf32>
    %253 = math.exp %252 : vector<2x32xf32>
    %cst_67 = arith.constant 1.000000e+00 : f32
    %254 = vector.broadcast %cst_67 : f32 to vector<2x32xf32>
    %255 = arith.addf %254, %253 : vector<2x32xf32>
    %256 = arith.divf %254, %255 : vector<2x32xf32>
    %257 = vector.extract_strided_slice %238 {offsets = [0, 32], sizes = [2, 32], strides = [1, 1]} : vector<2x96xf32> to vector<2x32xf32>
    %258 = vector.extract_strided_slice %245 {offsets = [0, 32], sizes = [2, 32], strides = [1, 1]} : vector<2x96xf32> to vector<2x32xf32>
    %259 = arith.addf %257, %258 : vector<2x32xf32>
    %260 = arith.negf %259 : vector<2x32xf32>
    %261 = math.exp %260 : vector<2x32xf32>
    %cst_68 = arith.constant 1.000000e+00 : f32
    %262 = vector.broadcast %cst_68 : f32 to vector<2x32xf32>
    %263 = arith.addf %262, %261 : vector<2x32xf32>
    %264 = arith.divf %262, %263 : vector<2x32xf32>
    %265 = vector.extract_strided_slice %238 {offsets = [0, 64], sizes = [2, 32], strides = [1, 1]} : vector<2x96xf32> to vector<2x32xf32>
    %266 = vector.extract_strided_slice %245 {offsets = [0, 64], sizes = [2, 32], strides = [1, 1]} : vector<2x96xf32> to vector<2x32xf32>
    %267 = arith.mulf %256, %266 : vector<2x32xf32>
    %268 = arith.addf %265, %267 : vector<2x32xf32>
    %269 = math.tanh %268 : vector<2x32xf32>
    %cst_69 = arith.constant 1.000000e+00 : f32
    %270 = vector.broadcast %cst_69 : f32 to vector<2x32xf32>
    %271 = arith.subf %270, %264 : vector<2x32xf32>
    %272 = arith.mulf %271, %269 : vector<2x32xf32>
    %273 = arith.mulf %264, %199 : vector<2x32xf32>
    %274 = arith.addf %272, %273 : vector<2x32xf32>
    %275 = vector.extract_strided_slice %242 {offsets = [0, 0], sizes = [2, 32], strides = [1, 1]} : vector<2x96xf32> to vector<2x32xf32>
    %276 = vector.extract_strided_slice %248 {offsets = [0, 0], sizes = [2, 32], strides = [1, 1]} : vector<2x96xf32> to vector<2x32xf32>
    %277 = arith.addf %275, %276 : vector<2x32xf32>
    %278 = arith.negf %277 : vector<2x32xf32>
    %279 = math.exp %278 : vector<2x32xf32>
    %cst_70 = arith.constant 1.000000e+00 : f32
    %280 = vector.broadcast %cst_70 : f32 to vector<2x32xf32>
    %281 = arith.addf %280, %279 : vector<2x32xf32>
    %282 = arith.divf %280, %281 : vector<2x32xf32>
    %283 = vector.extract_strided_slice %242 {offsets = [0, 32], sizes = [2, 32], strides = [1, 1]} : vector<2x96xf32> to vector<2x32xf32>
    %284 = vector.extract_strided_slice %248 {offsets = [0, 32], sizes = [2, 32], strides = [1, 1]} : vector<2x96xf32> to vector<2x32xf32>
    %285 = arith.addf %283, %284 : vector<2x32xf32>
    %286 = arith.negf %285 : vector<2x32xf32>
    %287 = math.exp %286 : vector<2x32xf32>
    %cst_71 = arith.constant 1.000000e+00 : f32
    %288 = vector.broadcast %cst_71 : f32 to vector<2x32xf32>
    %289 = arith.addf %288, %287 : vector<2x32xf32>
    %290 = arith.divf %288, %289 : vector<2x32xf32>
    %291 = vector.extract_strided_slice %242 {offsets = [0, 64], sizes = [2, 32], strides = [1, 1]} : vector<2x96xf32> to vector<2x32xf32>
    %292 = vector.extract_strided_slice %248 {offsets = [0, 64], sizes = [2, 32], strides = [1, 1]} : vector<2x96xf32> to vector<2x32xf32>
    %293 = arith.mulf %282, %292 : vector<2x32xf32>
    %294 = arith.addf %291, %293 : vector<2x32xf32>
    %295 = math.tanh %294 : vector<2x32xf32>
    %cst_72 = arith.constant 1.000000e+00 : f32
    %296 = vector.broadcast %cst_72 : f32 to vector<2x32xf32>
    %297 = arith.subf %296, %290 : vector<2x32xf32>
    %298 = arith.mulf %297, %295 : vector<2x32xf32>
    %299 = arith.mulf %290, %225 : vector<2x32xf32>
    %300 = arith.addf %298, %299 : vector<2x32xf32>
    %301 = arith.index_cast %c3_i32 : i32 to index
    %c0_73 = arith.constant 0 : index
    %c0_74 = arith.constant 0 : index
    %302 = vector.load %arg3[%301, %c0_73, %c0_74] : memref<8x2x32xf32, #tpu.memory_space<vmem>>, vector<1x2x32xf32>
    %303 = vector.shape_cast %302 : vector<1x2x32xf32> to vector<2x32xf32>
    %304 = vector.shape_cast %274 : vector<2x32xf32> to vector<1x2x32xf32>
    tpu.vector_store %arg3[%301, %c0_73, %c0_74], %304 {strides = array<i32>} : memref<8x2x32xf32, #tpu.memory_space<vmem>>, vector<1x2x32xf32>,
    %305 = arith.index_cast %234 : i32 to index
    %c0_75 = arith.constant 0 : index
    %c0_76 = arith.constant 0 : index
    %306 = vector.load %arg4[%305, %c0_75, %c0_76] : memref<8x2x32xf32, #tpu.memory_space<vmem>>, vector<1x2x32xf32>
    %307 = vector.shape_cast %306 : vector<1x2x32xf32> to vector<2x32xf32>
    %308 = vector.shape_cast %300 : vector<2x32xf32> to vector<1x2x32xf32>
    tpu.vector_store %arg4[%305, %c0_75, %c0_76], %308 {strides = array<i32>} : memref<8x2x32xf32, #tpu.memory_space<vmem>>, vector<1x2x32xf32>,
    %c4_i32 = arith.constant 4 : i32
    %c7_i32_77 = arith.constant 7 : i32
    %309 = arith.subi %c7_i32_77, %c4_i32 : i32
    %310 = arith.index_cast %c4_i32 : i32 to index
    %c0_78 = arith.constant 0 : index
    %c0_79 = arith.constant 0 : index
    %311 = vector.load %arg0[%310, %c0_78, %c0_79] : memref<8x2x192xf32, #tpu.memory_space<vmem>>, vector<1x2x192xf32>
    %312 = vector.shape_cast %311 : vector<1x2x192xf32> to vector<2x192xf32>
    %313 = vector.extract_strided_slice %312 {offsets = [0, 0], sizes = [2, 96], strides = [1, 1]} : vector<2x192xf32> to vector<2x96xf32>
    %314 = arith.index_cast %309 : i32 to index
    %c0_80 = arith.constant 0 : index
    %c0_81 = arith.constant 0 : index
    %315 = vector.load %arg0[%314, %c0_80, %c0_81] : memref<8x2x192xf32, #tpu.memory_space<vmem>>, vector<1x2x192xf32>
    %316 = vector.shape_cast %315 : vector<1x2x192xf32> to vector<2x192xf32>
    %317 = vector.extract_strided_slice %316 {offsets = [0, 96], sizes = [2, 96], strides = [1, 1]} : vector<2x192xf32> to vector<2x96xf32>
    %cst_82 = arith.constant dense<0.000000e+00> : vector<2x96xf32>
    %318 = tpu.matmul %274, %1, %cst_82 {dimension_numbers = #tpu.dot_dimension_numbers<[1], [0], [0], [1], [0, 0, 1, 1], [], []>} : vector<2x32xf32>, vector<32x96xf32>, vector<2x96xf32> -> vector<2x96xf32>
    %319 = vector.broadcast %5 : vector<1x96xf32> to vector<2x96xf32>
    %320 = arith.addf %318, %319 : vector<2x96xf32>
    %cst_83 = arith.constant dense<0.000000e+00> : vector<2x96xf32>
    %321 = tpu.matmul %300, %3, %cst_83 {dimension_numbers = #tpu.dot_dimension_numbers<[1], [0], [0], [1], [0, 0, 1, 1], [], []>} : vector<2x32xf32>, vector<32x96xf32>, vector<2x96xf32> -> vector<2x96xf32>
    %322 = vector.broadcast %7 : vector<1x96xf32> to vector<2x96xf32>
    %323 = arith.addf %321, %322 : vector<2x96xf32>
    %324 = vector.extract_strided_slice %313 {offsets = [0, 0], sizes = [2, 32], strides = [1, 1]} : vector<2x96xf32> to vector<2x32xf32>
    %325 = vector.extract_strided_slice %320 {offsets = [0, 0], sizes = [2, 32], strides = [1, 1]} : vector<2x96xf32> to vector<2x32xf32>
    %326 = arith.addf %324, %325 : vector<2x32xf32>
    %327 = arith.negf %326 : vector<2x32xf32>
    %328 = math.exp %327 : vector<2x32xf32>
    %cst_84 = arith.constant 1.000000e+00 : f32
    %329 = vector.broadcast %cst_84 : f32 to vector<2x32xf32>
    %330 = arith.addf %329, %328 : vector<2x32xf32>
    %331 = arith.divf %329, %330 : vector<2x32xf32>
    %332 = vector.extract_strided_slice %313 {offsets = [0, 32], sizes = [2, 32], strides = [1, 1]} : vector<2x96xf32> to vector<2x32xf32>
    %333 = vector.extract_strided_slice %320 {offsets = [0, 32], sizes = [2, 32], strides = [1, 1]} : vector<2x96xf32> to vector<2x32xf32>
    %334 = arith.addf %332, %333 : vector<2x32xf32>
    %335 = arith.negf %334 : vector<2x32xf32>
    %336 = math.exp %335 : vector<2x32xf32>
    %cst_85 = arith.constant 1.000000e+00 : f32
    %337 = vector.broadcast %cst_85 : f32 to vector<2x32xf32>
    %338 = arith.addf %337, %336 : vector<2x32xf32>
    %339 = arith.divf %337, %338 : vector<2x32xf32>
    %340 = vector.extract_strided_slice %313 {offsets = [0, 64], sizes = [2, 32], strides = [1, 1]} : vector<2x96xf32> to vector<2x32xf32>
    %341 = vector.extract_strided_slice %320 {offsets = [0, 64], sizes = [2, 32], strides = [1, 1]} : vector<2x96xf32> to vector<2x32xf32>
    %342 = arith.mulf %331, %341 : vector<2x32xf32>
    %343 = arith.addf %340, %342 : vector<2x32xf32>
    %344 = math.tanh %343 : vector<2x32xf32>
    %cst_86 = arith.constant 1.000000e+00 : f32
    %345 = vector.broadcast %cst_86 : f32 to vector<2x32xf32>
    %346 = arith.subf %345, %339 : vector<2x32xf32>
    %347 = arith.mulf %346, %344 : vector<2x32xf32>
    %348 = arith.mulf %339, %274 : vector<2x32xf32>
    %349 = arith.addf %347, %348 : vector<2x32xf32>
    %350 = vector.extract_strided_slice %317 {offsets = [0, 0], sizes = [2, 32], strides = [1, 1]} : vector<2x96xf32> to vector<2x32xf32>
    %351 = vector.extract_strided_slice %323 {offsets = [0, 0], sizes = [2, 32], strides = [1, 1]} : vector<2x96xf32> to vector<2x32xf32>
    %352 = arith.addf %350, %351 : vector<2x32xf32>
    %353 = arith.negf %352 : vector<2x32xf32>
    %354 = math.exp %353 : vector<2x32xf32>
    %cst_87 = arith.constant 1.000000e+00 : f32
    %355 = vector.broadcast %cst_87 : f32 to vector<2x32xf32>
    %356 = arith.addf %355, %354 : vector<2x32xf32>
    %357 = arith.divf %355, %356 : vector<2x32xf32>
    %358 = vector.extract_strided_slice %317 {offsets = [0, 32], sizes = [2, 32], strides = [1, 1]} : vector<2x96xf32> to vector<2x32xf32>
    %359 = vector.extract_strided_slice %323 {offsets = [0, 32], sizes = [2, 32], strides = [1, 1]} : vector<2x96xf32> to vector<2x32xf32>
    %360 = arith.addf %358, %359 : vector<2x32xf32>
    %361 = arith.negf %360 : vector<2x32xf32>
    %362 = math.exp %361 : vector<2x32xf32>
    %cst_88 = arith.constant 1.000000e+00 : f32
    %363 = vector.broadcast %cst_88 : f32 to vector<2x32xf32>
    %364 = arith.addf %363, %362 : vector<2x32xf32>
    %365 = arith.divf %363, %364 : vector<2x32xf32>
    %366 = vector.extract_strided_slice %317 {offsets = [0, 64], sizes = [2, 32], strides = [1, 1]} : vector<2x96xf32> to vector<2x32xf32>
    %367 = vector.extract_strided_slice %323 {offsets = [0, 64], sizes = [2, 32], strides = [1, 1]} : vector<2x96xf32> to vector<2x32xf32>
    %368 = arith.mulf %357, %367 : vector<2x32xf32>
    %369 = arith.addf %366, %368 : vector<2x32xf32>
    %370 = math.tanh %369 : vector<2x32xf32>
    %cst_89 = arith.constant 1.000000e+00 : f32
    %371 = vector.broadcast %cst_89 : f32 to vector<2x32xf32>
    %372 = arith.subf %371, %365 : vector<2x32xf32>
    %373 = arith.mulf %372, %370 : vector<2x32xf32>
    %374 = arith.mulf %365, %300 : vector<2x32xf32>
    %375 = arith.addf %373, %374 : vector<2x32xf32>
    %376 = arith.index_cast %c4_i32 : i32 to index
    %c0_90 = arith.constant 0 : index
    %c0_91 = arith.constant 0 : index
    %377 = vector.load %arg3[%376, %c0_90, %c0_91] : memref<8x2x32xf32, #tpu.memory_space<vmem>>, vector<1x2x32xf32>
    %378 = vector.shape_cast %377 : vector<1x2x32xf32> to vector<2x32xf32>
    %379 = vector.shape_cast %349 : vector<2x32xf32> to vector<1x2x32xf32>
    tpu.vector_store %arg3[%376, %c0_90, %c0_91], %379 {strides = array<i32>} : memref<8x2x32xf32, #tpu.memory_space<vmem>>, vector<1x2x32xf32>,
    %380 = arith.index_cast %309 : i32 to index
    %c0_92 = arith.constant 0 : index
    %c0_93 = arith.constant 0 : index
    %381 = vector.load %arg4[%380, %c0_92, %c0_93] : memref<8x2x32xf32, #tpu.memory_space<vmem>>, vector<1x2x32xf32>
    %382 = vector.shape_cast %381 : vector<1x2x32xf32> to vector<2x32xf32>
    %383 = vector.shape_cast %375 : vector<2x32xf32> to vector<1x2x32xf32>
    tpu.vector_store %arg4[%380, %c0_92, %c0_93], %383 {strides = array<i32>} : memref<8x2x32xf32, #tpu.memory_space<vmem>>, vector<1x2x32xf32>,
    %c5_i32 = arith.constant 5 : i32
    %c7_i32_94 = arith.constant 7 : i32
    %384 = arith.subi %c7_i32_94, %c5_i32 : i32
    %385 = arith.index_cast %c5_i32 : i32 to index
    %c0_95 = arith.constant 0 : index
    %c0_96 = arith.constant 0 : index
    %386 = vector.load %arg0[%385, %c0_95, %c0_96] : memref<8x2x192xf32, #tpu.memory_space<vmem>>, vector<1x2x192xf32>
    %387 = vector.shape_cast %386 : vector<1x2x192xf32> to vector<2x192xf32>
    %388 = vector.extract_strided_slice %387 {offsets = [0, 0], sizes = [2, 96], strides = [1, 1]} : vector<2x192xf32> to vector<2x96xf32>
    %389 = arith.index_cast %384 : i32 to index
    %c0_97 = arith.constant 0 : index
    %c0_98 = arith.constant 0 : index
    %390 = vector.load %arg0[%389, %c0_97, %c0_98] : memref<8x2x192xf32, #tpu.memory_space<vmem>>, vector<1x2x192xf32>
    %391 = vector.shape_cast %390 : vector<1x2x192xf32> to vector<2x192xf32>
    %392 = vector.extract_strided_slice %391 {offsets = [0, 96], sizes = [2, 96], strides = [1, 1]} : vector<2x192xf32> to vector<2x96xf32>
    %cst_99 = arith.constant dense<0.000000e+00> : vector<2x96xf32>
    %393 = tpu.matmul %349, %1, %cst_99 {dimension_numbers = #tpu.dot_dimension_numbers<[1], [0], [0], [1], [0, 0, 1, 1], [], []>} : vector<2x32xf32>, vector<32x96xf32>, vector<2x96xf32> -> vector<2x96xf32>
    %394 = vector.broadcast %5 : vector<1x96xf32> to vector<2x96xf32>
    %395 = arith.addf %393, %394 : vector<2x96xf32>
    %cst_100 = arith.constant dense<0.000000e+00> : vector<2x96xf32>
    %396 = tpu.matmul %375, %3, %cst_100 {dimension_numbers = #tpu.dot_dimension_numbers<[1], [0], [0], [1], [0, 0, 1, 1], [], []>} : vector<2x32xf32>, vector<32x96xf32>, vector<2x96xf32> -> vector<2x96xf32>
    %397 = vector.broadcast %7 : vector<1x96xf32> to vector<2x96xf32>
    %398 = arith.addf %396, %397 : vector<2x96xf32>
    %399 = vector.extract_strided_slice %388 {offsets = [0, 0], sizes = [2, 32], strides = [1, 1]} : vector<2x96xf32> to vector<2x32xf32>
    %400 = vector.extract_strided_slice %395 {offsets = [0, 0], sizes = [2, 32], strides = [1, 1]} : vector<2x96xf32> to vector<2x32xf32>
    %401 = arith.addf %399, %400 : vector<2x32xf32>
    %402 = arith.negf %401 : vector<2x32xf32>
    %403 = math.exp %402 : vector<2x32xf32>
    %cst_101 = arith.constant 1.000000e+00 : f32
    %404 = vector.broadcast %cst_101 : f32 to vector<2x32xf32>
    %405 = arith.addf %404, %403 : vector<2x32xf32>
    %406 = arith.divf %404, %405 : vector<2x32xf32>
    %407 = vector.extract_strided_slice %388 {offsets = [0, 32], sizes = [2, 32], strides = [1, 1]} : vector<2x96xf32> to vector<2x32xf32>
    %408 = vector.extract_strided_slice %395 {offsets = [0, 32], sizes = [2, 32], strides = [1, 1]} : vector<2x96xf32> to vector<2x32xf32>
    %409 = arith.addf %407, %408 : vector<2x32xf32>
    %410 = arith.negf %409 : vector<2x32xf32>
    %411 = math.exp %410 : vector<2x32xf32>
    %cst_102 = arith.constant 1.000000e+00 : f32
    %412 = vector.broadcast %cst_102 : f32 to vector<2x32xf32>
    %413 = arith.addf %412, %411 : vector<2x32xf32>
    %414 = arith.divf %412, %413 : vector<2x32xf32>
    %415 = vector.extract_strided_slice %388 {offsets = [0, 64], sizes = [2, 32], strides = [1, 1]} : vector<2x96xf32> to vector<2x32xf32>
    %416 = vector.extract_strided_slice %395 {offsets = [0, 64], sizes = [2, 32], strides = [1, 1]} : vector<2x96xf32> to vector<2x32xf32>
    %417 = arith.mulf %406, %416 : vector<2x32xf32>
    %418 = arith.addf %415, %417 : vector<2x32xf32>
    %419 = math.tanh %418 : vector<2x32xf32>
    %cst_103 = arith.constant 1.000000e+00 : f32
    %420 = vector.broadcast %cst_103 : f32 to vector<2x32xf32>
    %421 = arith.subf %420, %414 : vector<2x32xf32>
    %422 = arith.mulf %421, %419 : vector<2x32xf32>
    %423 = arith.mulf %414, %349 : vector<2x32xf32>
    %424 = arith.addf %422, %423 : vector<2x32xf32>
    %425 = vector.extract_strided_slice %392 {offsets = [0, 0], sizes = [2, 32], strides = [1, 1]} : vector<2x96xf32> to vector<2x32xf32>
    %426 = vector.extract_strided_slice %398 {offsets = [0, 0], sizes = [2, 32], strides = [1, 1]} : vector<2x96xf32> to vector<2x32xf32>
    %427 = arith.addf %425, %426 : vector<2x32xf32>
    %428 = arith.negf %427 : vector<2x32xf32>
    %429 = math.exp %428 : vector<2x32xf32>
    %cst_104 = arith.constant 1.000000e+00 : f32
    %430 = vector.broadcast %cst_104 : f32 to vector<2x32xf32>
    %431 = arith.addf %430, %429 : vector<2x32xf32>
    %432 = arith.divf %430, %431 : vector<2x32xf32>
    %433 = vector.extract_strided_slice %392 {offsets = [0, 32], sizes = [2, 32], strides = [1, 1]} : vector<2x96xf32> to vector<2x32xf32>
    %434 = vector.extract_strided_slice %398 {offsets = [0, 32], sizes = [2, 32], strides = [1, 1]} : vector<2x96xf32> to vector<2x32xf32>
    %435 = arith.addf %433, %434 : vector<2x32xf32>
    %436 = arith.negf %435 : vector<2x32xf32>
    %437 = math.exp %436 : vector<2x32xf32>
    %cst_105 = arith.constant 1.000000e+00 : f32
    %438 = vector.broadcast %cst_105 : f32 to vector<2x32xf32>
    %439 = arith.addf %438, %437 : vector<2x32xf32>
    %440 = arith.divf %438, %439 : vector<2x32xf32>
    %441 = vector.extract_strided_slice %392 {offsets = [0, 64], sizes = [2, 32], strides = [1, 1]} : vector<2x96xf32> to vector<2x32xf32>
    %442 = vector.extract_strided_slice %398 {offsets = [0, 64], sizes = [2, 32], strides = [1, 1]} : vector<2x96xf32> to vector<2x32xf32>
    %443 = arith.mulf %432, %442 : vector<2x32xf32>
    %444 = arith.addf %441, %443 : vector<2x32xf32>
    %445 = math.tanh %444 : vector<2x32xf32>
    %cst_106 = arith.constant 1.000000e+00 : f32
    %446 = vector.broadcast %cst_106 : f32 to vector<2x32xf32>
    %447 = arith.subf %446, %440 : vector<2x32xf32>
    %448 = arith.mulf %447, %445 : vector<2x32xf32>
    %449 = arith.mulf %440, %375 : vector<2x32xf32>
    %450 = arith.addf %448, %449 : vector<2x32xf32>
    %451 = arith.index_cast %c5_i32 : i32 to index
    %c0_107 = arith.constant 0 : index
    %c0_108 = arith.constant 0 : index
    %452 = vector.load %arg3[%451, %c0_107, %c0_108] : memref<8x2x32xf32, #tpu.memory_space<vmem>>, vector<1x2x32xf32>
    %453 = vector.shape_cast %452 : vector<1x2x32xf32> to vector<2x32xf32>
    %454 = vector.shape_cast %424 : vector<2x32xf32> to vector<1x2x32xf32>
    tpu.vector_store %arg3[%451, %c0_107, %c0_108], %454 {strides = array<i32>} : memref<8x2x32xf32, #tpu.memory_space<vmem>>, vector<1x2x32xf32>,
    %455 = arith.index_cast %384 : i32 to index
    %c0_109 = arith.constant 0 : index
    %c0_110 = arith.constant 0 : index
    %456 = vector.load %arg4[%455, %c0_109, %c0_110] : memref<8x2x32xf32, #tpu.memory_space<vmem>>, vector<1x2x32xf32>
    %457 = vector.shape_cast %456 : vector<1x2x32xf32> to vector<2x32xf32>
    %458 = vector.shape_cast %450 : vector<2x32xf32> to vector<1x2x32xf32>
    tpu.vector_store %arg4[%455, %c0_109, %c0_110], %458 {strides = array<i32>} : memref<8x2x32xf32, #tpu.memory_space<vmem>>, vector<1x2x32xf32>,
    %c6_i32 = arith.constant 6 : i32
    %c7_i32_111 = arith.constant 7 : i32
    %459 = arith.subi %c7_i32_111, %c6_i32 : i32
    %460 = arith.index_cast %c6_i32 : i32 to index
    %c0_112 = arith.constant 0 : index
    %c0_113 = arith.constant 0 : index
    %461 = vector.load %arg0[%460, %c0_112, %c0_113] : memref<8x2x192xf32, #tpu.memory_space<vmem>>, vector<1x2x192xf32>
    %462 = vector.shape_cast %461 : vector<1x2x192xf32> to vector<2x192xf32>
    %463 = vector.extract_strided_slice %462 {offsets = [0, 0], sizes = [2, 96], strides = [1, 1]} : vector<2x192xf32> to vector<2x96xf32>
    %464 = arith.index_cast %459 : i32 to index
    %c0_114 = arith.constant 0 : index
    %c0_115 = arith.constant 0 : index
    %465 = vector.load %arg0[%464, %c0_114, %c0_115] : memref<8x2x192xf32, #tpu.memory_space<vmem>>, vector<1x2x192xf32>
    %466 = vector.shape_cast %465 : vector<1x2x192xf32> to vector<2x192xf32>
    %467 = vector.extract_strided_slice %466 {offsets = [0, 96], sizes = [2, 96], strides = [1, 1]} : vector<2x192xf32> to vector<2x96xf32>
    %cst_116 = arith.constant dense<0.000000e+00> : vector<2x96xf32>
    %468 = tpu.matmul %424, %1, %cst_116 {dimension_numbers = #tpu.dot_dimension_numbers<[1], [0], [0], [1], [0, 0, 1, 1], [], []>} : vector<2x32xf32>, vector<32x96xf32>, vector<2x96xf32> -> vector<2x96xf32>
    %469 = vector.broadcast %5 : vector<1x96xf32> to vector<2x96xf32>
    %470 = arith.addf %468, %469 : vector<2x96xf32>
    %cst_117 = arith.constant dense<0.000000e+00> : vector<2x96xf32>
    %471 = tpu.matmul %450, %3, %cst_117 {dimension_numbers = #tpu.dot_dimension_numbers<[1], [0], [0], [1], [0, 0, 1, 1], [], []>} : vector<2x32xf32>, vector<32x96xf32>, vector<2x96xf32> -> vector<2x96xf32>
    %472 = vector.broadcast %7 : vector<1x96xf32> to vector<2x96xf32>
    %473 = arith.addf %471, %472 : vector<2x96xf32>
    %474 = vector.extract_strided_slice %463 {offsets = [0, 0], sizes = [2, 32], strides = [1, 1]} : vector<2x96xf32> to vector<2x32xf32>
    %475 = vector.extract_strided_slice %470 {offsets = [0, 0], sizes = [2, 32], strides = [1, 1]} : vector<2x96xf32> to vector<2x32xf32>
    %476 = arith.addf %474, %475 : vector<2x32xf32>
    %477 = arith.negf %476 : vector<2x32xf32>
    %478 = math.exp %477 : vector<2x32xf32>
    %cst_118 = arith.constant 1.000000e+00 : f32
    %479 = vector.broadcast %cst_118 : f32 to vector<2x32xf32>
    %480 = arith.addf %479, %478 : vector<2x32xf32>
    %481 = arith.divf %479, %480 : vector<2x32xf32>
    %482 = vector.extract_strided_slice %463 {offsets = [0, 32], sizes = [2, 32], strides = [1, 1]} : vector<2x96xf32> to vector<2x32xf32>
    %483 = vector.extract_strided_slice %470 {offsets = [0, 32], sizes = [2, 32], strides = [1, 1]} : vector<2x96xf32> to vector<2x32xf32>
    %484 = arith.addf %482, %483 : vector<2x32xf32>
    %485 = arith.negf %484 : vector<2x32xf32>
    %486 = math.exp %485 : vector<2x32xf32>
    %cst_119 = arith.constant 1.000000e+00 : f32
    %487 = vector.broadcast %cst_119 : f32 to vector<2x32xf32>
    %488 = arith.addf %487, %486 : vector<2x32xf32>
    %489 = arith.divf %487, %488 : vector<2x32xf32>
    %490 = vector.extract_strided_slice %463 {offsets = [0, 64], sizes = [2, 32], strides = [1, 1]} : vector<2x96xf32> to vector<2x32xf32>
    %491 = vector.extract_strided_slice %470 {offsets = [0, 64], sizes = [2, 32], strides = [1, 1]} : vector<2x96xf32> to vector<2x32xf32>
    %492 = arith.mulf %481, %491 : vector<2x32xf32>
    %493 = arith.addf %490, %492 : vector<2x32xf32>
    %494 = math.tanh %493 : vector<2x32xf32>
    %cst_120 = arith.constant 1.000000e+00 : f32
    %495 = vector.broadcast %cst_120 : f32 to vector<2x32xf32>
    %496 = arith.subf %495, %489 : vector<2x32xf32>
    %497 = arith.mulf %496, %494 : vector<2x32xf32>
    %498 = arith.mulf %489, %424 : vector<2x32xf32>
    %499 = arith.addf %497, %498 : vector<2x32xf32>
    %500 = vector.extract_strided_slice %467 {offsets = [0, 0], sizes = [2, 32], strides = [1, 1]} : vector<2x96xf32> to vector<2x32xf32>
    %501 = vector.extract_strided_slice %473 {offsets = [0, 0], sizes = [2, 32], strides = [1, 1]} : vector<2x96xf32> to vector<2x32xf32>
    %502 = arith.addf %500, %501 : vector<2x32xf32>
    %503 = arith.negf %502 : vector<2x32xf32>
    %504 = math.exp %503 : vector<2x32xf32>
    %cst_121 = arith.constant 1.000000e+00 : f32
    %505 = vector.broadcast %cst_121 : f32 to vector<2x32xf32>
    %506 = arith.addf %505, %504 : vector<2x32xf32>
    %507 = arith.divf %505, %506 : vector<2x32xf32>
    %508 = vector.extract_strided_slice %467 {offsets = [0, 32], sizes = [2, 32], strides = [1, 1]} : vector<2x96xf32> to vector<2x32xf32>
    %509 = vector.extract_strided_slice %473 {offsets = [0, 32], sizes = [2, 32], strides = [1, 1]} : vector<2x96xf32> to vector<2x32xf32>
    %510 = arith.addf %508, %509 : vector<2x32xf32>
    %511 = arith.negf %510 : vector<2x32xf32>
    %512 = math.exp %511 : vector<2x32xf32>
    %cst_122 = arith.constant 1.000000e+00 : f32
    %513 = vector.broadcast %cst_122 : f32 to vector<2x32xf32>
    %514 = arith.addf %513, %512 : vector<2x32xf32>
    %515 = arith.divf %513, %514 : vector<2x32xf32>
    %516 = vector.extract_strided_slice %467 {offsets = [0, 64], sizes = [2, 32], strides = [1, 1]} : vector<2x96xf32> to vector<2x32xf32>
    %517 = vector.extract_strided_slice %473 {offsets = [0, 64], sizes = [2, 32], strides = [1, 1]} : vector<2x96xf32> to vector<2x32xf32>
    %518 = arith.mulf %507, %517 : vector<2x32xf32>
    %519 = arith.addf %516, %518 : vector<2x32xf32>
    %520 = math.tanh %519 : vector<2x32xf32>
    %cst_123 = arith.constant 1.000000e+00 : f32
    %521 = vector.broadcast %cst_123 : f32 to vector<2x32xf32>
    %522 = arith.subf %521, %515 : vector<2x32xf32>
    %523 = arith.mulf %522, %520 : vector<2x32xf32>
    %524 = arith.mulf %515, %450 : vector<2x32xf32>
    %525 = arith.addf %523, %524 : vector<2x32xf32>
    %526 = arith.index_cast %c6_i32 : i32 to index
    %c0_124 = arith.constant 0 : index
    %c0_125 = arith.constant 0 : index
    %527 = vector.load %arg3[%526, %c0_124, %c0_125] : memref<8x2x32xf32, #tpu.memory_space<vmem>>, vector<1x2x32xf32>
    %528 = vector.shape_cast %527 : vector<1x2x32xf32> to vector<2x32xf32>
    %529 = vector.shape_cast %499 : vector<2x32xf32> to vector<1x2x32xf32>
    tpu.vector_store %arg3[%526, %c0_124, %c0_125], %529 {strides = array<i32>} : memref<8x2x32xf32, #tpu.memory_space<vmem>>, vector<1x2x32xf32>,
    %530 = arith.index_cast %459 : i32 to index
    %c0_126 = arith.constant 0 : index
    %c0_127 = arith.constant 0 : index
    %531 = vector.load %arg4[%530, %c0_126, %c0_127] : memref<8x2x32xf32, #tpu.memory_space<vmem>>, vector<1x2x32xf32>
    %532 = vector.shape_cast %531 : vector<1x2x32xf32> to vector<2x32xf32>
    %533 = vector.shape_cast %525 : vector<2x32xf32> to vector<1x2x32xf32>
    tpu.vector_store %arg4[%530, %c0_126, %c0_127], %533 {strides = array<i32>} : memref<8x2x32xf32, #tpu.memory_space<vmem>>, vector<1x2x32xf32>,
    %c7_i32_128 = arith.constant 7 : i32
    %c7_i32_129 = arith.constant 7 : i32
    %534 = arith.subi %c7_i32_129, %c7_i32_128 : i32
    %535 = arith.index_cast %c7_i32_128 : i32 to index
    %c0_130 = arith.constant 0 : index
    %c0_131 = arith.constant 0 : index
    %536 = vector.load %arg0[%535, %c0_130, %c0_131] : memref<8x2x192xf32, #tpu.memory_space<vmem>>, vector<1x2x192xf32>
    %537 = vector.shape_cast %536 : vector<1x2x192xf32> to vector<2x192xf32>
    %538 = vector.extract_strided_slice %537 {offsets = [0, 0], sizes = [2, 96], strides = [1, 1]} : vector<2x192xf32> to vector<2x96xf32>
    %539 = arith.index_cast %534 : i32 to index
    %c0_132 = arith.constant 0 : index
    %c0_133 = arith.constant 0 : index
    %540 = vector.load %arg0[%539, %c0_132, %c0_133] : memref<8x2x192xf32, #tpu.memory_space<vmem>>, vector<1x2x192xf32>
    %541 = vector.shape_cast %540 : vector<1x2x192xf32> to vector<2x192xf32>
    %542 = vector.extract_strided_slice %541 {offsets = [0, 96], sizes = [2, 96], strides = [1, 1]} : vector<2x192xf32> to vector<2x96xf32>
    %cst_134 = arith.constant dense<0.000000e+00> : vector<2x96xf32>
    %543 = tpu.matmul %499, %1, %cst_134 {dimension_numbers = #tpu.dot_dimension_numbers<[1], [0], [0], [1], [0, 0, 1, 1], [], []>} : vector<2x32xf32>, vector<32x96xf32>, vector<2x96xf32> -> vector<2x96xf32>
    %544 = vector.broadcast %5 : vector<1x96xf32> to vector<2x96xf32>
    %545 = arith.addf %543, %544 : vector<2x96xf32>
    %cst_135 = arith.constant dense<0.000000e+00> : vector<2x96xf32>
    %546 = tpu.matmul %525, %3, %cst_135 {dimension_numbers = #tpu.dot_dimension_numbers<[1], [0], [0], [1], [0, 0, 1, 1], [], []>} : vector<2x32xf32>, vector<32x96xf32>, vector<2x96xf32> -> vector<2x96xf32>
    %547 = vector.broadcast %7 : vector<1x96xf32> to vector<2x96xf32>
    %548 = arith.addf %546, %547 : vector<2x96xf32>
    %549 = vector.extract_strided_slice %538 {offsets = [0, 0], sizes = [2, 32], strides = [1, 1]} : vector<2x96xf32> to vector<2x32xf32>
    %550 = vector.extract_strided_slice %545 {offsets = [0, 0], sizes = [2, 32], strides = [1, 1]} : vector<2x96xf32> to vector<2x32xf32>
    %551 = arith.addf %549, %550 : vector<2x32xf32>
    %552 = arith.negf %551 : vector<2x32xf32>
    %553 = math.exp %552 : vector<2x32xf32>
    %cst_136 = arith.constant 1.000000e+00 : f32
    %554 = vector.broadcast %cst_136 : f32 to vector<2x32xf32>
    %555 = arith.addf %554, %553 : vector<2x32xf32>
    %556 = arith.divf %554, %555 : vector<2x32xf32>
    %557 = vector.extract_strided_slice %538 {offsets = [0, 32], sizes = [2, 32], strides = [1, 1]} : vector<2x96xf32> to vector<2x32xf32>
    %558 = vector.extract_strided_slice %545 {offsets = [0, 32], sizes = [2, 32], strides = [1, 1]} : vector<2x96xf32> to vector<2x32xf32>
    %559 = arith.addf %557, %558 : vector<2x32xf32>
    %560 = arith.negf %559 : vector<2x32xf32>
    %561 = math.exp %560 : vector<2x32xf32>
    %cst_137 = arith.constant 1.000000e+00 : f32
    %562 = vector.broadcast %cst_137 : f32 to vector<2x32xf32>
    %563 = arith.addf %562, %561 : vector<2x32xf32>
    %564 = arith.divf %562, %563 : vector<2x32xf32>
    %565 = vector.extract_strided_slice %538 {offsets = [0, 64], sizes = [2, 32], strides = [1, 1]} : vector<2x96xf32> to vector<2x32xf32>
    %566 = vector.extract_strided_slice %545 {offsets = [0, 64], sizes = [2, 32], strides = [1, 1]} : vector<2x96xf32> to vector<2x32xf32>
    %567 = arith.mulf %556, %566 : vector<2x32xf32>
    %568 = arith.addf %565, %567 : vector<2x32xf32>
    %569 = math.tanh %568 : vector<2x32xf32>
    %cst_138 = arith.constant 1.000000e+00 : f32
    %570 = vector.broadcast %cst_138 : f32 to vector<2x32xf32>
    %571 = arith.subf %570, %564 : vector<2x32xf32>
    %572 = arith.mulf %571, %569 : vector<2x32xf32>
    %573 = arith.mulf %564, %499 : vector<2x32xf32>
    %574 = arith.addf %572, %573 : vector<2x32xf32>
    %575 = vector.extract_strided_slice %542 {offsets = [0, 0], sizes = [2, 32], strides = [1, 1]} : vector<2x96xf32> to vector<2x32xf32>
    %576 = vector.extract_strided_slice %548 {offsets = [0, 0], sizes = [2, 32], strides = [1, 1]} : vector<2x96xf32> to vector<2x32xf32>
    %577 = arith.addf %575, %576 : vector<2x32xf32>
    %578 = arith.negf %577 : vector<2x32xf32>
    %579 = math.exp %578 : vector<2x32xf32>
    %cst_139 = arith.constant 1.000000e+00 : f32
    %580 = vector.broadcast %cst_139 : f32 to vector<2x32xf32>
    %581 = arith.addf %580, %579 : vector<2x32xf32>
    %582 = arith.divf %580, %581 : vector<2x32xf32>
    %583 = vector.extract_strided_slice %542 {offsets = [0, 32], sizes = [2, 32], strides = [1, 1]} : vector<2x96xf32> to vector<2x32xf32>
    %584 = vector.extract_strided_slice %548 {offsets = [0, 32], sizes = [2, 32], strides = [1, 1]} : vector<2x96xf32> to vector<2x32xf32>
    %585 = arith.addf %583, %584 : vector<2x32xf32>
    %586 = arith.negf %585 : vector<2x32xf32>
    %587 = math.exp %586 : vector<2x32xf32>
    %cst_140 = arith.constant 1.000000e+00 : f32
    %588 = vector.broadcast %cst_140 : f32 to vector<2x32xf32>
    %589 = arith.addf %588, %587 : vector<2x32xf32>
    %590 = arith.divf %588, %589 : vector<2x32xf32>
    %591 = vector.extract_strided_slice %542 {offsets = [0, 64], sizes = [2, 32], strides = [1, 1]} : vector<2x96xf32> to vector<2x32xf32>
    %592 = vector.extract_strided_slice %548 {offsets = [0, 64], sizes = [2, 32], strides = [1, 1]} : vector<2x96xf32> to vector<2x32xf32>
    %593 = arith.mulf %582, %592 : vector<2x32xf32>
    %594 = arith.addf %591, %593 : vector<2x32xf32>
    %595 = math.tanh %594 : vector<2x32xf32>
    %cst_141 = arith.constant 1.000000e+00 : f32
    %596 = vector.broadcast %cst_141 : f32 to vector<2x32xf32>
    %597 = arith.subf %596, %590 : vector<2x32xf32>
    %598 = arith.mulf %597, %595 : vector<2x32xf32>
    %599 = arith.mulf %590, %525 : vector<2x32xf32>
    %600 = arith.addf %598, %599 : vector<2x32xf32>
    %601 = arith.index_cast %c7_i32_128 : i32 to index
    %c0_142 = arith.constant 0 : index
    %c0_143 = arith.constant 0 : index
    %602 = vector.load %arg3[%601, %c0_142, %c0_143] : memref<8x2x32xf32, #tpu.memory_space<vmem>>, vector<1x2x32xf32>
    %603 = vector.shape_cast %602 : vector<1x2x32xf32> to vector<2x32xf32>
    %604 = vector.shape_cast %574 : vector<2x32xf32> to vector<1x2x32xf32>
    tpu.vector_store %arg3[%601, %c0_142, %c0_143], %604 {strides = array<i32>} : memref<8x2x32xf32, #tpu.memory_space<vmem>>, vector<1x2x32xf32>,
    %605 = arith.index_cast %534 : i32 to index
    %c0_144 = arith.constant 0 : index
    %c0_145 = arith.constant 0 : index
    %606 = vector.load %arg4[%605, %c0_144, %c0_145] : memref<8x2x32xf32, #tpu.memory_space<vmem>>, vector<1x2x32xf32>
    %607 = vector.shape_cast %606 : vector<1x2x32xf32> to vector<2x32xf32>
    %608 = vector.shape_cast %600 : vector<2x32xf32> to vector<1x2x32xf32>
    tpu.vector_store %arg4[%605, %c0_144, %c0_145], %608 {strides = array<i32>} : memref<8x2x32xf32, #tpu.memory_space<vmem>>, vector<1x2x32xf32>,
    %c8_i32 = arith.constant 8 : i32
    %c0_146 = arith.constant 0 : index
    %c0_147 = arith.constant 0 : index
    %609 = vector.load %arg5[%c0_146, %c0_147] : memref<2x32xf32, #tpu.memory_space<vmem>>, vector<2x32xf32>
    tpu.vector_store %arg5[%c0_146, %c0_147], %574 {strides = array<i32>} : memref<2x32xf32, #tpu.memory_space<vmem>>, vector<2x32xf32>,
    %c0_148 = arith.constant 0 : index
    %c0_149 = arith.constant 0 : index
    %610 = vector.load %arg6[%c0_148, %c0_149] : memref<2x32xf32, #tpu.memory_space<vmem>>, vector<2x32xf32>
    tpu.vector_store %arg6[%c0_148, %c0_149], %600 {strides = array<i32>} : memref<2x32xf32, #tpu.memory_space<vmem>>, vector<2x32xf32>,
    return
  }
}

</mosaic_0001>

<llo_original>
// kernel: encoder_forward.6
$region0: #{encoder_forward.6}
  #allocation0 [shape = 'u32[]', space=smem, size = 0x4, offset = 0x4, fixed_abs, tag = 'smem constant byte address 0x4 - core index']
  #allocation1 [shape = 'u32[144,128]{1,0:T(1,128)}', space=vmem, size = 0x12000, scoped, tag = 'internal scratch']
  %s0 = inlined_call_operand.vmem [shape: f32[16,32], index: 0, kind: input, shape index: {}]
  %s1 = inlined_call_operand.vmem [shape: f32[16,32], index: 1, kind: input, shape index: {}]
  %s2 = inlined_call_operand.vmem [shape: f32[2,32,192], index: 2, kind: input, shape index: {}]
  %s3 = inlined_call_operand.vmem [shape: f32[1,192], index: 3, kind: input, shape index: {}]
  %s4 = inlined_call_operand.vmem [shape: f32[16,192], index: 4, kind: output, shape index: {}]
  %s5 = sld [smem:[#allocation0]]
  $region26: #{encoder_forward.6} parent=0
    _
  %s7 = ssub.s32 1, %s5
  %s8 = scalar_select 0, %s7, %s5
  // Predicated region
  $region2: #{encoder_forward.6} parent=0 // pred_check
    _
  $region3: #{encoder_forward.6} parent=0 // pred_check_branch
    %10 = sbr.rel (0) target = $region5
  $region4: #{encoder_forward.6} parent=0 // pred_region
    _
  $region5: #{encoder_forward.6} parent=0 // pred_fallthru
    _
  // Predicated region
  $region6: #{encoder_forward.6} parent=0 // pred_check
    _
  $region7: #{encoder_forward.6} parent=0 // pred_check_branch
    %12 = sbr.rel (0) target = $region9
  $region8: #{encoder_forward.6} parent=0 // pred_region
    _
  $region9: #{encoder_forward.6} parent=0 // pred_fallthru
    _
  // Predicated region
  $region10: #{encoder_forward.6} parent=0 // pred_check
    _
  $region11: #{encoder_forward.6} parent=0 // pred_check_branch
    %14 = sbr.rel (0) target = $region13
  $region12: #{encoder_forward.6} parent=0 // pred_region
    _
  $region13: #{encoder_forward.6} parent=0 // pred_fallthru
    _
  // Predicated region
  $region14: #{encoder_forward.6} parent=0 // pred_check
    _
  $region15: #{encoder_forward.6} parent=0 // pred_check_branch
    %16 = sbr.rel (0) target = $region17
  $region16: #{encoder_forward.6} parent=0 // pred_region
    _
  $region17: #{encoder_forward.6} parent=0 // pred_fallthru
    _
  %v17 = vld [vmem:[%s0] sm:$0xff]
  %v18 = vld [vmem:[%s0 + $0x8] sm:$0xff]
  %v19 = vld [vmem:[%s2] sm:$0xff]
  %v20 = vld [vmem:[%s2 + $0x8] sm:$0xff]
  %v21 = vld [vmem:[%s2 + $0x10] sm:$0xff]
  %v22 = vld [vmem:[%s2 + $0x18] sm:$0xff]
  %v23 = vld [vmem:[%s2 + $0x20] sm:$0xff]
  %v24 = vld [vmem:[%s2 + $0x28] sm:$0xff]
  %v25 = vld [vmem:[%s2 + $0x30] sm:$0xff]
  %v26 = vld [vmem:[%s2 + $0x38] sm:$0xff]
  %v27 = vld [vmem:[%s1] sm:$0xff]
  %v28 = vld [vmem:[%s1 + $0x8] sm:$0xff]
  %s29 = scalar_lea.vmem %s2, 64
  %v30 = vld [vmem:[%s29] sm:$0xff]
  %v31 = vld [vmem:[%s29 + $0x8] sm:$0xff]
  %v32 = vld [vmem:[%s29 + $0x10] sm:$0xff]
  %v33 = vld [vmem:[%s29 + $0x18] sm:$0xff]
  %v34 = vld [vmem:[%s29 + $0x20] sm:$0xff]
  %v35 = vld [vmem:[%s29 + $0x28] sm:$0xff]
  %v36 = vld [vmem:[%s29 + $0x30] sm:$0xff]
  %v37 = vld [vmem:[%s29 + $0x38] sm:$0xff]
  %vm38 = vcmask 261120
  %v40 = vsel %vm38, %v27, 0
  %v43 = vsel %vm38, %v28, 0
  %45 = vmatprep.subr.mxu0 %v31
  %46 = vmatpush1.msra.mxu0 %v30
  %47 = vmatprep.subr.mxu0 %v33
  %48 = vmatpush1.msra.mxu0 %v32
  %49 = vmatprep.subr.mxu0 %v35
  %50 = vmatpush1.msra.mxu0 %v34
  %51 = vmatprep.subr.mxu0 %v37
  %52 = vmatpush1.msra.mxu0 %v36
  %53 = vmatprep.subr.mxu0 0.0
  %54 = vmatpush1.msra.mxu0 0.0
  %55 = vmatprep.subr.mxu0 0.0
  %56 = vmatpush1.msra.mxu0 0.0
  %57 = vmatprep.subr.mxu0 0.0
  %58 = vmatpush1.msra.mxu0 0.0
  %59 = vmatprep.subr.mxu0 0.0
  %60 = vmatpush1.msra.mxu0 0.0
  %61 = vmatprep.subr.mxu0 0.0
  %62 = vmatpush1.msra.mxu0 0.0
  %63 = vmatprep.subr.mxu0 0.0
  %64 = vmatpush1.msra.mxu0 0.0
  %65 = vmatprep.subr.mxu0 0.0
  %66 = vmatpush1.msra.mxu0 0.0
  %67 = vmatprep.subr.mxu0 0.0
  %68 = vmatpush1.msra.mxu0 0.0
  %69 = vmatprep.subr.mxu0 0.0
  %70 = vmatpush1.msra.mxu0 0.0
  %71 = vmatprep.subr.mxu0 0.0
  %72 = vmatpush1.msra.mxu0 0.0
  %73 = vmatprep.subr.mxu0 0.0
  %74 = vmatpush1.msra.mxu0 0.0
  %75 = vmatprep.subr.mxu0 0.0
  %76 = vmatpush1.msra.mxu0 0.0
  %77 = vmatprep.subr.mxu0 0.0
  %78 = vmatpush1.msra.mxu0 0.0
  %79 = vmatprep.subr.mxu0 0.0
  %80 = vmatpush1.msra.mxu0 0.0
  %81 = vmatprep.subr.mxu0 0.0
  %82 = vmatpush1.msra.mxu0 0.0
  %83 = vmatprep.subr.mxu0 0.0
  %84 = vmatpush1.msra.mxu0 0.0
  %85 = vmatprep.subr.mxu0 0.0
  %86 = vmatpush1.msra.mxu0 0.0
  %87 = vmatprep.subr.mxu0 0.0
  %88 = vmatpush1.msra.mxu0 0.0
  %89 = vmatprep.subr.mxu0 0.0
  %90 = vmatpush1.msra.mxu0 0.0
  %91 = vmatprep.subr.mxu0 0.0
  %92 = vmatpush1.msra.mxu0 0.0
  %93 = vmatprep.subr.mxu0 0.0
  %94 = vmatpush1.msra.mxu0 0.0
  %95 = vmatprep.subr.mxu0 0.0
  %96 = vmatpush1.msra.mxu0 0.0
  %97 = vmatprep.subr.mxu0 0.0
  %98 = vmatpush1.msra.mxu0 0.0
  %99 = vmatprep.subr.mxu0 0.0
  %100 = vmatpush1.msra.mxu0 0.0
  %101 = vmatprep.subr.mxu0 0.0
  %102 = vmatpush1.msra.mxu0 0.0
  %103 = vmatprep.subr.mxu0 0.0
  %104 = vmatpush1.msra.mxu0 0.0
  %105 = vmatprep.subr.mxu0 0.0
  %106 = vmatpush1.msra.mxu0 0.0
  %107 = vmatprep.subr.mxu0 0.0
  %108 = vmatpush1.msra.mxu0 0.0
  %109 = vmatprep.mubr.f32.mxu0 0.0
  %110 = vmatmul.mubr.f32.gmra.mrb[0].mxu0 %v40
  %v111 = vpop.f32.mrb[0].mxu0
  %v112 = vadd.f32 0.0, %v111
  %v113 = vpop.f32.mrb[0].mxu0
  %v114 = vadd.f32 0.0, %v113
  %115 = vmatprep.mubr.f32.mxu0 0.0
  %116 = vmatmul.mubr.f32.gmra.mrb[0].mxu0 %v43
  %v117 = vpop.f32.mrb[0].mxu0
  %v118 = vadd.f32 0.0, %v117
  %v119 = vpop.f32.mrb[0].mxu0
  %v120 = vadd.f32 0.0, %v119
  %121 = vdwg.mxu0
  %v123 = vsel %vm38, %v17, 0
  %v126 = vsel %vm38, %v18, 0
  %128 = vmatprep.subr.mxu0 %v20
  %129 = vmatpush1.msra.mxu0 %v19
  %130 = vmatprep.subr.mxu0 %v22
  %131 = vmatpush1.msra.mxu0 %v21
  %132 = vmatprep.subr.mxu0 %v24
  %133 = vmatpush1.msra.mxu0 %v23
  %134 = vmatprep.subr.mxu0 %v26
  %135 = vmatpush1.msra.mxu0 %v25
  %136 = vmatprep.subr.mxu0 0.0
  %137 = vmatpush1.msra.mxu0 0.0
  %138 = vmatprep.subr.mxu0 0.0
  %139 = vmatpush1.msra.mxu0 0.0
  %140 = vmatprep.subr.mxu0 0.0
  %141 = vmatpush1.msra.mxu0 0.0
  %142 = vmatprep.subr.mxu0 0.0
  %143 = vmatpush1.msra.mxu0 0.0
  %144 = vmatprep.subr.mxu0 0.0
  %145 = vmatpush1.msra.mxu0 0.0
  %146 = vmatprep.subr.mxu0 0.0
  %147 = vmatpush1.msra.mxu0 0.0
  %148 = vmatprep.subr.mxu0 0.0
  %149 = vmatpush1.msra.mxu0 0.0
  %150 = vmatprep.subr.mxu0 0.0
  %151 = vmatpush1.msra.mxu0 0.0
  %152 = vmatprep.subr.mxu0 0.0
  %153 = vmatpush1.msra.mxu0 0.0
  %154 = vmatprep.subr.mxu0 0.0
  %155 = vmatpush1.msra.mxu0 0.0
  %156 = vmatprep.subr.mxu0 0.0
  %157 = vmatpush1.msra.mxu0 0.0
  %158 = vmatprep.subr.mxu0 0.0
  %159 = vmatpush1.msra.mxu0 0.0
  %160 = vmatprep.subr.mxu0 0.0
  %161 = vmatpush1.msra.mxu0 0.0
  %162 = vmatprep.subr.mxu0 0.0
  %163 = vmatpush1.msra.mxu0 0.0
  %164 = vmatprep.subr.mxu0 0.0
  %165 = vmatpush1.msra.mxu0 0.0
  %166 = vmatprep.subr.mxu0 0.0
  %167 = vmatpush1.msra.mxu0 0.0
  %168 = vmatprep.subr.mxu0 0.0
  %169 = vmatpush1.msra.mxu0 0.0
  %170 = vmatprep.subr.mxu0 0.0
  %171 = vmatpush1.msra.mxu0 0.0
  %172 = vmatprep.subr.mxu0 0.0
  %173 = vmatpush1.msra.mxu0 0.0
  %174 = vmatprep.subr.mxu0 0.0
  %175 = vmatpush1.msra.mxu0 0.0
  %176 = vmatprep.subr.mxu0 0.0
  %177 = vmatpush1.msra.mxu0 0.0
  %178 = vmatprep.subr.mxu0 0.0
  %179 = vmatpush1.msra.mxu0 0.0
  %180 = vmatprep.subr.mxu0 0.0
  %181 = vmatpush1.msra.mxu0 0.0
  %182 = vmatprep.subr.mxu0 0.0
  %183 = vmatpush1.msra.mxu0 0.0
  %184 = vmatprep.subr.mxu0 0.0
  %185 = vmatpush1.msra.mxu0 0.0
  %186 = vmatprep.subr.mxu0 0.0
  %187 = vmatpush1.msra.mxu0 0.0
  %188 = vmatprep.subr.mxu0 0.0
  %189 = vmatpush1.msra.mxu0 0.0
  %190 = vmatprep.subr.mxu0 0.0
  %191 = vmatpush1.msra.mxu0 0.0
  %192 = vmatprep.mubr.f32.mxu0 0.0
  %193 = vmatmul.mubr.f32.gmra.mrb[0].mxu0 %v123
  %v194 = vpop.f32.mrb[0].mxu0
  %v195 = vadd.f32 %v112, %v194
  %v196 = vpop.f32.mrb[0].mxu0
  %v197 = vadd.f32 %v114, %v196
  %198 = vmatprep.mubr.f32.mxu0 0.0
  %199 = vmatmul.mubr.f32.gmra.mrb[0].mxu0 %v126
  %v200 = vpop.f32.mrb[0].mxu0
  %v201 = vadd.f32 %v118, %v200
  %v202 = vpop.f32.mrb[0].mxu0
  %v203 = vadd.f32 %v120, %v202
  %204 = vdwg.mxu0
  %v205 = vld [vmem:[%s3] sm:$0x3]
  %v207 = vlaneseq
  %v208 = vshrl.u32 %v207, 7
  %v209 = vsub.s32 0, %v208
  %v210 = vrot.slane %v205, %v209
  %v211 = vlaneseq
  %v212 = vshrl.u32 %v211, 7
  %v213 = vsub.s32 1, %v212
  %v214 = vrot.slane %v205, %v213
  %v217 = vadd.f32 %v195, %v210
  %v218 = vadd.f32 %v197, %v214
  %v219 = vadd.f32 %v201, %v210
  %v220 = vadd.f32 %v203, %v214
  %221 = vst [vmem:[%s4] sm:$0xff] %v217
  %vm222 = vcmask 523264
  %223 = vst.msk [vmem:[%s4 + $0x8] sm:$0xff] %vm222, %v218
  %224 = vst [vmem:[%s4 + $0x10] sm:$0xff] %v219
  %225 = vst.msk [vmem:[%s4 + $0x18] sm:$0xff] %vm222, %v220
  // Predicated region
  $region18: #{encoder_forward.6} parent=0 // pred_check
    _
  $region19: #{encoder_forward.6} parent=0 // pred_check_branch
    %227 = sbr.rel (0) target = $region21
  $region20: #{encoder_forward.6} parent=0 // pred_region
    _
  $region21: #{encoder_forward.6} parent=0 // pred_fallthru
    _
  // Predicated region
  $region22: #{encoder_forward.6} parent=0 // pred_check
    _
  $region23: #{encoder_forward.6} parent=0 // pred_check_branch
    %229 = sbr.rel (0) target = $region25
  $region24: #{encoder_forward.6} parent=0 // pred_region
    _
  $region25: #{encoder_forward.6} parent=0 // pred_fallthru
    _

// kernel: encoder_forward.4
$region0: #{encoder_forward.4}
  #allocation0 [shape = 'u32[]', space=smem, size = 0x4, offset = 0x4, fixed_abs, tag = 'smem constant byte address 0x4 - core index']
  #allocation1 [shape = 'u32[144,128]{1,0:T(1,128)}', space=vmem, size = 0x12000, scoped, tag = 'internal scratch']
  %s0 = inlined_call_operand.vmem [shape: f32[16,32], index: 0, kind: input, shape index: {}]
  %s1 = inlined_call_operand.vmem [shape: f32[1,32,192], index: 1, kind: input, shape index: {}]
  %s2 = inlined_call_operand.vmem [shape: f32[1,192], index: 2, kind: input, shape index: {}]
  %s3 = inlined_call_operand.vmem [shape: f32[16,192], index: 3, kind: output, shape index: {}]
  %s4 = sld [smem:[#allocation0]]
  $region22: #{encoder_forward.4} parent=0
    _
  %s6 = ssub.s32 1, %s4
  %s7 = scalar_select 0, %s6, %s4
  // Predicated region
  $region2: #{encoder_forward.4} parent=0 // pred_check
    _
  $region3: #{encoder_forward.4} parent=0 // pred_check_branch
    %9 = sbr.rel (0) target = $region5
  $region4: #{encoder_forward.4} parent=0 // pred_region
    _
  $region5: #{encoder_forward.4} parent=0 // pred_fallthru
    _
  // Predicated region
  $region6: #{encoder_forward.4} parent=0 // pred_check
    _
  $region7: #{encoder_forward.4} parent=0 // pred_check_branch
    %11 = sbr.rel (0) target = $region9
  $region8: #{encoder_forward.4} parent=0 // pred_region
    _
  $region9: #{encoder_forward.4} parent=0 // pred_fallthru
    _
  // Predicated region
  $region10: #{encoder_forward.4} parent=0 // pred_check
    _
  $region11: #{encoder_forward.4} parent=0 // pred_check_branch
    %13 = sbr.rel (0) target = $region13
  $region12: #{encoder_forward.4} parent=0 // pred_region
    _
  $region13: #{encoder_forward.4} parent=0 // pred_fallthru
    _
  %v14 = vld [vmem:[%s0] sm:$0xff]
  %v15 = vld [vmem:[%s0 + $0x8] sm:$0xff]
  %v16 = vld [vmem:[%s1] sm:$0xff]
  %v17 = vld [vmem:[%s1 + $0x8] sm:$0xff]
  %v18 = vld [vmem:[%s1 + $0x10] sm:$0xff]
  %v19 = vld [vmem:[%s1 + $0x18] sm:$0xff]
  %v20 = vld [vmem:[%s1 + $0x20] sm:$0xff]
  %v21 = vld [vmem:[%s1 + $0x28] sm:$0xff]
  %v22 = vld [vmem:[%s1 + $0x30] sm:$0xff]
  %v23 = vld [vmem:[%s1 + $0x38] sm:$0xff]
  %v24 = vld [vmem:[%s2] sm:$0x3]
  %v26 = vlaneseq
  %v27 = vshrl.u32 %v26, 7
  %v28 = vsub.s32 0, %v27
  %v29 = vrot.slane %v24, %v28
  %v30 = vlaneseq
  %v31 = vshrl.u32 %v30, 7
  %v32 = vsub.s32 1, %v31
  %v33 = vrot.slane %v24, %v32
  %vm36 = vcmask 261120
  %v38 = vsel %vm36, %v14, 0
  %v41 = vsel %vm36, %v15, 0
  %43 = vmatprep.subr.mxu0 %v17
  %44 = vmatpush1.msra.mxu0 %v16
  %45 = vmatprep.subr.mxu0 %v19
  %46 = vmatpush1.msra.mxu0 %v18
  %47 = vmatprep.subr.mxu0 %v21
  %48 = vmatpush1.msra.mxu0 %v20
  %49 = vmatprep.subr.mxu0 %v23
  %50 = vmatpush1.msra.mxu0 %v22
  %51 = vmatprep.subr.mxu0 0.0
  %52 = vmatpush1.msra.mxu0 0.0
  %53 = vmatprep.subr.mxu0 0.0
  %54 = vmatpush1.msra.mxu0 0.0
  %55 = vmatprep.subr.mxu0 0.0
  %56 = vmatpush1.msra.mxu0 0.0
  %57 = vmatprep.subr.mxu0 0.0
  %58 = vmatpush1.msra.mxu0 0.0
  %59 = vmatprep.subr.mxu0 0.0
  %60 = vmatpush1.msra.mxu0 0.0
  %61 = vmatprep.subr.mxu0 0.0
  %62 = vmatpush1.msra.mxu0 0.0
  %63 = vmatprep.subr.mxu0 0.0
  %64 = vmatpush1.msra.mxu0 0.0
  %65 = vmatprep.subr.mxu0 0.0
  %66 = vmatpush1.msra.mxu0 0.0
  %67 = vmatprep.subr.mxu0 0.0
  %68 = vmatpush1.msra.mxu0 0.0
  %69 = vmatprep.subr.mxu0 0.0
  %70 = vmatpush1.msra.mxu0 0.0
  %71 = vmatprep.subr.mxu0 0.0
  %72 = vmatpush1.msra.mxu0 0.0
  %73 = vmatprep.subr.mxu0 0.0
  %74 = vmatpush1.msra.mxu0 0.0
  %75 = vmatprep.subr.mxu0 0.0
  %76 = vmatpush1.msra.mxu0 0.0
  %77 = vmatprep.subr.mxu0 0.0
  %78 = vmatpush1.msra.mxu0 0.0
  %79 = vmatprep.subr.mxu0 0.0
  %80 = vmatpush1.msra.mxu0 0.0
  %81 = vmatprep.subr.mxu0 0.0
  %82 = vmatpush1.msra.mxu0 0.0
  %83 = vmatprep.subr.mxu0 0.0
  %84 = vmatpush1.msra.mxu0 0.0
  %85 = vmatprep.subr.mxu0 0.0
  %86 = vmatpush1.msra.mxu0 0.0
  %87 = vmatprep.subr.mxu0 0.0
  %88 = vmatpush1.msra.mxu0 0.0
  %89 = vmatprep.subr.mxu0 0.0
  %90 = vmatpush1.msra.mxu0 0.0
  %91 = vmatprep.subr.mxu0 0.0
  %92 = vmatpush1.msra.mxu0 0.0
  %93 = vmatprep.subr.mxu0 0.0
  %94 = vmatpush1.msra.mxu0 0.0
  %95 = vmatprep.subr.mxu0 0.0
  %96 = vmatpush1.msra.mxu0 0.0
  %97 = vmatprep.subr.mxu0 0.0
  %98 = vmatpush1.msra.mxu0 0.0
  %99 = vmatprep.subr.mxu0 0.0
  %100 = vmatpush1.msra.mxu0 0.0
  %101 = vmatprep.subr.mxu0 0.0
  %102 = vmatpush1.msra.mxu0 0.0
  %103 = vmatprep.subr.mxu0 0.0
  %104 = vmatpush1.msra.mxu0 0.0
  %105 = vmatprep.subr.mxu0 0.0
  %106 = vmatpush1.msra.mxu0 0.0
  %107 = vmatprep.mubr.f32.mxu0 0.0
  %108 = vmatmul.mubr.f32.gmra.mrb[0].mxu0 %v38
  %v109 = vpop.f32.mrb[0].mxu0
  %v110 = vadd.f32 %v29, %v109
  %v111 = vpop.f32.mrb[0].mxu0
  %v112 = vadd.f32 %v33, %v111
  %113 = vmatprep.mubr.f32.mxu0 0.0
  %114 = vmatmul.mubr.f32.gmra.mrb[0].mxu0 %v41
  %v115 = vpop.f32.mrb[0].mxu0
  %v116 = vadd.f32 %v29, %v115
  %v117 = vpop.f32.mrb[0].mxu0
  %v118 = vadd.f32 %v33, %v117
  %119 = vdwg.mxu0
  %120 = vst [vmem:[%s3] sm:$0xff] %v110
  %vm121 = vcmask 523264
  %122 = vst.msk [vmem:[%s3 + $0x8] sm:$0xff] %vm121, %v112
  %123 = vst [vmem:[%s3 + $0x10] sm:$0xff] %v116
  %124 = vst.msk [vmem:[%s3 + $0x18] sm:$0xff] %vm121, %v118
  // Predicated region
  $region14: #{encoder_forward.4} parent=0 // pred_check
    _
  $region15: #{encoder_forward.4} parent=0 // pred_check_branch
    %126 = sbr.rel (0) target = $region17
  $region16: #{encoder_forward.4} parent=0 // pred_region
    _
  $region17: #{encoder_forward.4} parent=0 // pred_fallthru
    _
  // Predicated region
  $region18: #{encoder_forward.4} parent=0 // pred_check
    _
  $region19: #{encoder_forward.4} parent=0 // pred_check_branch
    %128 = sbr.rel (0) target = $region21
  $region20: #{encoder_forward.4} parent=0 // pred_region
    _
  $region21: #{encoder_forward.4} parent=0 // pred_fallthru
    _

// kernel: encoder_forward.5
$region0: #{encoder_forward.5}
  #allocation0 [shape = 'u32[]', space=smem, size = 0x4, offset = 0x4, fixed_abs, tag = 'smem constant byte address 0x4 - core index']
  #allocation1 [shape = 'u32[144,128]{1,0:T(1,128)}', space=vmem, size = 0x12000, scoped, tag = 'internal scratch']
  %s0 = inlined_call_operand.vmem [shape: f32[8,2,192], index: 0, kind: input, shape index: {}]
  %s1 = inlined_call_operand.vmem [shape: f32[2,32,96], index: 1, kind: input, shape index: {}]
  %s2 = inlined_call_operand.vmem [shape: f32[2,1,96], index: 2, kind: input, shape index: {}]
  %s3 = inlined_call_operand.vmem [shape: f32[8,2,32], index: 3, kind: output, shape index: {0}]
  %s4 = inlined_call_operand.vmem [shape: f32[8,2,32], index: 4, kind: output, shape index: {1}]
  %s5 = inlined_call_operand.vmem [shape: f32[2,32], index: 5, kind: output, shape index: {2}]
  %s6 = inlined_call_operand.vmem [shape: f32[2,32], index: 6, kind: output, shape index: {3}]
  %7 = xla_tuple %s3, %s4, %s5, %s6
  %s8 = sld [smem:[#allocation0]]
  $region46: #{encoder_forward.5} parent=0
    _
  %s10 = ssub.s32 1, %s8
  %s11 = scalar_select 0, %s10, %s8
  // Predicated region
  $region2: #{encoder_forward.5} parent=0 // pred_check
    _
  $region3: #{encoder_forward.5} parent=0 // pred_check_branch
    %13 = sbr.rel (0) target = $region5
  $region4: #{encoder_forward.5} parent=0 // pred_region
    _
  $region5: #{encoder_forward.5} parent=0 // pred_fallthru
    _
  // Predicated region
  $region6: #{encoder_forward.5} parent=0 // pred_check
    _
  $region7: #{encoder_forward.5} parent=0 // pred_check_branch
    %15 = sbr.rel (0) target = $region9
  $region8: #{encoder_forward.5} parent=0 // pred_region
    _
  $region9: #{encoder_forward.5} parent=0 // pred_fallthru
    _
  // Predicated region
  $region10: #{encoder_forward.5} parent=0 // pred_check
    _
  $region11: #{encoder_forward.5} parent=0 // pred_check_branch
    %17 = sbr.rel (0) target = $region13
  $region12: #{encoder_forward.5} parent=0 // pred_region
    _
  $region13: #{encoder_forward.5} parent=0 // pred_fallthru
    _
  %v18 = vld [vmem:[%s1] sm:$0xff]
  %v19 = vld [vmem:[%s1 + $0x8] sm:$0xff]
  %v20 = vld [vmem:[%s1 + $0x10] sm:$0xff]
  %v21 = vld [vmem:[%s1 + $0x18] sm:$0xff]
  %s22 = scalar_lea.vmem %s1, 32
  %v23 = vld [vmem:[%s22] sm:$0xff]
  %v24 = vld [vmem:[%s22 + $0x8] sm:$0xff]
  %v25 = vld [vmem:[%s22 + $0x10] sm:$0xff]
  %v26 = vld [vmem:[%s22 + $0x18] sm:$0xff]
  %v27 = vld [vmem:[%s2] sm:$0x1]
  %s28 = scalar_lea.vmem %s2, 1
  %v29 = vld [vmem:[%s28] sm:$0x1]
  %v30 = vld [vmem:[%s0] sm:$0xf]
  %s31 = scalar_lea.vmem %s0, 28
  %v32 = vld [vmem:[%s31] sm:$0xf]
  %v34 = vlaneseq
  %v35 = vshrl.u32 %v34, 7
  %v36 = vsub.s32 0, %v35
  %v37 = vrot.slane %v27, %v36
  %vm39 = vcmask 261120
  %v41 = vsel %vm39, 0.0, 0
  %43 = vmatprep.subr.mxu0 0.0
  %44 = vmatpush1.msra.mxu0 %v18
  %45 = vmatprep.subr.mxu0 0.0
  %46 = vmatpush1.msra.mxu0 %v19
  %47 = vmatprep.subr.mxu0 0.0
  %48 = vmatpush1.msra.mxu0 %v20
  %49 = vmatprep.subr.mxu0 0.0
  %50 = vmatpush1.msra.mxu0 %v21
  %51 = vmatprep.subr.mxu0 0.0
  %52 = vmatpush1.msra.mxu0 0.0
  %53 = vmatprep.subr.mxu0 0.0
  %54 = vmatpush1.msra.mxu0 0.0
  %55 = vmatprep.subr.mxu0 0.0
  %56 = vmatpush1.msra.mxu0 0.0
  %57 = vmatprep.subr.mxu0 0.0
  %58 = vmatpush1.msra.mxu0 0.0
  %59 = vmatprep.subr.mxu0 0.0
  %60 = vmatpush1.msra.mxu0 0.0
  %61 = vmatprep.subr.mxu0 0.0
  %62 = vmatpush1.msra.mxu0 0.0
  %63 = vmatprep.subr.mxu0 0.0
  %64 = vmatpush1.msra.mxu0 0.0
  %65 = vmatprep.subr.mxu0 0.0
  %66 = vmatpush1.msra.mxu0 0.0
  %67 = vmatprep.subr.mxu0 0.0
  %68 = vmatpush1.msra.mxu0 0.0
  %69 = vmatprep.subr.mxu0 0.0
  %70 = vmatpush1.msra.mxu0 0.0
  %71 = vmatprep.subr.mxu0 0.0
  %72 = vmatpush1.msra.mxu0 0.0
  %73 = vmatprep.subr.mxu0 0.0
  %74 = vmatpush1.msra.mxu0 0.0
  %75 = vmatprep.subr.mxu0 0.0
  %76 = vmatpush1.msra.mxu0 0.0
  %77 = vmatprep.subr.mxu0 0.0
  %78 = vmatpush1.msra.mxu0 0.0
  %79 = vmatprep.subr.mxu0 0.0
  %80 = vmatpush1.msra.mxu0 0.0
  %81 = vmatprep.subr.mxu0 0.0
  %82 = vmatpush1.msra.mxu0 0.0
  %83 = vmatprep.subr.mxu0 0.0
  %84 = vmatpush1.msra.mxu0 0.0
  %85 = vmatprep.subr.mxu0 0.0
  %86 = vmatpush1.msra.mxu0 0.0
  %87 = vmatprep.subr.mxu0 0.0
  %88 = vmatpush1.msra.mxu0 0.0
  %89 = vmatprep.subr.mxu0 0.0
  %90 = vmatpush1.msra.mxu0 0.0
  %91 = vmatprep.subr.mxu0 0.0
  %92 = vmatpush1.msra.mxu0 0.0
  %93 = vmatprep.subr.mxu0 0.0
  %94 = vmatpush1.msra.mxu0 0.0
  %95 = vmatprep.subr.mxu0 0.0
  %96 = vmatpush1.msra.mxu0 0.0
  %97 = vmatprep.subr.mxu0 0.0
  %98 = vmatpush1.msra.mxu0 0.0
  %99 = vmatprep.subr.mxu0 0.0
  %100 = vmatpush1.msra.mxu0 0.0
  %101 = vmatprep.subr.mxu0 0.0
  %102 = vmatpush1.msra.mxu0 0.0
  %103 = vmatprep.subr.mxu0 0.0
  %104 = vmatpush1.msra.mxu0 0.0
  %105 = vmatprep.subr.mxu0 0.0
  %106 = vmatpush1.msra.mxu0 0.0
  %107 = vmatprep.mubr.f32.mxu0 0.0
  %108 = vmatmul.mubr.f32.gmra.mrb[0].mxu0 %v41
  %v109 = vpop.f32.mrb[0].mxu0
  %v110 = vadd.f32 %v37, %v109
  %v111 = vpop.f32.mrb[0].mxu0
  %112 = vdwg.mxu0
  %v114 = vlaneseq
  %v115 = vshrl.u32 %v114, 7
  %v116 = vsub.s32 0, %v115
  %v117 = vrot.slane %v29, %v116
  %119 = vmatprep.subr.mxu0 0.0
  %120 = vmatpush1.msra.mxu0 %v23
  %121 = vmatprep.subr.mxu0 0.0
  %122 = vmatpush1.msra.mxu0 %v24
  %123 = vmatprep.subr.mxu0 0.0
  %124 = vmatpush1.msra.mxu0 %v25
  %125 = vmatprep.subr.mxu0 0.0
  %126 = vmatpush1.msra.mxu0 %v26
  %127 = vmatprep.subr.mxu0 0.0
  %128 = vmatpush1.msra.mxu0 0.0
  %129 = vmatprep.subr.mxu0 0.0
  %130 = vmatpush1.msra.mxu0 0.0
  %131 = vmatprep.subr.mxu0 0.0
  %132 = vmatpush1.msra.mxu0 0.0
  %133 = vmatprep.subr.mxu0 0.0
  %134 = vmatpush1.msra.mxu0 0.0
  %135 = vmatprep.subr.mxu0 0.0
  %136 = vmatpush1.msra.mxu0 0.0
  %137 = vmatprep.subr.mxu0 0.0
  %138 = vmatpush1.msra.mxu0 0.0
  %139 = vmatprep.subr.mxu0 0.0
  %140 = vmatpush1.msra.mxu0 0.0
  %141 = vmatprep.subr.mxu0 0.0
  %142 = vmatpush1.msra.mxu0 0.0
  %143 = vmatprep.subr.mxu0 0.0
  %144 = vmatpush1.msra.mxu0 0.0
  %145 = vmatprep.subr.mxu0 0.0
  %146 = vmatpush1.msra.mxu0 0.0
  %147 = vmatprep.subr.mxu0 0.0
  %148 = vmatpush1.msra.mxu0 0.0
  %149 = vmatprep.subr.mxu0 0.0
  %150 = vmatpush1.msra.mxu0 0.0
  %151 = vmatprep.subr.mxu0 0.0
  %152 = vmatpush1.msra.mxu0 0.0
  %153 = vmatprep.subr.mxu0 0.0
  %154 = vmatpush1.msra.mxu0 0.0
  %155 = vmatprep.subr.mxu0 0.0
  %156 = vmatpush1.msra.mxu0 0.0
  %157 = vmatprep.subr.mxu0 0.0
  %158 = vmatpush1.msra.mxu0 0.0
  %159 = vmatprep.subr.mxu0 0.0
  %160 = vmatpush1.msra.mxu0 0.0
  %161 = vmatprep.subr.mxu0 0.0
  %162 = vmatpush1.msra.mxu0 0.0
  %163 = vmatprep.subr.mxu0 0.0
  %164 = vmatpush1.msra.mxu0 0.0
  %165 = vmatprep.subr.mxu0 0.0
  %166 = vmatpush1.msra.mxu0 0.0
  %167 = vmatprep.subr.mxu0 0.0
  %168 = vmatpush1.msra.mxu0 0.0
  %169 = vmatprep.subr.mxu0 0.0
  %170 = vmatpush1.msra.mxu0 0.0
  %171 = vmatprep.subr.mxu0 0.0
  %172 = vmatpush1.msra.mxu0 0.0
  %173 = vmatprep.subr.mxu0 0.0
  %174 = vmatpush1.msra.mxu0 0.0
  %175 = vmatprep.subr.mxu0 0.0
  %176 = vmatpush1.msra.mxu0 0.0
  %177 = vmatprep.subr.mxu0 0.0
  %178 = vmatpush1.msra.mxu0 0.0
  %179 = vmatprep.subr.mxu0 0.0
  %180 = vmatpush1.msra.mxu0 0.0
  %181 = vmatprep.subr.mxu0 0.0
  %182 = vmatpush1.msra.mxu0 0.0
  %183 = vmatprep.mubr.f32.mxu0 0.0
  %184 = vmatmul.mubr.f32.gmra.mrb[0].mxu0 %v41
  %v185 = vpop.f32.mrb[0].mxu0
  %v186 = vadd.f32 %v117, %v185
  %v187 = vpop.f32.mrb[0].mxu0
  %188 = vdwg.mxu0
  %v189 = vadd.f32 %v30, %v110
  %v190 = vxor.u32 %v189, 2147483648
  %v191 = vmul.f32 %v190, 1.442695
  %v192 = vpow.pop %v191
  %v193 = vadd.f32 %v192, 1.0
  %v194 = vrcp.pop %v193
  %v195 = vmul.f32 1.0, %v194
  %v198 = vunpack.c.l.s4 1983009808
  %v199 = vunpack.c.0.s8 %v198
  %v200 = vlaneseq
  %v201 = vshrl.u32 %v200, 7
  %v202 = vsub.s32 %v199, %v201
  %v203 = vrot.slane %v110, %v202
  %204 = vrot.lane.b32.xlu0 %v203, 64
  %v205 = vpop.permute.xlu0 %204
  %v207 = vmul.f32 %v195, %v205
  %209 = vrot.lane.b32.xlu0 %v207, 64
  %v210 = vpop.permute.xlu0 %209
  %v212 = vadd.f32 %v30, %v210
  %v213 = vtanh.pop %v212
  %v214 = vsub.f32 1.0, %v195
  %216 = vrot.lane.b32.xlu0 %v213, 96
  %v217 = vpop.permute.xlu0 %216
  %v219 = vmul.f32 %v214, %v217
  %v220 = vmul.f32 %v195, 0.0
  %v221 = vadd.f32 %v219, %v220
  %v224 = vunpack.c.l.s4 1983009808
  %v225 = vunpack.c.0.s8 %v224
  %v226 = vlaneseq
  %v227 = vshrl.u32 %v226, 7
  %v228 = vsub.s32 %v225, %v227
  %v229 = vrot.slane %v186, %v228
  %230 = vrot.lane.b32.xlu0 %v229, 96
  %v231 = vpop.permute.xlu0 %230
  %v233 = vadd.f32 %v32, %v231
  %v234 = vxor.u32 %v233, 2147483648
  %v235 = vmul.f32 %v234, 1.442695
  %v236 = vpow.pop %v235
  %v237 = vadd.f32 %v236, 1.0
  %v238 = vrcp.pop %v237
  %v239 = vmul.f32 1.0, %v238
  %v241 = vrot.slane %v32, 2
  %v243 = vadd.f32 %v241, %v231
  %v244 = vxor.u32 %v243, 2147483648
  %v245 = vmul.f32 %v244, 1.442695
  %v246 = vpow.pop %v245
  %v247 = vadd.f32 %v246, 1.0
  %v248 = vrcp.pop %v247
  %v249 = vmul.f32 1.0, %v248
  %250 = vrot.lane.b32.xlu0 %v229, 32
  %v251 = vpop.permute.xlu0 %250
  %v253 = vmul.f32 %v239, %v251
  %254 = vrot.lane.b32.xlu0 %v32, 96
  %v255 = vpop.permute.xlu0 %254
  %v256 = vrot.slane %v255, 2
  %259 = vrot.lane.b32.xlu0 %v253, 32
  %v260 = vpop.permute.xlu0 %259
  %v262 = vadd.f32 %v256, %v260
  %v263 = vtanh.pop %v262
  %v264 = vsub.f32 1.0, %v249
  %v265 = vmul.f32 %v264, %v263
  %v266 = vmul.f32 %v249, 0.0
  %v267 = vadd.f32 %v265, %v266
  %v270 = vunpack.c.l.s4 1983009808
  %v271 = vunpack.c.0.s8 %v270
  %v272 = vlaneseq
  %v273 = vshrl.u32 %v272, 7
  %v274 = vsub.s32 %v271, %v273
  %v275 = vrot.slane %v221, %v274
  %276 = vrot.lane.b32.xlu0 %v275, 96
  %v277 = vpop.permute.xlu0 %276
  %vm279 = vcmask 254976
  %280 = vst.msk [vmem:[%s3] sm:$0x3] %vm279, %v277
  %s281 = scalar_lea.vmem %s4, 14
  %282 = vst.msk [vmem:[%s281] sm:$0x3] %vm279, %v267
  %s283 = scalar_lea.vmem %s0, 4
  %v284 = vld [vmem:[%s283] sm:$0xf]
  %s285 = scalar_lea.vmem %s0, 24
  %v286 = vld [vmem:[%s285] sm:$0xf]
  %v287 = vsel %vm39, %v277, 0
  %289 = vmatprep.subr.mxu0 0.0
  %290 = vmatpush1.msra.mxu0 %v18
  %291 = vmatprep.subr.mxu0 0.0
  %292 = vmatpush1.msra.mxu0 %v19
  %293 = vmatprep.subr.mxu0 0.0
  %294 = vmatpush1.msra.mxu0 %v20
  %295 = vmatprep.subr.mxu0 0.0
  %296 = vmatpush1.msra.mxu0 %v21
  %297 = vmatprep.subr.mxu0 0.0
  %298 = vmatpush1.msra.mxu0 0.0
  %299 = vmatprep.subr.mxu0 0.0
  %300 = vmatpush1.msra.mxu0 0.0
  %301 = vmatprep.subr.mxu0 0.0
  %302 = vmatpush1.msra.mxu0 0.0
  %303 = vmatprep.subr.mxu0 0.0
  %304 = vmatpush1.msra.mxu0 0.0
  %305 = vmatprep.subr.mxu0 0.0
  %306 = vmatpush1.msra.mxu0 0.0
  %307 = vmatprep.subr.mxu0 0.0
  %308 = vmatpush1.msra.mxu0 0.0
  %309 = vmatprep.subr.mxu0 0.0
  %310 = vmatpush1.msra.mxu0 0.0
  %311 = vmatprep.subr.mxu0 0.0
  %312 = vmatpush1.msra.mxu0 0.0
  %313 = vmatprep.subr.mxu0 0.0
  %314 = vmatpush1.msra.mxu0 0.0
  %315 = vmatprep.subr.mxu0 0.0
  %316 = vmatpush1.msra.mxu0 0.0
  %317 = vmatprep.subr.mxu0 0.0
  %318 = vmatpush1.msra.mxu0 0.0
  %319 = vmatprep.subr.mxu0 0.0
  %320 = vmatpush1.msra.mxu0 0.0
  %321 = vmatprep.subr.mxu0 0.0
  %322 = vmatpush1.msra.mxu0 0.0
  %323 = vmatprep.subr.mxu0 0.0
  %324 = vmatpush1.msra.mxu0 0.0
  %325 = vmatprep.subr.mxu0 0.0
  %326 = vmatpush1.msra.mxu0 0.0
  %327 = vmatprep.subr.mxu0 0.0
  %328 = vmatpush1.msra.mxu0 0.0
  %329 = vmatprep.subr.mxu0 0.0
  %330 = vmatpush1.msra.mxu0 0.0
  %331 = vmatprep.subr.mxu0 0.0
  %332 = vmatpush1.msra.mxu0 0.0
  %333 = vmatprep.subr.mxu0 0.0
  %334 = vmatpush1.msra.mxu0 0.0
  %335 = vmatprep.subr.mxu0 0.0
  %336 = vmatpush1.msra.mxu0 0.0
  %337 = vmatprep.subr.mxu0 0.0
  %338 = vmatpush1.msra.mxu0 0.0
  %339 = vmatprep.subr.mxu0 0.0
  %340 = vmatpush1.msra.mxu0 0.0
  %341 = vmatprep.subr.mxu0 0.0
  %342 = vmatpush1.msra.mxu0 0.0
  %343 = vmatprep.subr.mxu0 0.0
  %344 = vmatpush1.msra.mxu0 0.0
  %345 = vmatprep.subr.mxu0 0.0
  %346 = vmatpush1.msra.mxu0 0.0
  %347 = vmatprep.subr.mxu0 0.0
  %348 = vmatpush1.msra.mxu0 0.0
  %349 = vmatprep.subr.mxu0 0.0
  %350 = vmatpush1.msra.mxu0 0.0
  %351 = vmatprep.subr.mxu0 0.0
  %352 = vmatpush1.msra.mxu0 0.0
  %353 = vmatprep.mubr.f32.mxu0 0.0
  %354 = vmatmul.mubr.f32.gmra.mrb[0].mxu0 %v287
  %v355 = vpop.f32.mrb[0].mxu0
  %v356 = vadd.f32 %v37, %v355
  %v357 = vpop.f32.mrb[0].mxu0
  %358 = vdwg.mxu0
  %v360 = vsel %vm39, %v267, 0
  %362 = vmatprep.subr.mxu0 0.0
  %363 = vmatpush1.msra.mxu0 %v23
  %364 = vmatprep.subr.mxu0 0.0
  %365 = vmatpush1.msra.mxu0 %v24
  %366 = vmatprep.subr.mxu0 0.0
  %367 = vmatpush1.msra.mxu0 %v25
  %368 = vmatprep.subr.mxu0 0.0
  %369 = vmatpush1.msra.mxu0 %v26
  %370 = vmatprep.subr.mxu0 0.0
  %371 = vmatpush1.msra.mxu0 0.0
  %372 = vmatprep.subr.mxu0 0.0
  %373 = vmatpush1.msra.mxu0 0.0
  %374 = vmatprep.subr.mxu0 0.0
  %375 = vmatpush1.msra.mxu0 0.0
  %376 = vmatprep.subr.mxu0 0.0
  %377 = vmatpush1.msra.mxu0 0.0
  %378 = vmatprep.subr.mxu0 0.0
  %379 = vmatpush1.msra.mxu0 0.0
  %380 = vmatprep.subr.mxu0 0.0
  %381 = vmatpush1.msra.mxu0 0.0
  %382 = vmatprep.subr.mxu0 0.0
  %383 = vmatpush1.msra.mxu0 0.0
  %384 = vmatprep.subr.mxu0 0.0
  %385 = vmatpush1.msra.mxu0 0.0
  %386 = vmatprep.subr.mxu0 0.0
  %387 = vmatpush1.msra.mxu0 0.0
  %388 = vmatprep.subr.mxu0 0.0
  %389 = vmatpush1.msra.mxu0 0.0
  %390 = vmatprep.subr.mxu0 0.0
  %391 = vmatpush1.msra.mxu0 0.0
  %392 = vmatprep.subr.mxu0 0.0
  %393 = vmatpush1.msra.mxu0 0.0
  %394 = vmatprep.subr.mxu0 0.0
  %395 = vmatpush1.msra.mxu0 0.0
  %396 = vmatprep.subr.mxu0 0.0
  %397 = vmatpush1.msra.mxu0 0.0
  %398 = vmatprep.subr.mxu0 0.0
  %399 = vmatpush1.msra.mxu0 0.0
  %400 = vmatprep.subr.mxu0 0.0
  %401 = vmatpush1.msra.mxu0 0.0
  %402 = vmatprep.subr.mxu0 0.0
  %403 = vmatpush1.msra.mxu0 0.0
  %404 = vmatprep.subr.mxu0 0.0
  %405 = vmatpush1.msra.mxu0 0.0
  %406 = vmatprep.subr.mxu0 0.0
  %407 = vmatpush1.msra.mxu0 0.0
  %408 = vmatprep.subr.mxu0 0.0
  %409 = vmatpush1.msra.mxu0 0.0
  %410 = vmatprep.subr.mxu0 0.0
  %411 = vmatpush1.msra.mxu0 0.0
  %412 = vmatprep.subr.mxu0 0.0
  %413 = vmatpush1.msra.mxu0 0.0
  %414 = vmatprep.subr.mxu0 0.0
  %415 = vmatpush1.msra.mxu0 0.0
  %416 = vmatprep.subr.mxu0 0.0
  %417 = vmatpush1.msra.mxu0 0.0
  %418 = vmatprep.subr.mxu0 0.0
  %419 = vmatpush1.msra.mxu0 0.0
  %420 = vmatprep.subr.mxu0 0.0
  %421 = vmatpush1.msra.mxu0 0.0
  %422 = vmatprep.subr.mxu0 0.0
  %423 = vmatpush1.msra.mxu0 0.0
  %424 = vmatprep.subr.mxu0 0.0
  %425 = vmatpush1.msra.mxu0 0.0
  %426 = vmatprep.mubr.f32.mxu0 0.0
  %427 = vmatmul.mubr.f32.gmra.mrb[0].mxu0 %v360
  %v428 = vpop.f32.mrb[0].mxu0
  %v429 = vadd.f32 %v117, %v428
  %v430 = vpop.f32.mrb[0].mxu0
  %431 = vdwg.mxu0
  %v432 = vadd.f32 %v284, %v356
  %v433 = vxor.u32 %v432, 2147483648
  %v434 = vmul.f32 %v433, 1.442695
  %v435 = vpow.pop %v434
  %v436 = vadd.f32 %v435, 1.0
  %v437 = vrcp.pop %v436
  %v438 = vmul.f32 1.0, %v437
  %v441 = vunpack.c.l.s4 1983009808
  %v442 = vunpack.c.0.s8 %v441
  %v443 = vlaneseq
  %v444 = vshrl.u32 %v443, 7
  %v445 = vsub.s32 %v442, %v444
  %v446 = vrot.slane %v356, %v445
  %447 = vrot.lane.b32.xlu0 %v446, 64
  %v448 = vpop.permute.xlu0 %447
  %v450 = vmul.f32 %v438, %v448
  %452 = vrot.lane.b32.xlu0 %v450, 64
  %v453 = vpop.permute.xlu0 %452
  %v455 = vadd.f32 %v284, %v453
  %v456 = vtanh.pop %v455
  %v457 = vsub.f32 1.0, %v438
  %459 = vrot.lane.b32.xlu0 %v456, 96
  %v460 = vpop.permute.xlu0 %459
  %v462 = vmul.f32 %v457, %v460
  %v463 = vmul.f32 %v438, %v221
  %v464 = vadd.f32 %v462, %v463
  %v467 = vunpack.c.l.s4 1983009808
  %v468 = vunpack.c.0.s8 %v467
  %v469 = vlaneseq
  %v470 = vshrl.u32 %v469, 7
  %v471 = vsub.s32 %v468, %v470
  %v472 = vrot.slane %v429, %v471
  %473 = vrot.lane.b32.xlu0 %v472, 96
  %v474 = vpop.permute.xlu0 %473
  %v476 = vadd.f32 %v286, %v474
  %v477 = vxor.u32 %v476, 2147483648
  %v478 = vmul.f32 %v477, 1.442695
  %v479 = vpow.pop %v478
  %v480 = vadd.f32 %v479, 1.0
  %v481 = vrcp.pop %v480
  %v482 = vmul.f32 1.0, %v481
  %v484 = vrot.slane %v286, 2
  %v486 = vadd.f32 %v484, %v474
  %v487 = vxor.u32 %v486, 2147483648
  %v488 = vmul.f32 %v487, 1.442695
  %v489 = vpow.pop %v488
  %v490 = vadd.f32 %v489, 1.0
  %v491 = vrcp.pop %v490
  %v492 = vmul.f32 1.0, %v491
  %493 = vrot.lane.b32.xlu0 %v472, 32
  %v494 = vpop.permute.xlu0 %493
  %v496 = vmul.f32 %v482, %v494
  %497 = vrot.lane.b32.xlu0 %v286, 96
  %v498 = vpop.permute.xlu0 %497
  %v499 = vrot.slane %v498, 2
  %502 = vrot.lane.b32.xlu0 %v496, 32
  %v503 = vpop.permute.xlu0 %502
  %v505 = vadd.f32 %v499, %v503
  %v506 = vtanh.pop %v505
  %v507 = vsub.f32 1.0, %v492
  %v508 = vmul.f32 %v507, %v506
  %v509 = vmul.f32 %v492, %v267
  %v510 = vadd.f32 %v508, %v509
  %v513 = vunpack.c.l.s4 1983009808
  %v514 = vunpack.c.0.s8 %v513
  %v515 = vlaneseq
  %v516 = vshrl.u32 %v515, 7
  %v517 = vsub.s32 %v514, %v516
  %v518 = vrot.slane %v464, %v517
  %519 = vrot.lane.b32.xlu0 %v518, 96
  %v520 = vpop.permute.xlu0 %519
  %s522 = scalar_lea.vmem %s3, 2
  %523 = vst.msk [vmem:[%s522] sm:$0x3] %vm279, %v520
  %s524 = scalar_lea.vmem %s4, 12
  %525 = vst.msk [vmem:[%s524] sm:$0x3] %vm279, %v510
  %s526 = scalar_lea.vmem %s0, 8
  %v527 = vld [vmem:[%s526] sm:$0xf]
  %s528 = scalar_lea.vmem %s0, 20
  %v529 = vld [vmem:[%s528] sm:$0xf]
  %v530 = vsel %vm39, %v520, 0
  %532 = vmatprep.subr.mxu0 0.0
  %533 = vmatpush1.msra.mxu0 %v18
  %534 = vmatprep.subr.mxu0 0.0
  %535 = vmatpush1.msra.mxu0 %v19
  %536 = vmatprep.subr.mxu0 0.0
  %537 = vmatpush1.msra.mxu0 %v20
  %538 = vmatprep.subr.mxu0 0.0
  %539 = vmatpush1.msra.mxu0 %v21
  %540 = vmatprep.subr.mxu0 0.0
  %541 = vmatpush1.msra.mxu0 0.0
  %542 = vmatprep.subr.mxu0 0.0
  %543 = vmatpush1.msra.mxu0 0.0
  %544 = vmatprep.subr.mxu0 0.0
  %545 = vmatpush1.msra.mxu0 0.0
  %546 = vmatprep.subr.mxu0 0.0
  %547 = vmatpush1.msra.mxu0 0.0
  %548 = vmatprep.subr.mxu0 0.0
  %549 = vmatpush1.msra.mxu0 0.0
  %550 = vmatprep.subr.mxu0 0.0
  %551 = vmatpush1.msra.mxu0 0.0
  %552 = vmatprep.subr.mxu0 0.0
  %553 = vmatpush1.msra.mxu0 0.0
  %554 = vmatprep.subr.mxu0 0.0
  %555 = vmatpush1.msra.mxu0 0.0
  %556 = vmatprep.subr.mxu0 0.0
  %557 = vmatpush1.msra.mxu0 0.0
  %558 = vmatprep.subr.mxu0 0.0
  %559 = vmatpush1.msra.mxu0 0.0
  %560 = vmatprep.subr.mxu0 0.0
  %561 = vmatpush1.msra.mxu0 0.0
  %562 = vmatprep.subr.mxu0 0.0
  %563 = vmatpush1.msra.mxu0 0.0
  %564 = vmatprep.subr.mxu0 0.0
  %565 = vmatpush1.msra.mxu0 0.0
  %566 = vmatprep.subr.mxu0 0.0
  %567 = vmatpush1.msra.mxu0 0.0
  %568 = vmatprep.subr.mxu0 0.0
  %569 = vmatpush1.msra.mxu0 0.0
  %570 = vmatprep.subr.mxu0 0.0
  %571 = vmatpush1.msra.mxu0 0.0
  %572 = vmatprep.subr.mxu0 0.0
  %573 = vmatpush1.msra.mxu0 0.0
  %574 = vmatprep.subr.mxu0 0.0
  %575 = vmatpush1.msra.mxu0 0.0
  %576 = vmatprep.subr.mxu0 0.0
  %577 = vmatpush1.msra.mxu0 0.0
  %578 = vmatprep.subr.mxu0 0.0
  %579 = vmatpush1.msra.mxu0 0.0
  %580 = vmatprep.subr.mxu0 0.0
  %581 = vmatpush1.msra.mxu0 0.0
  %582 = vmatprep.subr.mxu0 0.0
  %583 = vmatpush1.msra.mxu0 0.0
  %584 = vmatprep.subr.mxu0 0.0
  %585 = vmatpush1.msra.mxu0 0.0
  %586 = vmatprep.subr.mxu0 0.0
  %587 = vmatpush1.msra.mxu0 0.0
  %588 = vmatprep.subr.mxu0 0.0
  %589 = vmatpush1.msra.mxu0 0.0
  %590 = vmatprep.subr.mxu0 0.0
  %591 = vmatpush1.msra.mxu0 0.0
  %592 = vmatprep.subr.mxu0 0.0
  %593 = vmatpush1.msra.mxu0 0.0
  %594 = vmatprep.subr.mxu0 0.0
  %595 = vmatpush1.msra.mxu0 0.0
  %596 = vmatprep.mubr.f32.mxu0 0.0
  %597 = vmatmul.mubr.f32.gmra.mrb[0].mxu0 %v530
  %v598 = vpop.f32.mrb[0].mxu0
  %v599 = vadd.f32 %v37, %v598
  %v600 = vpop.f32.mrb[0].mxu0
  %601 = vdwg.mxu0
  %v603 = vsel %vm39, %v510, 0
  %605 = vmatprep.subr.mxu0 0.0
  %606 = vmatpush1.msra.mxu0 %v23
  %607 = vmatprep.subr.mxu0 0.0
  %608 = vmatpush1.msra.mxu0 %v24
  %609 = vmatprep.subr.mxu0 0.0
  %610 = vmatpush1.msra.mxu0 %v25
  %611 = vmatprep.subr.mxu0 0.0
  %612 = vmatpush1.msra.mxu0 %v26
  %613 = vmatprep.subr.mxu0 0.0
  %614 = vmatpush1.msra.mxu0 0.0
  %615 = vmatprep.subr.mxu0 0.0
  %616 = vmatpush1.msra.mxu0 0.0
  %617 = vmatprep.subr.mxu0 0.0
  %618 = vmatpush1.msra.mxu0 0.0
  %619 = vmatprep.subr.mxu0 0.0
  %620 = vmatpush1.msra.mxu0 0.0
  %621 = vmatprep.subr.mxu0 0.0
  %622 = vmatpush1.msra.mxu0 0.0
  %623 = vmatprep.subr.mxu0 0.0
  %624 = vmatpush1.msra.mxu0 0.0
  %625 = vmatprep.subr.mxu0 0.0
  %626 = vmatpush1.msra.mxu0 0.0
  %627 = vmatprep.subr.mxu0 0.0
  %628 = vmatpush1.msra.mxu0 0.0
  %629 = vmatprep.subr.mxu0 0.0
  %630 = vmatpush1.msra.mxu0 0.0
  %631 = vmatprep.subr.mxu0 0.0
  %632 = vmatpush1.msra.mxu0 0.0
  %633 = vmatprep.subr.mxu0 0.0
  %634 = vmatpush1.msra.mxu0 0.0
  %635 = vmatprep.subr.mxu0 0.0
  %636 = vmatpush1.msra.mxu0 0.0
  %637 = vmatprep.subr.mxu0 0.0
  %638 = vmatpush1.msra.mxu0 0.0
  %639 = vmatprep.subr.mxu0 0.0
  %640 = vmatpush1.msra.mxu0 0.0
  %641 = vmatprep.subr.mxu0 0.0
  %642 = vmatpush1.msra.mxu0 0.0
  %643 = vmatprep.subr.mxu0 0.0
  %644 = vmatpush1.msra.mxu0 0.0
  %645 = vmatprep.subr.mxu0 0.0
  %646 = vmatpush1.msra.mxu0 0.0
  %647 = vmatprep.subr.mxu0 0.0
  %648 = vmatpush1.msra.mxu0 0.0
  %649 = vmatprep.subr.mxu0 0.0
  %650 = vmatpush1.msra.mxu0 0.0
  %651 = vmatprep.subr.mxu0 0.0
  %652 = vmatpush1.msra.mxu0 0.0
  %653 = vmatprep.subr.mxu0 0.0
  %654 = vmatpush1.msra.mxu0 0.0
  %655 = vmatprep.subr.mxu0 0.0
  %656 = vmatpush1.msra.mxu0 0.0
  %657 = vmatprep.subr.mxu0 0.0
  %658 = vmatpush1.msra.mxu0 0.0
  %659 = vmatprep.subr.mxu0 0.0
  %660 = vmatpush1.msra.mxu0 0.0
  %661 = vmatprep.subr.mxu0 0.0
  %662 = vmatpush1.msra.mxu0 0.0
  %663 = vmatprep.subr.mxu0 0.0
  %664 = vmatpush1.msra.mxu0 0.0
  %665 = vmatprep.subr.mxu0 0.0
  %666 = vmatpush1.msra.mxu0 0.0
  %667 = vmatprep.subr.mxu0 0.0
  %668 = vmatpush1.msra.mxu0 0.0
  %669 = vmatprep.mubr.f32.mxu0 0.0
  %670 = vmatmul.mubr.f32.gmra.mrb[0].mxu0 %v603
  %v671 = vpop.f32.mrb[0].mxu0
  %v672 = vadd.f32 %v117, %v671
  %v673 = vpop.f32.mrb[0].mxu0
  %674 = vdwg.mxu0
  %v675 = vadd.f32 %v527, %v599
  %v676 = vxor.u32 %v675, 2147483648
  %v677 = vmul.f32 %v676, 1.442695
  %v678 = vpow.pop %v677
  %v679 = vadd.f32 %v678, 1.0
  %v680 = vrcp.pop %v679
  %v681 = vmul.f32 1.0, %v680
  %v684 = vunpack.c.l.s4 1983009808
  %v685 = vunpack.c.0.s8 %v684
  %v686 = vlaneseq
  %v687 = vshrl.u32 %v686, 7
  %v688 = vsub.s32 %v685, %v687
  %v689 = vrot.slane %v599, %v688
  %690 = vrot.lane.b32.xlu0 %v689, 64
  %v691 = vpop.permute.xlu0 %690
  %v693 = vmul.f32 %v681, %v691
  %695 = vrot.lane.b32.xlu0 %v693, 64
  %v696 = vpop.permute.xlu0 %695
  %v698 = vadd.f32 %v527, %v696
  %v699 = vtanh.pop %v698
  %v700 = vsub.f32 1.0, %v681
  %702 = vrot.lane.b32.xlu0 %v699, 96
  %v703 = vpop.permute.xlu0 %702
  %v705 = vmul.f32 %v700, %v703
  %v706 = vmul.f32 %v681, %v464
  %v707 = vadd.f32 %v705, %v706
  %v710 = vunpack.c.l.s4 1983009808
  %v711 = vunpack.c.0.s8 %v710
  %v712 = vlaneseq
  %v713 = vshrl.u32 %v712, 7
  %v714 = vsub.s32 %v711, %v713
  %v715 = vrot.slane %v672, %v714
  %716 = vrot.lane.b32.xlu0 %v715, 96
  %v717 = vpop.permute.xlu0 %716
  %v719 = vadd.f32 %v529, %v717
  %v720 = vxor.u32 %v719, 2147483648
  %v721 = vmul.f32 %v720, 1.442695
  %v722 = vpow.pop %v721
  %v723 = vadd.f32 %v722, 1.0
  %v724 = vrcp.pop %v723
  %v725 = vmul.f32 1.0, %v724
  %v727 = vrot.slane %v529, 2
  %v729 = vadd.f32 %v727, %v717
  %v730 = vxor.u32 %v729, 2147483648
  %v731 = vmul.f32 %v730, 1.442695
  %v732 = vpow.pop %v731
  %v733 = vadd.f32 %v732, 1.0
  %v734 = vrcp.pop %v733
  %v735 = vmul.f32 1.0, %v734
  %736 = vrot.lane.b32.xlu0 %v715, 32
  %v737 = vpop.permute.xlu0 %736
  %v739 = vmul.f32 %v725, %v737
  %740 = vrot.lane.b32.xlu0 %v529, 96
  %v741 = vpop.permute.xlu0 %740
  %v742 = vrot.slane %v741, 2
  %745 = vrot.lane.b32.xlu0 %v739, 32
  %v746 = vpop.permute.xlu0 %745
  %v748 = vadd.f32 %v742, %v746
  %v749 = vtanh.pop %v748
  %v750 = vsub.f32 1.0, %v735
  %v751 = vmul.f32 %v750, %v749
  %v752 = vmul.f32 %v735, %v510
  %v753 = vadd.f32 %v751, %v752
  %v756 = vunpack.c.l.s4 1983009808
  %v757 = vunpack.c.0.s8 %v756
  %v758 = vlaneseq
  %v759 = vshrl.u32 %v758, 7
  %v760 = vsub.s32 %v757, %v759
  %v761 = vrot.slane %v707, %v760
  %762 = vrot.lane.b32.xlu0 %v761, 96
  %v763 = vpop.permute.xlu0 %762
  %s765 = scalar_lea.vmem %s3, 4
  %766 = vst.msk [vmem:[%s765] sm:$0x3] %vm279, %v763
  %s767 = scalar_lea.vmem %s4, 10
  %768 = vst.msk [vmem:[%s767] sm:$0x3] %vm279, %v753
  %s769 = scalar_lea.vmem %s0, 12
  %v770 = vld [vmem:[%s769] sm:$0xf]
  %s771 = scalar_lea.vmem %s0, 16
  %v772 = vld [vmem:[%s771] sm:$0xf]
  %v773 = vsel %vm39, %v763, 0
  %775 = vmatprep.subr.mxu0 0.0
  %776 = vmatpush1.msra.mxu0 %v18
  %777 = vmatprep.subr.mxu0 0.0
  %778 = vmatpush1.msra.mxu0 %v19
  %779 = vmatprep.subr.mxu0 0.0
  %780 = vmatpush1.msra.mxu0 %v20
  %781 = vmatprep.subr.mxu0 0.0
  %782 = vmatpush1.msra.mxu0 %v21
  %783 = vmatprep.subr.mxu0 0.0
  %784 = vmatpush1.msra.mxu0 0.0
  %785 = vmatprep.subr.mxu0 0.0
  %786 = vmatpush1.msra.mxu0 0.0
  %787 = vmatprep.subr.mxu0 0.0
  %788 = vmatpush1.msra.mxu0 0.0
  %789 = vmatprep.subr.mxu0 0.0
  %790 = vmatpush1.msra.mxu0 0.0
  %791 = vmatprep.subr.mxu0 0.0
  %792 = vmatpush1.msra.mxu0 0.0
  %793 = vmatprep.subr.mxu0 0.0
  %794 = vmatpush1.msra.mxu0 0.0
  %795 = vmatprep.subr.mxu0 0.0
  %796 = vmatpush1.msra.mxu0 0.0
  %797 = vmatprep.subr.mxu0 0.0
  %798 = vmatpush1.msra.mxu0 0.0
  %799 = vmatprep.subr.mxu0 0.0
  %800 = vmatpush1.msra.mxu0 0.0
  %801 = vmatprep.subr.mxu0 0.0
  %802 = vmatpush1.msra.mxu0 0.0
  %803 = vmatprep.subr.mxu0 0.0
  %804 = vmatpush1.msra.mxu0 0.0
  %805 = vmatprep.subr.mxu0 0.0
  %806 = vmatpush1.msra.mxu0 0.0
  %807 = vmatprep.subr.mxu0 0.0
  %808 = vmatpush1.msra.mxu0 0.0
  %809 = vmatprep.subr.mxu0 0.0
  %810 = vmatpush1.msra.mxu0 0.0
  %811 = vmatprep.subr.mxu0 0.0
  %812 = vmatpush1.msra.mxu0 0.0
  %813 = vmatprep.subr.mxu0 0.0
  %814 = vmatpush1.msra.mxu0 0.0
  %815 = vmatprep.subr.mxu0 0.0
  %816 = vmatpush1.msra.mxu0 0.0
  %817 = vmatprep.subr.mxu0 0.0
  %818 = vmatpush1.msra.mxu0 0.0
  %819 = vmatprep.subr.mxu0 0.0
  %820 = vmatpush1.msra.mxu0 0.0
  %821 = vmatprep.subr.mxu0 0.0
  %822 = vmatpush1.msra.mxu0 0.0
  %823 = vmatprep.subr.mxu0 0.0
  %824 = vmatpush1.msra.mxu0 0.0
  %825 = vmatprep.subr.mxu0 0.0
  %826 = vmatpush1.msra.mxu0 0.0
  %827 = vmatprep.subr.mxu0 0.0
  %828 = vmatpush1.msra.mxu0 0.0
  %829 = vmatprep.subr.mxu0 0.0
  %830 = vmatpush1.msra.mxu0 0.0
  %831 = vmatprep.subr.mxu0 0.0
  %832 = vmatpush1.msra.mxu0 0.0
  %833 = vmatprep.subr.mxu0 0.0
  %834 = vmatpush1.msra.mxu0 0.0
  %835 = vmatprep.subr.mxu0 0.0
  %836 = vmatpush1.msra.mxu0 0.0
  %837 = vmatprep.subr.mxu0 0.0
  %838 = vmatpush1.msra.mxu0 0.0
  %839 = vmatprep.mubr.f32.mxu0 0.0
  %840 = vmatmul.mubr.f32.gmra.mrb[0].mxu0 %v773
  %v841 = vpop.f32.mrb[0].mxu0
  %v842 = vadd.f32 %v37, %v841
  %v843 = vpop.f32.mrb[0].mxu0
  %844 = vdwg.mxu0
  %v846 = vsel %vm39, %v753, 0
  %848 = vmatprep.subr.mxu0 0.0
  %849 = vmatpush1.msra.mxu0 %v23
  %850 = vmatprep.subr.mxu0 0.0
  %851 = vmatpush1.msra.mxu0 %v24
  %852 = vmatprep.subr.mxu0 0.0
  %853 = vmatpush1.msra.mxu0 %v25
  %854 = vmatprep.subr.mxu0 0.0
  %855 = vmatpush1.msra.mxu0 %v26
  %856 = vmatprep.subr.mxu0 0.0
  %857 = vmatpush1.msra.mxu0 0.0
  %858 = vmatprep.subr.mxu0 0.0
  %859 = vmatpush1.msra.mxu0 0.0
  %860 = vmatprep.subr.mxu0 0.0
  %861 = vmatpush1.msra.mxu0 0.0
  %862 = vmatprep.subr.mxu0 0.0
  %863 = vmatpush1.msra.mxu0 0.0
  %864 = vmatprep.subr.mxu0 0.0
  %865 = vmatpush1.msra.mxu0 0.0
  %866 = vmatprep.subr.mxu0 0.0
  %867 = vmatpush1.msra.mxu0 0.0
  %868 = vmatprep.subr.mxu0 0.0
  %869 = vmatpush1.msra.mxu0 0.0
  %870 = vmatprep.subr.mxu0 0.0
  %871 = vmatpush1.msra.mxu0 0.0
  %872 = vmatprep.subr.mxu0 0.0
  %873 = vmatpush1.msra.mxu0 0.0
  %874 = vmatprep.subr.mxu0 0.0
  %875 = vmatpush1.msra.mxu0 0.0
  %876 = vmatprep.subr.mxu0 0.0
  %877 = vmatpush1.msra.mxu0 0.0
  %878 = vmatprep.subr.mxu0 0.0
  %879 = vmatpush1.msra.mxu0 0.0
  %880 = vmatprep.subr.mxu0 0.0
  %881 = vmatpush1.msra.mxu0 0.0
  %882 = vmatprep.subr.mxu0 0.0
  %883 = vmatpush1.msra.mxu0 0.0
  %884 = vmatprep.subr.mxu0 0.0
  %885 = vmatpush1.msra.mxu0 0.0
  %886 = vmatprep.subr.mxu0 0.0
  %887 = vmatpush1.msra.mxu0 0.0
  %888 = vmatprep.subr.mxu0 0.0
  %889 = vmatpush1.msra.mxu0 0.0
  %890 = vmatprep.subr.mxu0 0.0
  %891 = vmatpush1.msra.mxu0 0.0
  %892 = vmatprep.subr.mxu0 0.0
  %893 = vmatpush1.msra.mxu0 0.0
  %894 = vmatprep.subr.mxu0 0.0
  %895 = vmatpush1.msra.mxu0 0.0
  %896 = vmatprep.subr.mxu0 0.0
  %897 = vmatpush1.msra.mxu0 0.0
  %898 = vmatprep.subr.mxu0 0.0
  %899 = vmatpush1.msra.mxu0 0.0
  %900 = vmatprep.subr.mxu0 0.0
  %901 = vmatpush1.msra.mxu0 0.0
  %902 = vmatprep.subr.mxu0 0.0
  %903 = vmatpush1.msra.mxu0 0.0
  %904 = vmatprep.subr.mxu0 0.0
  %905 = vmatpush1.msra.mxu0 0.0
  %906 = vmatprep.subr.mxu0 0.0
  %907 = vmatpush1.msra.mxu0 0.0
  %908 = vmatprep.subr.mxu0 0.0
  %909 = vmatpush1.msra.mxu0 0.0
  %910 = vmatprep.subr.mxu0 0.0
  %911 = vmatpush1.msra.mxu0 0.0
  %912 = vmatprep.mubr.f32.mxu0 0.0
  %913 = vmatmul.mubr.f32.gmra.mrb[0].mxu0 %v846
  %v914 = vpop.f32.mrb[0].mxu0
  %v915 = vadd.f32 %v117, %v914
  %v916 = vpop.f32.mrb[0].mxu0
  %917 = vdwg.mxu0
  %v918 = vadd.f32 %v770, %v842
  %v919 = vxor.u32 %v918, 2147483648
  %v920 = vmul.f32 %v919, 1.442695
  %v921 = vpow.pop %v920
  %v922 = vadd.f32 %v921, 1.0
  %v923 = vrcp.pop %v922
  %v924 = vmul.f32 1.0, %v923
  %v927 = vunpack.c.l.s4 1983009808
  %v928 = vunpack.c.0.s8 %v927
  %v929 = vlaneseq
  %v930 = vshrl.u32 %v929, 7
  %v931 = vsub.s32 %v928, %v930
  %v932 = vrot.slane %v842, %v931
  %933 = vrot.lane.b32.xlu0 %v932, 64
  %v934 = vpop.permute.xlu0 %933
  %v936 = vmul.f32 %v924, %v934
  %938 = vrot.lane.b32.xlu0 %v936, 64
  %v939 = vpop.permute.xlu0 %938
  %v941 = vadd.f32 %v770, %v939
  %v942 = vtanh.pop %v941
  %v943 = vsub.f32 1.0, %v924
  %945 = vrot.lane.b32.xlu0 %v942, 96
  %v946 = vpop.permute.xlu0 %945
  %v948 = vmul.f32 %v943, %v946
  %v949 = vmul.f32 %v924, %v707
  %v950 = vadd.f32 %v948, %v949
  %v953 = vunpack.c.l.s4 1983009808
  %v954 = vunpack.c.0.s8 %v953
  %v955 = vlaneseq
  %v956 = vshrl.u32 %v955, 7
  %v957 = vsub.s32 %v954, %v956
  %v958 = vrot.slane %v915, %v957
  %959 = vrot.lane.b32.xlu0 %v958, 96
  %v960 = vpop.permute.xlu0 %959
  %v962 = vadd.f32 %v772, %v960
  %v963 = vxor.u32 %v962, 2147483648
  %v964 = vmul.f32 %v963, 1.442695
  %v965 = vpow.pop %v964
  %v966 = vadd.f32 %v965, 1.0
  %v967 = vrcp.pop %v966
  %v968 = vmul.f32 1.0, %v967
  %v970 = vrot.slane %v772, 2
  %v972 = vadd.f32 %v970, %v960
  %v973 = vxor.u32 %v972, 2147483648
  %v974 = vmul.f32 %v973, 1.442695
  %v975 = vpow.pop %v974
  %v976 = vadd.f32 %v975, 1.0
  %v977 = vrcp.pop %v976
  %v978 = vmul.f32 1.0, %v977
  %979 = vrot.lane.b32.xlu0 %v958, 32
  %v980 = vpop.permute.xlu0 %979
  %v982 = vmul.f32 %v968, %v980
  %983 = vrot.lane.b32.xlu0 %v772, 96
  %v984 = vpop.permute.xlu0 %983
  %v985 = vrot.slane %v984, 2
  %988 = vrot.lane.b32.xlu0 %v982, 32
  %v989 = vpop.permute.xlu0 %988
  %v991 = vadd.f32 %v985, %v989
  %v992 = vtanh.pop %v991
  %v993 = vsub.f32 1.0, %v978
  %v994 = vmul.f32 %v993, %v992
  %v995 = vmul.f32 %v978, %v753
  %v996 = vadd.f32 %v994, %v995
  %v999 = vunpack.c.l.s4 1983009808
  %v1000 = vunpack.c.0.s8 %v999
  %v1001 = vlaneseq
  %v1002 = vshrl.u32 %v1001, 7
  %v1003 = vsub.s32 %v1000, %v1002
  %v1004 = vrot.slane %v950, %v1003
  %1005 = vrot.lane.b32.xlu0 %v1004, 96
  %v1006 = vpop.permute.xlu0 %1005
  %s1008 = scalar_lea.vmem %s3, 6
  %1009 = vst.msk [vmem:[%s1008] sm:$0x3] %vm279, %v1006
  %s1010 = scalar_lea.vmem %s4, 8
  %1011 = vst.msk [vmem:[%s1010] sm:$0x3] %vm279, %v996
  %v1012 = vld [vmem:[%s771] sm:$0xf]
  %v1013 = vld [vmem:[%s769] sm:$0xf]
  %v1014 = vsel %vm39, %v1006, 0
  %1016 = vmatprep.subr.mxu0 0.0
  %1017 = vmatpush1.msra.mxu0 %v18
  %1018 = vmatprep.subr.mxu0 0.0
  %1019 = vmatpush1.msra.mxu0 %v19
  %1020 = vmatprep.subr.mxu0 0.0
  %1021 = vmatpush1.msra.mxu0 %v20
  %1022 = vmatprep.subr.mxu0 0.0
  %1023 = vmatpush1.msra.mxu0 %v21
  %1024 = vmatprep.subr.mxu0 0.0
  %1025 = vmatpush1.msra.mxu0 0.0
  %1026 = vmatprep.subr.mxu0 0.0
  %1027 = vmatpush1.msra.mxu0 0.0
  %1028 = vmatprep.subr.mxu0 0.0
  %1029 = vmatpush1.msra.mxu0 0.0
  %1030 = vmatprep.subr.mxu0 0.0
  %1031 = vmatpush1.msra.mxu0 0.0
  %1032 = vmatprep.subr.mxu0 0.0
  %1033 = vmatpush1.msra.mxu0 0.0
  %1034 = vmatprep.subr.mxu0 0.0
  %1035 = vmatpush1.msra.mxu0 0.0
  %1036 = vmatprep.subr.mxu0 0.0
  %1037 = vmatpush1.msra.mxu0 0.0
  %1038 = vmatprep.subr.mxu0 0.0
  %1039 = vmatpush1.msra.mxu0 0.0
  %1040 = vmatprep.subr.mxu0 0.0
  %1041 = vmatpush1.msra.mxu0 0.0
  %1042 = vmatprep.subr.mxu0 0.0
  %1043 = vmatpush1.msra.mxu0 0.0
  %1044 = vmatprep.subr.mxu0 0.0
  %1045 = vmatpush1.msra.mxu0 0.0
  %1046 = vmatprep.subr.mxu0 0.0
  %1047 = vmatpush1.msra.mxu0 0.0
  %1048 = vmatprep.subr.mxu0 0.0
  %1049 = vmatpush1.msra.mxu0 0.0
  %1050 = vmatprep.subr.mxu0 0.0
  %1051 = vmatpush1.msra.mxu0 0.0
  %1052 = vmatprep.subr.mxu0 0.0
  %1053 = vmatpush1.msra.mxu0 0.0
  %1054 = vmatprep.subr.mxu0 0.0
  %1055 = vmatpush1.msra.mxu0 0.0
  %1056 = vmatprep.subr.mxu0 0.0
  %1057 = vmatpush1.msra.mxu0 0.0
  %1058 = vmatprep.subr.mxu0 0.0
  %1059 = vmatpush1.msra.mxu0 0.0
  %1060 = vmatprep.subr.mxu0 0.0
  %1061 = vmatpush1.msra.mxu0 0.0
  %1062 = vmatprep.subr.mxu0 0.0
  %1063 = vmatpush1.msra.mxu0 0.0
  %1064 = vmatprep.subr.mxu0 0.0
  %1065 = vmatpush1.msra.mxu0 0.0
  %1066 = vmatprep.subr.mxu0 0.0
  %1067 = vmatpush1.msra.mxu0 0.0
  %1068 = vmatprep.subr.mxu0 0.0
  %1069 = vmatpush1.msra.mxu0 0.0
  %1070 = vmatprep.subr.mxu0 0.0
  %1071 = vmatpush1.msra.mxu0 0.0
  %1072 = vmatprep.subr.mxu0 0.0
  %1073 = vmatpush1.msra.mxu0 0.0
  %1074 = vmatprep.subr.mxu0 0.0
  %1075 = vmatpush1.msra.mxu0 0.0
  %1076 = vmatprep.subr.mxu0 0.0
  %1077 = vmatpush1.msra.mxu0 0.0
  %1078 = vmatprep.subr.mxu0 0.0
  %1079 = vmatpush1.msra.mxu0 0.0
  %1080 = vmatprep.mubr.f32.mxu0 0.0
  %1081 = vmatmul.mubr.f32.gmra.mrb[0].mxu0 %v1014
  %v1082 = vpop.f32.mrb[0].mxu0
  %v1083 = vadd.f32 %v37, %v1082
  %v1084 = vpop.f32.mrb[0].mxu0
  %1085 = vdwg.mxu0
  %v1087 = vsel %vm39, %v996, 0
  %1089 = vmatprep.subr.mxu0 0.0
  %1090 = vmatpush1.msra.mxu0 %v23
  %1091 = vmatprep.subr.mxu0 0.0
  %1092 = vmatpush1.msra.mxu0 %v24
  %1093 = vmatprep.subr.mxu0 0.0
  %1094 = vmatpush1.msra.mxu0 %v25
  %1095 = vmatprep.subr.mxu0 0.0
  %1096 = vmatpush1.msra.mxu0 %v26
  %1097 = vmatprep.subr.mxu0 0.0
  %1098 = vmatpush1.msra.mxu0 0.0
  %1099 = vmatprep.subr.mxu0 0.0
  %1100 = vmatpush1.msra.mxu0 0.0
  %1101 = vmatprep.subr.mxu0 0.0
  %1102 = vmatpush1.msra.mxu0 0.0
  %1103 = vmatprep.subr.mxu0 0.0
  %1104 = vmatpush1.msra.mxu0 0.0
  %1105 = vmatprep.subr.mxu0 0.0
  %1106 = vmatpush1.msra.mxu0 0.0
  %1107 = vmatprep.subr.mxu0 0.0
  %1108 = vmatpush1.msra.mxu0 0.0
  %1109 = vmatprep.subr.mxu0 0.0
  %1110 = vmatpush1.msra.mxu0 0.0
  %1111 = vmatprep.subr.mxu0 0.0
  %1112 = vmatpush1.msra.mxu0 0.0
  %1113 = vmatprep.subr.mxu0 0.0
  %1114 = vmatpush1.msra.mxu0 0.0
  %1115 = vmatprep.subr.mxu0 0.0
  %1116 = vmatpush1.msra.mxu0 0.0
  %1117 = vmatprep.subr.mxu0 0.0
  %1118 = vmatpush1.msra.mxu0 0.0
  %1119 = vmatprep.subr.mxu0 0.0
  %1120 = vmatpush1.msra.mxu0 0.0
  %1121 = vmatprep.subr.mxu0 0.0
  %1122 = vmatpush1.msra.mxu0 0.0
  %1123 = vmatprep.subr.mxu0 0.0
  %1124 = vmatpush1.msra.mxu0 0.0
  %1125 = vmatprep.subr.mxu0 0.0
  %1126 = vmatpush1.msra.mxu0 0.0
  %1127 = vmatprep.subr.mxu0 0.0
  %1128 = vmatpush1.msra.mxu0 0.0
  %1129 = vmatprep.subr.mxu0 0.0
  %1130 = vmatpush1.msra.mxu0 0.0
  %1131 = vmatprep.subr.mxu0 0.0
  %1132 = vmatpush1.msra.mxu0 0.0
  %1133 = vmatprep.subr.mxu0 0.0
  %1134 = vmatpush1.msra.mxu0 0.0
  %1135 = vmatprep.subr.mxu0 0.0
  %1136 = vmatpush1.msra.mxu0 0.0
  %1137 = vmatprep.subr.mxu0 0.0
  %1138 = vmatpush1.msra.mxu0 0.0
  %1139 = vmatprep.subr.mxu0 0.0
  %1140 = vmatpush1.msra.mxu0 0.0
  %1141 = vmatprep.subr.mxu0 0.0
  %1142 = vmatpush1.msra.mxu0 0.0
  %1143 = vmatprep.subr.mxu0 0.0
  %1144 = vmatpush1.msra.mxu0 0.0
  %1145 = vmatprep.subr.mxu0 0.0
  %1146 = vmatpush1.msra.mxu0 0.0
  %1147 = vmatprep.subr.mxu0 0.0
  %1148 = vmatpush1.msra.mxu0 0.0
  %1149 = vmatprep.subr.mxu0 0.0
  %1150 = vmatpush1.msra.mxu0 0.0
  %1151 = vmatprep.subr.mxu0 0.0
  %1152 = vmatpush1.msra.mxu0 0.0
  %1153 = vmatprep.mubr.f32.mxu0 0.0
  %1154 = vmatmul.mubr.f32.gmra.mrb[0].mxu0 %v1087
  %v1155 = vpop.f32.mrb[0].mxu0
  %v1156 = vadd.f32 %v117, %v1155
  %v1157 = vpop.f32.mrb[0].mxu0
  %1158 = vdwg.mxu0
  %v1159 = vadd.f32 %v1012, %v1083
  %v1160 = vxor.u32 %v1159, 2147483648
  %v1161 = vmul.f32 %v1160, 1.442695
  %v1162 = vpow.pop %v1161
  %v1163 = vadd.f32 %v1162, 1.0
  %v1164 = vrcp.pop %v1163
  %v1165 = vmul.f32 1.0, %v1164
  %v1168 = vunpack.c.l.s4 1983009808
  %v1169 = vunpack.c.0.s8 %v1168
  %v1170 = vlaneseq
  %v1171 = vshrl.u32 %v1170, 7
  %v1172 = vsub.s32 %v1169, %v1171
  %v1173 = vrot.slane %v1083, %v1172
  %1174 = vrot.lane.b32.xlu0 %v1173, 64
  %v1175 = vpop.permute.xlu0 %1174
  %v1177 = vmul.f32 %v1165, %v1175
  %1179 = vrot.lane.b32.xlu0 %v1177, 64
  %v1180 = vpop.permute.xlu0 %1179
  %v1182 = vadd.f32 %v1012, %v1180
  %v1183 = vtanh.pop %v1182
  %v1184 = vsub.f32 1.0, %v1165
  %1186 = vrot.lane.b32.xlu0 %v1183, 96
  %v1187 = vpop.permute.xlu0 %1186
  %v1189 = vmul.f32 %v1184, %v1187
  %v1190 = vmul.f32 %v1165, %v950
  %v1191 = vadd.f32 %v1189, %v1190
  %v1194 = vunpack.c.l.s4 1983009808
  %v1195 = vunpack.c.0.s8 %v1194
  %v1196 = vlaneseq
  %v1197 = vshrl.u32 %v1196, 7
  %v1198 = vsub.s32 %v1195, %v1197
  %v1199 = vrot.slane %v1156, %v1198
  %1200 = vrot.lane.b32.xlu0 %v1199, 96
  %v1201 = vpop.permute.xlu0 %1200
  %v1203 = vadd.f32 %v1013, %v1201
  %v1204 = vxor.u32 %v1203, 2147483648
  %v1205 = vmul.f32 %v1204, 1.442695
  %v1206 = vpow.pop %v1205
  %v1207 = vadd.f32 %v1206, 1.0
  %v1208 = vrcp.pop %v1207
  %v1209 = vmul.f32 1.0, %v1208
  %v1211 = vrot.slane %v1013, 2
  %v1213 = vadd.f32 %v1211, %v1201
  %v1214 = vxor.u32 %v1213, 2147483648
  %v1215 = vmul.f32 %v1214, 1.442695
  %v1216 = vpow.pop %v1215
  %v1217 = vadd.f32 %v1216, 1.0
  %v1218 = vrcp.pop %v1217
  %v1219 = vmul.f32 1.0, %v1218
  %1220 = vrot.lane.b32.xlu0 %v1199, 32
  %v1221 = vpop.permute.xlu0 %1220
  %v1223 = vmul.f32 %v1209, %v1221
  %1224 = vrot.lane.b32.xlu0 %v1013, 96
  %v1225 = vpop.permute.xlu0 %1224
  %v1226 = vrot.slane %v1225, 2
  %1229 = vrot.lane.b32.xlu0 %v1223, 32
  %v1230 = vpop.permute.xlu0 %1229
  %v1232 = vadd.f32 %v1226, %v1230
  %v1233 = vtanh.pop %v1232
  %v1234 = vsub.f32 1.0, %v1219
  %v1235 = vmul.f32 %v1234, %v1233
  %v1236 = vmul.f32 %v1219, %v996
  %v1237 = vadd.f32 %v1235, %v1236
  %v1240 = vunpack.c.l.s4 1983009808
  %v1241 = vunpack.c.0.s8 %v1240
  %v1242 = vlaneseq
  %v1243 = vshrl.u32 %v1242, 7
  %v1244 = vsub.s32 %v1241, %v1243
  %v1245 = vrot.slane %v1191, %v1244
  %1246 = vrot.lane.b32.xlu0 %v1245, 96
  %v1247 = vpop.permute.xlu0 %1246
  %s1249 = scalar_lea.vmem %s3, 8
  %1250 = vst.msk [vmem:[%s1249] sm:$0x3] %vm279, %v1247
  %s1251 = scalar_lea.vmem %s4, 6
  %1252 = vst.msk [vmem:[%s1251] sm:$0x3] %vm279, %v1237
  %v1253 = vld [vmem:[%s528] sm:$0xf]
  %v1254 = vld [vmem:[%s526] sm:$0xf]
  %v1255 = vsel %vm39, %v1247, 0
  %1257 = vmatprep.subr.mxu0 0.0
  %1258 = vmatpush1.msra.mxu0 %v18
  %1259 = vmatprep.subr.mxu0 0.0
  %1260 = vmatpush1.msra.mxu0 %v19
  %1261 = vmatprep.subr.mxu0 0.0
  %1262 = vmatpush1.msra.mxu0 %v20
  %1263 = vmatprep.subr.mxu0 0.0
  %1264 = vmatpush1.msra.mxu0 %v21
  %1265 = vmatprep.subr.mxu0 0.0
  %1266 = vmatpush1.msra.mxu0 0.0
  %1267 = vmatprep.subr.mxu0 0.0
  %1268 = vmatpush1.msra.mxu0 0.0
  %1269 = vmatprep.subr.mxu0 0.0
  %1270 = vmatpush1.msra.mxu0 0.0
  %1271 = vmatprep.subr.mxu0 0.0
  %1272 = vmatpush1.msra.mxu0 0.0
  %1273 = vmatprep.subr.mxu0 0.0
  %1274 = vmatpush1.msra.mxu0 0.0
  %1275 = vmatprep.subr.mxu0 0.0
  %1276 = vmatpush1.msra.mxu0 0.0
  %1277 = vmatprep.subr.mxu0 0.0
  %1278 = vmatpush1.msra.mxu0 0.0
  %1279 = vmatprep.subr.mxu0 0.0
  %1280 = vmatpush1.msra.mxu0 0.0
  %1281 = vmatprep.subr.mxu0 0.0
  %1282 = vmatpush1.msra.mxu0 0.0
  %1283 = vmatprep.subr.mxu0 0.0
  %1284 = vmatpush1.msra.mxu0 0.0
  %1285 = vmatprep.subr.mxu0 0.0
  %1286 = vmatpush1.msra.mxu0 0.0
  %1287 = vmatprep.subr.mxu0 0.0
  %1288 = vmatpush1.msra.mxu0 0.0
  %1289 = vmatprep.subr.mxu0 0.0
  %1290 = vmatpush1.msra.mxu0 0.0
  %1291 = vmatprep.subr.mxu0 0.0
  %1292 = vmatpush1.msra.mxu0 0.0
  %1293 = vmatprep.subr.mxu0 0.0
  %1294 = vmatpush1.msra.mxu0 0.0
  %1295 = vmatprep.subr.mxu0 0.0
  %1296 = vmatpush1.msra.mxu0 0.0
  %1297 = vmatprep.subr.mxu0 0.0
  %1298 = vmatpush1.msra.mxu0 0.0
  %1299 = vmatprep.subr.mxu0 0.0
  %1300 = vmatpush1.msra.mxu0 0.0
  %1301 = vmatprep.subr.mxu0 0.0
  %1302 = vmatpush1.msra.mxu0 0.0
  %1303 = vmatprep.subr.mxu0 0.0
  %1304 = vmatpush1.msra.mxu0 0.0
  %1305 = vmatprep.subr.mxu0 0.0
  %1306 = vmatpush1.msra.mxu0 0.0
  %1307 = vmatprep.subr.mxu0 0.0
  %1308 = vmatpush1.msra.mxu0 0.0
  %1309 = vmatprep.subr.mxu0 0.0
  %1310 = vmatpush1.msra.mxu0 0.0
  %1311 = vmatprep.subr.mxu0 0.0
  %1312 = vmatpush1.msra.mxu0 0.0
  %1313 = vmatprep.subr.mxu0 0.0
  %1314 = vmatpush1.msra.mxu0 0.0
  %1315 = vmatprep.subr.mxu0 0.0
  %1316 = vmatpush1.msra.mxu0 0.0
  %1317 = vmatprep.subr.mxu0 0.0
  %1318 = vmatpush1.msra.mxu0 0.0
  %1319 = vmatprep.subr.mxu0 0.0
  %1320 = vmatpush1.msra.mxu0 0.0
  %1321 = vmatprep.mubr.f32.mxu0 0.0
  %1322 = vmatmul.mubr.f32.gmra.mrb[0].mxu0 %v1255
  %v1323 = vpop.f32.mrb[0].mxu0
  %v1324 = vadd.f32 %v37, %v1323
  %v1325 = vpop.f32.mrb[0].mxu0
  %1326 = vdwg.mxu0
  %v1328 = vsel %vm39, %v1237, 0
  %1330 = vmatprep.subr.mxu0 0.0
  %1331 = vmatpush1.msra.mxu0 %v23
  %1332 = vmatprep.subr.mxu0 0.0
  %1333 = vmatpush1.msra.mxu0 %v24
  %1334 = vmatprep.subr.mxu0 0.0
  %1335 = vmatpush1.msra.mxu0 %v25
  %1336 = vmatprep.subr.mxu0 0.0
  %1337 = vmatpush1.msra.mxu0 %v26
  %1338 = vmatprep.subr.mxu0 0.0
  %1339 = vmatpush1.msra.mxu0 0.0
  %1340 = vmatprep.subr.mxu0 0.0
  %1341 = vmatpush1.msra.mxu0 0.0
  %1342 = vmatprep.subr.mxu0 0.0
  %1343 = vmatpush1.msra.mxu0 0.0
  %1344 = vmatprep.subr.mxu0 0.0
  %1345 = vmatpush1.msra.mxu0 0.0
  %1346 = vmatprep.subr.mxu0 0.0
  %1347 = vmatpush1.msra.mxu0 0.0
  %1348 = vmatprep.subr.mxu0 0.0
  %1349 = vmatpush1.msra.mxu0 0.0
  %1350 = vmatprep.subr.mxu0 0.0
  %1351 = vmatpush1.msra.mxu0 0.0
  %1352 = vmatprep.subr.mxu0 0.0
  %1353 = vmatpush1.msra.mxu0 0.0
  %1354 = vmatprep.subr.mxu0 0.0
  %1355 = vmatpush1.msra.mxu0 0.0
  %1356 = vmatprep.subr.mxu0 0.0
  %1357 = vmatpush1.msra.mxu0 0.0
  %1358 = vmatprep.subr.mxu0 0.0
  %1359 = vmatpush1.msra.mxu0 0.0
  %1360 = vmatprep.subr.mxu0 0.0
  %1361 = vmatpush1.msra.mxu0 0.0
  %1362 = vmatprep.subr.mxu0 0.0
  %1363 = vmatpush1.msra.mxu0 0.0
  %1364 = vmatprep.subr.mxu0 0.0
  %1365 = vmatpush1.msra.mxu0 0.0
  %1366 = vmatprep.subr.mxu0 0.0
  %1367 = vmatpush1.msra.mxu0 0.0
  %1368 = vmatprep.subr.mxu0 0.0
  %1369 = vmatpush1.msra.mxu0 0.0
  %1370 = vmatprep.subr.mxu0 0.0
  %1371 = vmatpush1.msra.mxu0 0.0
  %1372 = vmatprep.subr.mxu0 0.0
  %1373 = vmatpush1.msra.mxu0 0.0
  %1374 = vmatprep.subr.mxu0 0.0
  %1375 = vmatpush1.msra.mxu0 0.0
  %1376 = vmatprep.subr.mxu0 0.0
  %1377 = vmatpush1.msra.mxu0 0.0
  %1378 = vmatprep.subr.mxu0 0.0
  %1379 = vmatpush1.msra.mxu0 0.0
  %1380 = vmatprep.subr.mxu0 0.0
  %1381 = vmatpush1.msra.mxu0 0.0
  %1382 = vmatprep.subr.mxu0 0.0
  %1383 = vmatpush1.msra.mxu0 0.0
  %1384 = vmatprep.subr.mxu0 0.0
  %1385 = vmatpush1.msra.mxu0 0.0
  %1386 = vmatprep.subr.mxu0 0.0
  %1387 = vmatpush1.msra.mxu0 0.0
  %1388 = vmatprep.subr.mxu0 0.0
  %1389 = vmatpush1.msra.mxu0 0.0
  %1390 = vmatprep.subr.mxu0 0.0
  %1391 = vmatpush1.msra.mxu0 0.0
  %1392 = vmatprep.subr.mxu0 0.0
  %1393 = vmatpush1.msra.mxu0 0.0
  %1394 = vmatprep.mubr.f32.mxu0 0.0
  %1395 = vmatmul.mubr.f32.gmra.mrb[0].mxu0 %v1328
  %v1396 = vpop.f32.mrb[0].mxu0
  %v1397 = vadd.f32 %v117, %v1396
  %v1398 = vpop.f32.mrb[0].mxu0
  %1399 = vdwg.mxu0
  %v1400 = vadd.f32 %v1253, %v1324
  %v1401 = vxor.u32 %v1400, 2147483648
  %v1402 = vmul.f32 %v1401, 1.442695
  %v1403 = vpow.pop %v1402
  %v1404 = vadd.f32 %v1403, 1.0
  %v1405 = vrcp.pop %v1404
  %v1406 = vmul.f32 1.0, %v1405
  %v1409 = vunpack.c.l.s4 1983009808
  %v1410 = vunpack.c.0.s8 %v1409
  %v1411 = vlaneseq
  %v1412 = vshrl.u32 %v1411, 7
  %v1413 = vsub.s32 %v1410, %v1412
  %v1414 = vrot.slane %v1324, %v1413
  %1415 = vrot.lane.b32.xlu0 %v1414, 64
  %v1416 = vpop.permute.xlu0 %1415
  %v1418 = vmul.f32 %v1406, %v1416
  %1420 = vrot.lane.b32.xlu0 %v1418, 64
  %v1421 = vpop.permute.xlu0 %1420
  %v1423 = vadd.f32 %v1253, %v1421
  %v1424 = vtanh.pop %v1423
  %v1425 = vsub.f32 1.0, %v1406
  %1427 = vrot.lane.b32.xlu0 %v1424, 96
  %v1428 = vpop.permute.xlu0 %1427
  %v1430 = vmul.f32 %v1425, %v1428
  %v1431 = vmul.f32 %v1406, %v1191
  %v1432 = vadd.f32 %v1430, %v1431
  %v1435 = vunpack.c.l.s4 1983009808
  %v1436 = vunpack.c.0.s8 %v1435
  %v1437 = vlaneseq
  %v1438 = vshrl.u32 %v1437, 7
  %v1439 = vsub.s32 %v1436, %v1438
  %v1440 = vrot.slane %v1397, %v1439
  %1441 = vrot.lane.b32.xlu0 %v1440, 96
  %v1442 = vpop.permute.xlu0 %1441
  %v1444 = vadd.f32 %v1254, %v1442
  %v1445 = vxor.u32 %v1444, 2147483648
  %v1446 = vmul.f32 %v1445, 1.442695
  %v1447 = vpow.pop %v1446
  %v1448 = vadd.f32 %v1447, 1.0
  %v1449 = vrcp.pop %v1448
  %v1450 = vmul.f32 1.0, %v1449
  %v1452 = vrot.slane %v1254, 2
  %v1454 = vadd.f32 %v1452, %v1442
  %v1455 = vxor.u32 %v1454, 2147483648
  %v1456 = vmul.f32 %v1455, 1.442695
  %v1457 = vpow.pop %v1456
  %v1458 = vadd.f32 %v1457, 1.0
  %v1459 = vrcp.pop %v1458
  %v1460 = vmul.f32 1.0, %v1459
  %1461 = vrot.lane.b32.xlu0 %v1440, 32
  %v1462 = vpop.permute.xlu0 %1461
  %v1464 = vmul.f32 %v1450, %v1462
  %1465 = vrot.lane.b32.xlu0 %v1254, 96
  %v1466 = vpop.permute.xlu0 %1465
  %v1467 = vrot.slane %v1466, 2
  %1470 = vrot.lane.b32.xlu0 %v1464, 32
  %v1471 = vpop.permute.xlu0 %1470
  %v1473 = vadd.f32 %v1467, %v1471
  %v1474 = vtanh.pop %v1473
  %v1475 = vsub.f32 1.0, %v1460
  %v1476 = vmul.f32 %v1475, %v1474
  %v1477 = vmul.f32 %v1460, %v1237
  %v1478 = vadd.f32 %v1476, %v1477
  %v1481 = vunpack.c.l.s4 1983009808
  %v1482 = vunpack.c.0.s8 %v1481
  %v1483 = vlaneseq
  %v1484 = vshrl.u32 %v1483, 7
  %v1485 = vsub.s32 %v1482, %v1484
  %v1486 = vrot.slane %v1432, %v1485
  %1487 = vrot.lane.b32.xlu0 %v1486, 96
  %v1488 = vpop.permute.xlu0 %1487
  %s1490 = scalar_lea.vmem %s3, 10
  %1491 = vst.msk [vmem:[%s1490] sm:$0x3] %vm279, %v1488
  %s1492 = scalar_lea.vmem %s4, 4
  %1493 = vst.msk [vmem:[%s1492] sm:$0x3] %vm279, %v1478
  %v1494 = vld [vmem:[%s285] sm:$0xf]
  %v1495 = vld [vmem:[%s283] sm:$0xf]
  %v1496 = vsel %vm39, %v1488, 0
  %1498 = vmatprep.subr.mxu0 0.0
  %1499 = vmatpush1.msra.mxu0 %v18
  %1500 = vmatprep.subr.mxu0 0.0
  %1501 = vmatpush1.msra.mxu0 %v19
  %1502 = vmatprep.subr.mxu0 0.0
  %1503 = vmatpush1.msra.mxu0 %v20
  %1504 = vmatprep.subr.mxu0 0.0
  %1505 = vmatpush1.msra.mxu0 %v21
  %1506 = vmatprep.subr.mxu0 0.0
  %1507 = vmatpush1.msra.mxu0 0.0
  %1508 = vmatprep.subr.mxu0 0.0
  %1509 = vmatpush1.msra.mxu0 0.0
  %1510 = vmatprep.subr.mxu0 0.0
  %1511 = vmatpush1.msra.mxu0 0.0
  %1512 = vmatprep.subr.mxu0 0.0
  %1513 = vmatpush1.msra.mxu0 0.0
  %1514 = vmatprep.subr.mxu0 0.0
  %1515 = vmatpush1.msra.mxu0 0.0
  %1516 = vmatprep.subr.mxu0 0.0
  %1517 = vmatpush1.msra.mxu0 0.0
  %1518 = vmatprep.subr.mxu0 0.0
  %1519 = vmatpush1.msra.mxu0 0.0
  %1520 = vmatprep.subr.mxu0 0.0
  %1521 = vmatpush1.msra.mxu0 0.0
  %1522 = vmatprep.subr.mxu0 0.0
  %1523 = vmatpush1.msra.mxu0 0.0
  %1524 = vmatprep.subr.mxu0 0.0
  %1525 = vmatpush1.msra.mxu0 0.0
  %1526 = vmatprep.subr.mxu0 0.0
  %1527 = vmatpush1.msra.mxu0 0.0
  %1528 = vmatprep.subr.mxu0 0.0
  %1529 = vmatpush1.msra.mxu0 0.0
  %1530 = vmatprep.subr.mxu0 0.0
  %1531 = vmatpush1.msra.mxu0 0.0
  %1532 = vmatprep.subr.mxu0 0.0
  %1533 = vmatpush1.msra.mxu0 0.0
  %1534 = vmatprep.subr.mxu0 0.0
  %1535 = vmatpush1.msra.mxu0 0.0
  %1536 = vmatprep.subr.mxu0 0.0
  %1537 = vmatpush1.msra.mxu0 0.0
  %1538 = vmatprep.subr.mxu0 0.0
  %1539 = vmatpush1.msra.mxu0 0.0
  %1540 = vmatprep.subr.mxu0 0.0
  %1541 = vmatpush1.msra.mxu0 0.0
  %1542 = vmatprep.subr.mxu0 0.0
  %1543 = vmatpush1.msra.mxu0 0.0
  %1544 = vmatprep.subr.mxu0 0.0
  %1545 = vmatpush1.msra.mxu0 0.0
  %1546 = vmatprep.subr.mxu0 0.0
  %1547 = vmatpush1.msra.mxu0 0.0
  %1548 = vmatprep.subr.mxu0 0.0
  %1549 = vmatpush1.msra.mxu0 0.0
  %1550 = vmatprep.subr.mxu0 0.0
  %1551 = vmatpush1.msra.mxu0 0.0
  %1552 = vmatprep.subr.mxu0 0.0
  %1553 = vmatpush1.msra.mxu0 0.0
  %1554 = vmatprep.subr.mxu0 0.0
  %1555 = vmatpush1.msra.mxu0 0.0
  %1556 = vmatprep.subr.mxu0 0.0
  %1557 = vmatpush1.msra.mxu0 0.0
  %1558 = vmatprep.subr.mxu0 0.0
  %1559 = vmatpush1.msra.mxu0 0.0
  %1560 = vmatprep.subr.mxu0 0.0
  %1561 = vmatpush1.msra.mxu0 0.0
  %1562 = vmatprep.mubr.f32.mxu0 0.0
  %1563 = vmatmul.mubr.f32.gmra.mrb[0].mxu0 %v1496
  %v1564 = vpop.f32.mrb[0].mxu0
  %v1565 = vadd.f32 %v37, %v1564
  %v1566 = vpop.f32.mrb[0].mxu0
  %1567 = vdwg.mxu0
  %v1569 = vsel %vm39, %v1478, 0
  %1571 = vmatprep.subr.mxu0 0.0
  %1572 = vmatpush1.msra.mxu0 %v23
  %1573 = vmatprep.subr.mxu0 0.0
  %1574 = vmatpush1.msra.mxu0 %v24
  %1575 = vmatprep.subr.mxu0 0.0
  %1576 = vmatpush1.msra.mxu0 %v25
  %1577 = vmatprep.subr.mxu0 0.0
  %1578 = vmatpush1.msra.mxu0 %v26
  %1579 = vmatprep.subr.mxu0 0.0
  %1580 = vmatpush1.msra.mxu0 0.0
  %1581 = vmatprep.subr.mxu0 0.0
  %1582 = vmatpush1.msra.mxu0 0.0
  %1583 = vmatprep.subr.mxu0 0.0
  %1584 = vmatpush1.msra.mxu0 0.0
  %1585 = vmatprep.subr.mxu0 0.0
  %1586 = vmatpush1.msra.mxu0 0.0
  %1587 = vmatprep.subr.mxu0 0.0
  %1588 = vmatpush1.msra.mxu0 0.0
  %1589 = vmatprep.subr.mxu0 0.0
  %1590 = vmatpush1.msra.mxu0 0.0
  %1591 = vmatprep.subr.mxu0 0.0
  %1592 = vmatpush1.msra.mxu0 0.0
  %1593 = vmatprep.subr.mxu0 0.0
  %1594 = vmatpush1.msra.mxu0 0.0
  %1595 = vmatprep.subr.mxu0 0.0
  %1596 = vmatpush1.msra.mxu0 0.0
  %1597 = vmatprep.subr.mxu0 0.0
  %1598 = vmatpush1.msra.mxu0 0.0
  %1599 = vmatprep.subr.mxu0 0.0
  %1600 = vmatpush1.msra.mxu0 0.0
  %1601 = vmatprep.subr.mxu0 0.0
  %1602 = vmatpush1.msra.mxu0 0.0
  %1603 = vmatprep.subr.mxu0 0.0
  %1604 = vmatpush1.msra.mxu0 0.0
  %1605 = vmatprep.subr.mxu0 0.0
  %1606 = vmatpush1.msra.mxu0 0.0
  %1607 = vmatprep.subr.mxu0 0.0
  %1608 = vmatpush1.msra.mxu0 0.0
  %1609 = vmatprep.subr.mxu0 0.0
  %1610 = vmatpush1.msra.mxu0 0.0
  %1611 = vmatprep.subr.mxu0 0.0
  %1612 = vmatpush1.msra.mxu0 0.0
  %1613 = vmatprep.subr.mxu0 0.0
  %1614 = vmatpush1.msra.mxu0 0.0
  %1615 = vmatprep.subr.mxu0 0.0
  %1616 = vmatpush1.msra.mxu0 0.0
  %1617 = vmatprep.subr.mxu0 0.0
  %1618 = vmatpush1.msra.mxu0 0.0
  %1619 = vmatprep.subr.mxu0 0.0
  %1620 = vmatpush1.msra.mxu0 0.0
  %1621 = vmatprep.subr.mxu0 0.0
  %1622 = vmatpush1.msra.mxu0 0.0
  %1623 = vmatprep.subr.mxu0 0.0
  %1624 = vmatpush1.msra.mxu0 0.0
  %1625 = vmatprep.subr.mxu0 0.0
  %1626 = vmatpush1.msra.mxu0 0.0
  %1627 = vmatprep.subr.mxu0 0.0
  %1628 = vmatpush1.msra.mxu0 0.0
  %1629 = vmatprep.subr.mxu0 0.0
  %1630 = vmatpush1.msra.mxu0 0.0
  %1631 = vmatprep.subr.mxu0 0.0
  %1632 = vmatpush1.msra.mxu0 0.0
  %1633 = vmatprep.subr.mxu0 0.0
  %1634 = vmatpush1.msra.mxu0 0.0
  %1635 = vmatprep.mubr.f32.mxu0 0.0
  %1636 = vmatmul.mubr.f32.gmra.mrb[0].mxu0 %v1569
  %v1637 = vpop.f32.mrb[0].mxu0
  %v1638 = vadd.f32 %v117, %v1637
  %v1639 = vpop.f32.mrb[0].mxu0
  %1640 = vdwg.mxu0
  %v1641 = vadd.f32 %v1494, %v1565
  %v1642 = vxor.u32 %v1641, 2147483648
  %v1643 = vmul.f32 %v1642, 1.442695
  %v1644 = vpow.pop %v1643
  %v1645 = vadd.f32 %v1644, 1.0
  %v1646 = vrcp.pop %v1645
  %v1647 = vmul.f32 1.0, %v1646
  %v1650 = vunpack.c.l.s4 1983009808
  %v1651 = vunpack.c.0.s8 %v1650
  %v1652 = vlaneseq
  %v1653 = vshrl.u32 %v1652, 7
  %v1654 = vsub.s32 %v1651, %v1653
  %v1655 = vrot.slane %v1565, %v1654
  %1656 = vrot.lane.b32.xlu0 %v1655, 64
  %v1657 = vpop.permute.xlu0 %1656
  %v1659 = vmul.f32 %v1647, %v1657
  %1661 = vrot.lane.b32.xlu0 %v1659, 64
  %v1662 = vpop.permute.xlu0 %1661
  %v1664 = vadd.f32 %v1494, %v1662
  %v1665 = vtanh.pop %v1664
  %v1666 = vsub.f32 1.0, %v1647
  %1668 = vrot.lane.b32.xlu0 %v1665, 96
  %v1669 = vpop.permute.xlu0 %1668
  %v1671 = vmul.f32 %v1666, %v1669
  %v1672 = vmul.f32 %v1647, %v1432
  %v1673 = vadd.f32 %v1671, %v1672
  %v1676 = vunpack.c.l.s4 1983009808
  %v1677 = vunpack.c.0.s8 %v1676
  %v1678 = vlaneseq
  %v1679 = vshrl.u32 %v1678, 7
  %v1680 = vsub.s32 %v1677, %v1679
  %v1681 = vrot.slane %v1638, %v1680
  %1682 = vrot.lane.b32.xlu0 %v1681, 96
  %v1683 = vpop.permute.xlu0 %1682
  %v1685 = vadd.f32 %v1495, %v1683
  %v1686 = vxor.u32 %v1685, 2147483648
  %v1687 = vmul.f32 %v1686, 1.442695
  %v1688 = vpow.pop %v1687
  %v1689 = vadd.f32 %v1688, 1.0
  %v1690 = vrcp.pop %v1689
  %v1691 = vmul.f32 1.0, %v1690
  %v1693 = vrot.slane %v1495, 2
  %v1695 = vadd.f32 %v1693, %v1683
  %v1696 = vxor.u32 %v1695, 2147483648
  %v1697 = vmul.f32 %v1696, 1.442695
  %v1698 = vpow.pop %v1697
  %v1699 = vadd.f32 %v1698, 1.0
  %v1700 = vrcp.pop %v1699
  %v1701 = vmul.f32 1.0, %v1700
  %1702 = vrot.lane.b32.xlu0 %v1681, 32
  %v1703 = vpop.permute.xlu0 %1702
  %v1705 = vmul.f32 %v1691, %v1703
  %1706 = vrot.lane.b32.xlu0 %v1495, 96
  %v1707 = vpop.permute.xlu0 %1706
  %v1708 = vrot.slane %v1707, 2
  %1711 = vrot.lane.b32.xlu0 %v1705, 32
  %v1712 = vpop.permute.xlu0 %1711
  %v1714 = vadd.f32 %v1708, %v1712
  %v1715 = vtanh.pop %v1714
  %v1716 = vsub.f32 1.0, %v1701
  %v1717 = vmul.f32 %v1716, %v1715
  %v1718 = vmul.f32 %v1701, %v1478
  %v1719 = vadd.f32 %v1717, %v1718
  %v1722 = vunpack.c.l.s4 1983009808
  %v1723 = vunpack.c.0.s8 %v1722
  %v1724 = vlaneseq
  %v1725 = vshrl.u32 %v1724, 7
  %v1726 = vsub.s32 %v1723, %v1725
  %v1727 = vrot.slane %v1673, %v1726
  %1728 = vrot.lane.b32.xlu0 %v1727, 96
  %v1729 = vpop.permute.xlu0 %1728
  %s1731 = scalar_lea.vmem %s3, 12
  %1732 = vst.msk [vmem:[%s1731] sm:$0x3] %vm279, %v1729
  %s1733 = scalar_lea.vmem %s4, 2
  %1734 = vst.msk [vmem:[%s1733] sm:$0x3] %vm279, %v1719
  %v1735 = vld [vmem:[%s31] sm:$0xf]
  %v1736 = vld [vmem:[%s0] sm:$0xf]
  %v1737 = vsel %vm39, %v1729, 0
  %1739 = vmatprep.subr.mxu0 0.0
  %1740 = vmatpush1.msra.mxu0 %v18
  %1741 = vmatprep.subr.mxu0 0.0
  %1742 = vmatpush1.msra.mxu0 %v19
  %1743 = vmatprep.subr.mxu0 0.0
  %1744 = vmatpush1.msra.mxu0 %v20
  %1745 = vmatprep.subr.mxu0 0.0
  %1746 = vmatpush1.msra.mxu0 %v21
  %1747 = vmatprep.subr.mxu0 0.0
  %1748 = vmatpush1.msra.mxu0 0.0
  %1749 = vmatprep.subr.mxu0 0.0
  %1750 = vmatpush1.msra.mxu0 0.0
  %1751 = vmatprep.subr.mxu0 0.0
  %1752 = vmatpush1.msra.mxu0 0.0
  %1753 = vmatprep.subr.mxu0 0.0
  %1754 = vmatpush1.msra.mxu0 0.0
  %1755 = vmatprep.subr.mxu0 0.0
  %1756 = vmatpush1.msra.mxu0 0.0
  %1757 = vmatprep.subr.mxu0 0.0
  %1758 = vmatpush1.msra.mxu0 0.0
  %1759 = vmatprep.subr.mxu0 0.0
  %1760 = vmatpush1.msra.mxu0 0.0
  %1761 = vmatprep.subr.mxu0 0.0
  %1762 = vmatpush1.msra.mxu0 0.0
  %1763 = vmatprep.subr.mxu0 0.0
  %1764 = vmatpush1.msra.mxu0 0.0
  %1765 = vmatprep.subr.mxu0 0.0
  %1766 = vmatpush1.msra.mxu0 0.0
  %1767 = vmatprep.subr.mxu0 0.0
  %1768 = vmatpush1.msra.mxu0 0.0
  %1769 = vmatprep.subr.mxu0 0.0
  %1770 = vmatpush1.msra.mxu0 0.0
  %1771 = vmatprep.subr.mxu0 0.0
  %1772 = vmatpush1.msra.mxu0 0.0
  %1773 = vmatprep.subr.mxu0 0.0
  %1774 = vmatpush1.msra.mxu0 0.0
  %1775 = vmatprep.subr.mxu0 0.0
  %1776 = vmatpush1.msra.mxu0 0.0
  %1777 = vmatprep.subr.mxu0 0.0
  %1778 = vmatpush1.msra.mxu0 0.0
  %1779 = vmatprep.subr.mxu0 0.0
  %1780 = vmatpush1.msra.mxu0 0.0
  %1781 = vmatprep.subr.mxu0 0.0
  %1782 = vmatpush1.msra.mxu0 0.0
  %1783 = vmatprep.subr.mxu0 0.0
  %1784 = vmatpush1.msra.mxu0 0.0
  %1785 = vmatprep.subr.mxu0 0.0
  %1786 = vmatpush1.msra.mxu0 0.0
  %1787 = vmatprep.subr.mxu0 0.0
  %1788 = vmatpush1.msra.mxu0 0.0
  %1789 = vmatprep.subr.mxu0 0.0
  %1790 = vmatpush1.msra.mxu0 0.0
  %1791 = vmatprep.subr.mxu0 0.0
  %1792 = vmatpush1.msra.mxu0 0.0
  %1793 = vmatprep.subr.mxu0 0.0
  %1794 = vmatpush1.msra.mxu0 0.0
  %1795 = vmatprep.subr.mxu0 0.0
  %1796 = vmatpush1.msra.mxu0 0.0
  %1797 = vmatprep.subr.mxu0 0.0
  %1798 = vmatpush1.msra.mxu0 0.0
  %1799 = vmatprep.subr.mxu0 0.0
  %1800 = vmatpush1.msra.mxu0 0.0
  %1801 = vmatprep.subr.mxu0 0.0
  %1802 = vmatpush1.msra.mxu0 0.0
  %1803 = vmatprep.mubr.f32.mxu0 0.0
  %1804 = vmatmul.mubr.f32.gmra.mrb[0].mxu0 %v1737
  %v1805 = vpop.f32.mrb[0].mxu0
  %v1806 = vadd.f32 %v37, %v1805
  %v1807 = vpop.f32.mrb[0].mxu0
  %1808 = vdwg.mxu0
  %v1810 = vsel %vm39, %v1719, 0
  %1812 = vmatprep.subr.mxu0 0.0
  %1813 = vmatpush1.msra.mxu0 %v23
  %1814 = vmatprep.subr.mxu0 0.0
  %1815 = vmatpush1.msra.mxu0 %v24
  %1816 = vmatprep.subr.mxu0 0.0
  %1817 = vmatpush1.msra.mxu0 %v25
  %1818 = vmatprep.subr.mxu0 0.0
  %1819 = vmatpush1.msra.mxu0 %v26
  %1820 = vmatprep.subr.mxu0 0.0
  %1821 = vmatpush1.msra.mxu0 0.0
  %1822 = vmatprep.subr.mxu0 0.0
  %1823 = vmatpush1.msra.mxu0 0.0
  %1824 = vmatprep.subr.mxu0 0.0
  %1825 = vmatpush1.msra.mxu0 0.0
  %1826 = vmatprep.subr.mxu0 0.0
  %1827 = vmatpush1.msra.mxu0 0.0
  %1828 = vmatprep.subr.mxu0 0.0
  %1829 = vmatpush1.msra.mxu0 0.0
  %1830 = vmatprep.subr.mxu0 0.0
  %1831 = vmatpush1.msra.mxu0 0.0
  %1832 = vmatprep.subr.mxu0 0.0
  %1833 = vmatpush1.msra.mxu0 0.0
  %1834 = vmatprep.subr.mxu0 0.0
  %1835 = vmatpush1.msra.mxu0 0.0
  %1836 = vmatprep.subr.mxu0 0.0
  %1837 = vmatpush1.msra.mxu0 0.0
  %1838 = vmatprep.subr.mxu0 0.0
  %1839 = vmatpush1.msra.mxu0 0.0
  %1840 = vmatprep.subr.mxu0 0.0
  %1841 = vmatpush1.msra.mxu0 0.0
  %1842 = vmatprep.subr.mxu0 0.0
  %1843 = vmatpush1.msra.mxu0 0.0
  %1844 = vmatprep.subr.mxu0 0.0
  %1845 = vmatpush1.msra.mxu0 0.0
  %1846 = vmatprep.subr.mxu0 0.0
  %1847 = vmatpush1.msra.mxu0 0.0
  %1848 = vmatprep.subr.mxu0 0.0
  %1849 = vmatpush1.msra.mxu0 0.0
  %1850 = vmatprep.subr.mxu0 0.0
  %1851 = vmatpush1.msra.mxu0 0.0
  %1852 = vmatprep.subr.mxu0 0.0
  %1853 = vmatpush1.msra.mxu0 0.0
  %1854 = vmatprep.subr.mxu0 0.0
  %1855 = vmatpush1.msra.mxu0 0.0
  %1856 = vmatprep.subr.mxu0 0.0
  %1857 = vmatpush1.msra.mxu0 0.0
  %1858 = vmatprep.subr.mxu0 0.0
  %1859 = vmatpush1.msra.mxu0 0.0
  %1860 = vmatprep.subr.mxu0 0.0
  %1861 = vmatpush1.msra.mxu0 0.0
  %1862 = vmatprep.subr.mxu0 0.0
  %1863 = vmatpush1.msra.mxu0 0.0
  %1864 = vmatprep.subr.mxu0 0.0
  %1865 = vmatpush1.msra.mxu0 0.0
  %1866 = vmatprep.subr.mxu0 0.0
  %1867 = vmatpush1.msra.mxu0 0.0
  %1868 = vmatprep.subr.mxu0 0.0
  %1869 = vmatpush1.msra.mxu0 0.0
  %1870 = vmatprep.subr.mxu0 0.0
  %1871 = vmatpush1.msra.mxu0 0.0
  %1872 = vmatprep.subr.mxu0 0.0
  %1873 = vmatpush1.msra.mxu0 0.0
  %1874 = vmatprep.subr.mxu0 0.0
  %1875 = vmatpush1.msra.mxu0 0.0
  %1876 = vmatprep.mubr.f32.mxu0 0.0
  %1877 = vmatmul.mubr.f32.gmra.mrb[0].mxu0 %v1810
  %v1878 = vpop.f32.mrb[0].mxu0
  %v1879 = vadd.f32 %v117, %v1878
  %v1880 = vpop.f32.mrb[0].mxu0
  %1881 = vdwg.mxu0
  %v1882 = vadd.f32 %v1735, %v1806
  %v1883 = vxor.u32 %v1882, 2147483648
  %v1884 = vmul.f32 %v1883, 1.442695
  %v1885 = vpow.pop %v1884
  %v1886 = vadd.f32 %v1885, 1.0
  %v1887 = vrcp.pop %v1886
  %v1888 = vmul.f32 1.0, %v1887
  %v1891 = vunpack.c.l.s4 1983009808
  %v1892 = vunpack.c.0.s8 %v1891
  %v1893 = vlaneseq
  %v1894 = vshrl.u32 %v1893, 7
  %v1895 = vsub.s32 %v1892, %v1894
  %v1896 = vrot.slane %v1806, %v1895
  %1897 = vrot.lane.b32.xlu0 %v1896, 64
  %v1898 = vpop.permute.xlu0 %1897
  %v1900 = vmul.f32 %v1888, %v1898
  %1902 = vrot.lane.b32.xlu0 %v1900, 64
  %v1903 = vpop.permute.xlu0 %1902
  %v1905 = vadd.f32 %v1735, %v1903
  %v1906 = vtanh.pop %v1905
  %v1907 = vsub.f32 1.0, %v1888
  %1909 = vrot.lane.b32.xlu0 %v1906, 96
  %v1910 = vpop.permute.xlu0 %1909
  %v1912 = vmul.f32 %v1907, %v1910
  %v1913 = vmul.f32 %v1888, %v1673
  %v1914 = vadd.f32 %v1912, %v1913
  %v1917 = vunpack.c.l.s4 1983009808
  %v1918 = vunpack.c.0.s8 %v1917
  %v1919 = vlaneseq
  %v1920 = vshrl.u32 %v1919, 7
  %v1921 = vsub.s32 %v1918, %v1920
  %v1922 = vrot.slane %v1879, %v1921
  %1923 = vrot.lane.b32.xlu0 %v1922, 96
  %v1924 = vpop.permute.xlu0 %1923
  %v1926 = vadd.f32 %v1736, %v1924
  %v1927 = vxor.u32 %v1926, 2147483648
  %v1928 = vmul.f32 %v1927, 1.442695
  %v1929 = vpow.pop %v1928
  %v1930 = vadd.f32 %v1929, 1.0
  %v1931 = vrcp.pop %v1930
  %v1932 = vmul.f32 1.0, %v1931
  %v1934 = vrot.slane %v1736, 2
  %v1936 = vadd.f32 %v1934, %v1924
  %v1937 = vxor.u32 %v1936, 2147483648
  %v1938 = vmul.f32 %v1937, 1.442695
  %v1939 = vpow.pop %v1938
  %v1940 = vadd.f32 %v1939, 1.0
  %v1941 = vrcp.pop %v1940
  %v1942 = vmul.f32 1.0, %v1941
  %1943 = vrot.lane.b32.xlu0 %v1922, 32
  %v1944 = vpop.permute.xlu0 %1943
  %v1946 = vmul.f32 %v1932, %v1944
  %1947 = vrot.lane.b32.xlu0 %v1736, 96
  %v1948 = vpop.permute.xlu0 %1947
  %v1949 = vrot.slane %v1948, 2
  %1952 = vrot.lane.b32.xlu0 %v1946, 32
  %v1953 = vpop.permute.xlu0 %1952
  %v1955 = vadd.f32 %v1949, %v1953
  %v1956 = vtanh.pop %v1955
  %v1957 = vsub.f32 1.0, %v1942
  %v1958 = vmul.f32 %v1957, %v1956
  %v1959 = vmul.f32 %v1942, %v1719
  %v1960 = vadd.f32 %v1958, %v1959
  %v1963 = vunpack.c.l.s4 1983009808
  %v1964 = vunpack.c.0.s8 %v1963
  %v1965 = vlaneseq
  %v1966 = vshrl.u32 %v1965, 7
  %v1967 = vsub.s32 %v1964, %v1966
  %v1968 = vrot.slane %v1914, %v1967
  %1969 = vrot.lane.b32.xlu0 %v1968, 96
  %v1970 = vpop.permute.xlu0 %1969
  %s1972 = scalar_lea.vmem %s3, 14
  %1973 = vst.msk [vmem:[%s1972] sm:$0x3] %vm279, %v1970
  %1974 = vst.msk [vmem:[%s4] sm:$0x3] %vm279, %v1960
  %1975 = vst.msk [vmem:[%s5] sm:$0x3] %vm279, %v1970
  %1976 = vst.msk [vmem:[%s6] sm:$0x3] %vm279, %v1960
  // Predicated region
  $region14: #{encoder_forward.5} parent=0 // pred_check
    _
  $region15: #{encoder_forward.5} parent=0 // pred_check_branch
    %1978 = sbr.rel (0) target = $region17
  $region16: #{encoder_forward.5} parent=0 // pred_region
    _
  $region17: #{encoder_forward.5} parent=0 // pred_fallthru
    _
  // Predicated region
  $region18: #{encoder_forward.5} parent=0 // pred_check
    _
  $region19: #{encoder_forward.5} parent=0 // pred_check_branch
    %1980 = sbr.rel (0) target = $region21
  $region20: #{encoder_forward.5} parent=0 // pred_region
    _
  $region21: #{encoder_forward.5} parent=0 // pred_fallthru
    _
  // Predicated region
  $region22: #{encoder_forward.5} parent=0 // pred_check
    _
  $region23: #{encoder_forward.5} parent=0 // pred_check_branch
    %1982 = sbr.rel (0) target = $region25
  $region24: #{encoder_forward.5} parent=0 // pred_region
    _
  $region25: #{encoder_forward.5} parent=0 // pred_fallthru
    _
  // Predicated region
  $region26: #{encoder_forward.5} parent=0 // pred_check
    _
  $region27: #{encoder_forward.5} parent=0 // pred_check_branch
    %1984 = sbr.rel (0) target = $region29
  $region28: #{encoder_forward.5} parent=0 // pred_region
    _
  $region29: #{encoder_forward.5} parent=0 // pred_fallthru
    _
  // Predicated region
  $region30: #{encoder_forward.5} parent=0 // pred_check
    _
  $region31: #{encoder_forward.5} parent=0 // pred_check_branch
    %1986 = sbr.rel (0) target = $region33
  $region32: #{encoder_forward.5} parent=0 // pred_region
    _
  $region33: #{encoder_forward.5} parent=0 // pred_fallthru
    _
  // Predicated region
  $region34: #{encoder_forward.5} parent=0 // pred_check
    _
  $region35: #{encoder_forward.5} parent=0 // pred_check_branch
    %1988 = sbr.rel (0) target = $region37
  $region36: #{encoder_forward.5} parent=0 // pred_region
    _
  $region37: #{encoder_forward.5} parent=0 // pred_fallthru
    _
  // Predicated region
  $region38: #{encoder_forward.5} parent=0 // pred_check
    _
  $region39: #{encoder_forward.5} parent=0 // pred_check_branch
    %1990 = sbr.rel (0) target = $region41
  $region40: #{encoder_forward.5} parent=0 // pred_region
    _
  $region41: #{encoder_forward.5} parent=0 // pred_fallthru
    _
  // Predicated region
  $region42: #{encoder_forward.5} parent=0 // pred_check
    _
  $region43: #{encoder_forward.5} parent=0 // pred_check_branch
    %1992 = sbr.rel (0) target = $region45
  $region44: #{encoder_forward.5} parent=0 // pred_region
    _
  $region45: #{encoder_forward.5} parent=0 // pred_fallthru
    _

</llo_original>
